<compile_context>
chip_gen: v5e
topology: v5e:2x2
jax: 0.10.0
libtpu: 0.0.40
codegen_flags: <defaults>
</compile_context>

<pallas_src>
import functools

import jax
import jax.numpy as jnp
from jax import lax
from jax.experimental import pallas as pl
from jax.experimental.pallas import tpu as pltpu


@functools.lru_cache(maxsize=1)
def _vmem_limit_bytes():
    """Generation-aware scoped-VMEM cap: ~3/4 of physical VMEM, capped at 96 MiB."""
    try:
        phys = int(getattr(pltpu.get_tpu_info(), "vmem_capacity_bytes", 128 << 20))
    except Exception:
        phys = 64 << 20
    return int(min(96 << 20, (phys * 3) // 4))


# ---------------------------------------------------------------------------
# Pallas kernels
# ---------------------------------------------------------------------------

def _linear_bias_kernel(x_ref, w_ref, b_ref, o_ref):
    """o = x @ w + b  (bf16 operands, f32 MXU accumulation)."""
    o_ref[...] = (jnp.dot(x_ref[...], w_ref[...],
                          preferred_element_type=jnp.float32) + b_ref[...])


def _gru_chunk_kernel(gi_ref, whh_ref, bhh_ref, h0_ref, hs_ref, hT_ref, h_sc):
    """One time-chunk of the serial GRU recurrence (input gates precomputed).

    gi_ref  : (ts, B, 3H) f32   x_t @ W_ih + b_ih, gates [r | z | n]
    whh_ref : (H, 3H)     bf16
    bhh_ref : (1, 3H)     f32
    h0_ref  : (B, H)      f32   initial hidden state
    hs_ref  : (ts, B, H)  f32   hidden state at every step of this chunk
    hT_ref  : (B, H)      f32   final hidden state (written on the last chunk)
    h_sc    : (B, H)      f32   VMEM-carried hidden state across chunks
    """
    ts, B, H3 = gi_ref.shape
    H = whh_ref.shape[0]

    @pl.when(pl.program_id(0) == 0)
    def _():
        h_sc[...] = h0_ref[...]

    whh = whh_ref[...]                                        # bf16 (H, 3H)
    bhh = jnp.broadcast_to(bhh_ref[...], (B, H3))             # hoisted broadcast

    def step(t, h):
        gi = gi_ref[t]                                                    # (B, 3H)
        gh = jnp.dot(h.astype(jnp.bfloat16), whh,
                     preferred_element_type=jnp.float32) + bhh            # (B, 3H)
        r = jax.nn.sigmoid(gi[:, 0:H] + gh[:, 0:H])
        z = jax.nn.sigmoid(gi[:, H:2 * H] + gh[:, H:2 * H])
        n = jnp.tanh(gi[:, 2 * H:3 * H] + r * gh[:, 2 * H:3 * H])
        h_new = n + z * (h - n)            # == (1-z)*n + z*h, shorter dep chain
        hs_ref[t] = h_new
        return h_new

    h_final = lax.fori_loop(0, ts, step, h_sc[...], unroll=True)
    h_sc[...] = h_final

    @pl.when(pl.program_id(0) == pl.num_programs(0) - 1)
    def _():
        hT_ref[...] = h_final


def _attn_project_kernel(dec_ref, enc_ref, wcomb_ref, wout_ref, bout_ref,
                         out_ref, yhat_ref):
    """Batched attention + combine + vocab projection + log_softmax + argmax.

    dec_ref   : (bb, T, H)  bf16  decoder hidden states (batch-major block)
    enc_ref   : (bb, S, H)  bf16  encoder outputs       (batch-major block)
    wcomb_ref : (2H, H)     bf16  stacked combine weight [W_ctx ; W_h]
    wout_ref  : (H, V)      bf16  output projection
    bout_ref  : (1, V)      f32
    out_ref   : (bb, T, V)  f32   log-softmax outputs
    yhat_ref  : (bb, T)     i32   argmax over the vocab
    """
    dec = dec_ref[...]                                                   # (bb,T,H)
    enc = enc_ref[...]                                                   # (bb,S,H)
    bb, T, H = dec.shape
    V = out_ref.shape[-1]

    # Dot-product attention as batched MXU matmuls.
    scores = jnp.einsum('bth,bsh->bts', dec, enc,
                        preferred_element_type=jnp.float32)              # (bb,T,S)
    m = jnp.max(scores, axis=-1, keepdims=True)
    e = jnp.exp(scores - m)
    attn = e * pl.reciprocal(jnp.sum(e, axis=-1, keepdims=True), approx=True)
    context = jnp.einsum('bts,bsh->bth', attn.astype(jnp.bfloat16), enc,
                         preferred_element_type=jnp.float32)             # (bb,T,H)

    # Merged combine: concat([ctx, h]) @ [W_ctx ; W_h]  -> one K=2H MXU pass.
    comb_in = jnp.concatenate(
        [context.astype(jnp.bfloat16), dec], axis=-1).reshape(bb * T, 2 * H)
    combined = jnp.tanh(jnp.dot(comb_in, wcomb_ref[...],
                                preferred_element_type=jnp.float32))     # (bb*T,H)

    logit = jnp.dot(combined.astype(jnp.bfloat16), wout_ref[...],
                    preferred_element_type=jnp.float32) + bout_ref[...]  # (bb*T,V)

    # function = F.log_softmax over the vocab dim (numerically stable, f32).
    lmax = jnp.max(logit, axis=-1, keepdims=True)
    lse = lmax + jnp.log(jnp.sum(jnp.exp(logit - lmax), axis=-1, keepdims=True))
    logp = (logit - lse).reshape(bb, T, V)
    out_ref[...] = logp

    # Fused argmax (first occurrence, matching torch) -> no extra HBM pass.
    idx = lax.broadcasted_iota(jnp.int32, logp.shape, 2)
    is_max = logp == jnp.max(logp, axis=-1, keepdims=True)
    yhat_ref[...] = jnp.min(jnp.where(is_max, idx, jnp.int32(V)), axis=-1)


# ---------------------------------------------------------------------------
# Wrappers (glue)
# ---------------------------------------------------------------------------

def _pick_row_tile(rows, target=512, align=16):
    rt = min(target, rows)
    while rt > align and rows % rt != 0:
        rt //= 2
    if rows % rt != 0:
        rt = rows
    # prefer >= 2 grid steps so the "parallel" axis can shard across TCs (v7x)
    if rows // rt < 2 and rt % (2 * align) == 0:
        rt //= 2
    return rt


def _pick_time_chunk(S, target=8):
    ts = min(target, S)
    while ts > 1 and S % ts != 0:
        ts -= 1
    if S // ts < 2 and ts > 1:
        ts2 = ts // 2
        while ts2 > 1 and S % ts2 != 0:
            ts2 -= 1
        if ts2 >= 1 and S % ts2 == 0:
            ts = ts2
    return ts


def _linear(x_bf16, w_bf16, b_f32, row_tile=512):
    """y = x @ w + b over row tiles (parallel grid), bf16 in / f32 out."""
    rows, E = x_bf16.shape
    N = w_bf16.shape[1]
    rt = _pick_row_tile(rows, row_tile)
    return pl.pallas_call(
        _linear_bias_kernel,
        grid=(rows // rt,),
        in_specs=[pl.BlockSpec((rt, E), lambda i: (i, 0)),
                  pl.BlockSpec((E, N), lambda i: (0, 0)),
                  pl.BlockSpec((1, N), lambda i: (0, 0))],
        out_specs=pl.BlockSpec((rt, N), lambda i: (i, 0)),
        out_shape=jax.ShapeDtypeStruct((rows, N), jnp.float32),
        compiler_params=pltpu.CompilerParams(
            dimension_semantics=("parallel",),
            vmem_limit_bytes=_vmem_limit_bytes()),
    )(x_bf16, w_bf16, b_f32)


def _gru(gi, whh_bf16, bhh, h0, time_chunk=8):
    """Serial GRU recurrence over precomputed input gates, time-chunked/pipelined."""
    S, B, H3 = gi.shape
    H = whh_bf16.shape[0]
    ts = _pick_time_chunk(S, time_chunk)
    return pl.pallas_call(
        _gru_chunk_kernel,
        grid=(S // ts,),
        in_specs=[pl.BlockSpec((ts, B, H3), lambda c: (c, 0, 0)),
                  pl.BlockSpec((H, H3), lambda c: (0, 0)),
                  pl.BlockSpec((1, H3), lambda c: (0, 0)),
                  pl.BlockSpec((B, H), lambda c: (0, 0))],
        out_specs=(pl.BlockSpec((ts, B, H), lambda c: (c, 0, 0)),
                   pl.BlockSpec((B, H), lambda c: (0, 0))),
        out_shape=(jax.ShapeDtypeStruct((S, B, H), jnp.float32),
                   jax.ShapeDtypeStruct((B, H), jnp.float32)),
        scratch_shapes=[pltpu.VMEM((B, H), jnp.float32)],
        compiler_params=pltpu.CompilerParams(
            dimension_semantics=("arbitrary",),
            vmem_limit_bytes=_vmem_limit_bytes()),
    )(gi, whh_bf16, bhh, h0)


def _attn_project(dec_bm, enc_bm, wcomb_bf16, wout_bf16, bout):
    """Batched attention + projection + log_softmax + argmax, tiled over batch."""
    B, T, H = dec_bm.shape
    S = enc_bm.shape[1]
    V = wout_bf16.shape[1]
    # batch tile: multiple of 8 sublanes; >= 2 grid steps when possible (v7x megacore)
    bb = 8 if (B % 8 == 0 and B >= 16) else B
    return pl.pallas_call(
        _attn_project_kernel,
        grid=(B // bb,),
        in_specs=[pl.BlockSpec((bb, T, H), lambda i: (i, 0, 0)),
                  pl.BlockSpec((bb, S, H), lambda i: (i, 0, 0)),
                  pl.BlockSpec((2 * H, H), lambda i: (0, 0)),
                  pl.BlockSpec((H, V), lambda i: (0, 0)),
                  pl.BlockSpec((1, V), lambda i: (0, 0))],
        out_specs=(pl.BlockSpec((bb, T, V), lambda i: (i, 0, 0)),
                   pl.BlockSpec((bb, T), lambda i: (i, 0))),
        out_shape=(jax.ShapeDtypeStruct((B, T, V), jnp.float32),
                   jax.ShapeDtypeStruct((B, T), jnp.int32)),
        compiler_params=pltpu.CompilerParams(
            dimension_semantics=("parallel",),
            vmem_limit_bytes=_vmem_limit_bytes()),
    )(dec_bm, enc_bm, wcomb_bf16, wout_bf16, bout)


def seq2seq_forward(params, inputs, targets,
                    teacher_forcing_ratio=0.9, use_beam_search=False):
    """Mirrors Seq2seq.forward: returns (y_hats, logits).

    inputs  : (B, S) int32 source token ids
    targets : (B, T) int32 target token ids (teacher forced)
    y_hats  : (B, T) int32
    logits  : (B, T, V) float32 log-probabilities
    """
    # TODO(synk): stochastic teacher-forcing sampling (torch.rand per token) and
    # beam search are host-side control flow; this implementation always teacher-forces.
    del teacher_forcing_ratio, use_beam_search

    B, S = inputs.shape
    _, T = targets.shape
    H = params["enc_whh"].shape[0]

    # bf16 weights (MXU-native on v5e/v6e/v7x); biases and accumulation stay f32.
    enc_embed = params["enc_embed"].astype(jnp.bfloat16)
    dec_embed = params["dec_embed"].astype(jnp.bfloat16)
    enc_wih = params["enc_wih"].astype(jnp.bfloat16)
    dec_wih = params["dec_wih"].astype(jnp.bfloat16)
    enc_whh = params["enc_whh"].astype(jnp.bfloat16)
    dec_whh = params["dec_whh"].astype(jnp.bfloat16)
    wcomb = jnp.concatenate([params["dec_wc_ctx"], params["dec_wc_h"]],
                            axis=0).astype(jnp.bfloat16)             # (2H, H)
    wout = params["dec_wout"].astype(jnp.bfloat16)

    # Time-major embedding gathers (no (B,S,E)->(S,B,E) activation transpose).
    x_rows = enc_embed[inputs.T].reshape(S * B, -1)                  # (S*B, E) bf16
    y_rows = dec_embed[targets.T].reshape(T * B, -1)                 # (T*B, E) bf16

    # Hoisted input->gate matmuls over ALL timesteps at once (parallel row tiles).
    gi_enc = _linear(x_rows, enc_wih, params["enc_bih"]).reshape(S, B, 3 * H)
    gi_dec = _linear(y_rows, dec_wih, params["dec_bih"]).reshape(T, B, 3 * H)

    # Serial recurrences (encoder then decoder); only gate math in the loop,
    # time-chunked so the gi DMA pipelines with compute.
    h0 = jnp.zeros((B, H), jnp.float32)
    enc_hs, enc_hT = _gru(gi_enc, enc_whh, params["enc_bhh"], h0)
    dec_hs, _ = _gru(gi_dec, dec_whh, params["dec_bhh"], enc_hT)

    # Batched attention + combine + vocab projection + log_softmax + argmax.
    # bf16 cast halves the relayout + kernel-input HBM traffic.
    # TODO(synk): absorb this time-major->batch-major relayout into the kernel
    # (time-major einsums) and add a vocab grid axis with two-pass log-softmax
    # for realistic vocab sizes; at these shapes a single lane-dense tile suffices.
    enc_bm = jnp.transpose(enc_hs.astype(jnp.bfloat16), (1, 0, 2))   # (B, S, H)
    dec_bm = jnp.transpose(dec_hs.astype(jnp.bfloat16), (1, 0, 2))   # (B, T, H)
    logits, y_hats = _attn_project(dec_bm, enc_bm, wcomb, wout, params["dec_bout"])
    return y_hats, logits


# ---------------------------------------------------------------------------
# Deterministic parameter construction
# ---------------------------------------------------------------------------

def make_params(key, in_vocab, out_vocab, embed, hidden):
    ks = jax.random.split(key, 14)
    s = 1.0 / jnp.sqrt(jnp.float32(hidden))
    u = lambda k, shape: jax.random.uniform(k, shape, jnp.float32, -s, s)
    return {
        "enc_embed":  u(ks[0], (in_vocab, embed)),
        "enc_wih":    u(ks[1], (embed, 3 * hidden)),
        "enc_whh":    u(ks[2], (hidden, 3 * hidden)),
        "enc_bih":    u(ks[3], (1, 3 * hidden)),
        "enc_bhh":    u(ks[4], (1, 3 * hidden)),
        "dec_embed":  u(ks[5], (out_vocab, embed)),
        "dec_wih":    u(ks[6], (embed, 3 * hidden)),
        "dec_whh":    u(ks[7], (hidden, 3 * hidden)),
        "dec_bih":    u(ks[8], (1, 3 * hidden)),
        "dec_bhh":    u(ks[9], (1, 3 * hidden)),
        "dec_wc_ctx": u(ks[10], (hidden, hidden)),
        "dec_wc_h":   u(ks[11], (hidden, hidden)),
        "dec_wout":   u(ks[12], (hidden, out_vocab)),
        "dec_bout":   u(ks[13], (1, out_vocab)),
    }


if __name__ == "__main__":
    # Lane/sublane-friendly small shapes (H, E, V multiples of 128; B multiple of 8).
    # B=16 / S=T=8 ensure every kernel has >= 2 grid steps (pipelining + v7x megacore).
    B, S, T = 16, 8, 8          # batch, source len, target len
    E, H = 128, 128             # embedding / hidden size
    IN_VOCAB, OUT_VOCAB = 32, 128

    key = jax.random.PRNGKey(0)
    kp, ki, kt = jax.random.split(key, 3)
    params = make_params(kp, IN_VOCAB, OUT_VOCAB, E, H)
    inputs = jax.random.randint(ki, (B, S), 0, IN_VOCAB, dtype=jnp.int32)
    targets = jax.random.randint(kt, (B, T), 0, OUT_VOCAB, dtype=jnp.int32)

    y_hats, logits = jax.jit(seq2seq_forward)(params, inputs, targets)
    jax.block_until_ready((y_hats, logits))

    assert y_hats.shape == (B, T)
    assert logits.shape == (B, T, OUT_VOCAB)
    # log_softmax rows must (approximately) sum to 1 in prob space
    assert bool(jnp.allclose(jnp.sum(jnp.exp(logits), axis=-1), 1.0, atol=1e-3))
    # in-kernel argmax must match an XLA argmax on the returned logits
    assert bool(jnp.all(y_hats == jnp.argmax(logits, axis=-1).astype(jnp.int32)))
    print("KERNEL_OK")
</pallas_src>

<mosaic_0001>
module attributes {stable_mosaic.version = 11 : i64} {
  func.func @_linear_bias_kernel(%arg0: i32, %arg1: memref<64x128xbf16, #tpu.memory_space<vmem>>, %arg2: memref<128x384xbf16, #tpu.memory_space<vmem>>, %arg3: memref<1x384xf32, #tpu.memory_space<vmem>>, %arg4: memref<64x384xf32, #tpu.memory_space<vmem>>) attributes {dimension_semantics = [#tpu.dimension_semantics<parallel>], iteration_bounds = array<i64: 2>, scalar_prefetch = 0 : i64, scratch_operands = 0 : i64, tpu.core_type = #tpu.core_type<tc>, window_params = [{transform_indices = @transform_0, window_bounds = array<i64: 64, 128>}, {pipeline_mode = #tpu.pipeline_mode<synchronous>, transform_indices = @transform_1, window_bounds = array<i64: 128, 384>}, {pipeline_mode = #tpu.pipeline_mode<synchronous>, transform_indices = @transform_2, window_bounds = array<i64: 1, 384>}, {transform_indices = @transform_3, window_bounds = array<i64: 64, 384>}]} {
    %c0 = arith.constant 0 : index
    %c0_0 = arith.constant 0 : index
    %0 = vector.load %arg1[%c0, %c0_0] : memref<64x128xbf16, #tpu.memory_space<vmem>>, vector<64x128xbf16>
    %c0_1 = arith.constant 0 : index
    %c0_2 = arith.constant 0 : index
    %1 = vector.load %arg2[%c0_1, %c0_2] : memref<128x384xbf16, #tpu.memory_space<vmem>>, vector<128x384xbf16>
    %cst = arith.constant dense<0.000000e+00> : vector<64x384xf32>
    %2 = tpu.matmul %0, %1, %cst {dimension_numbers = #tpu.dot_dimension_numbers<[1], [0], [0], [1], [0, 0, 1, 1], [], []>} : vector<64x128xbf16>, vector<128x384xbf16>, vector<64x384xf32> -> vector<64x384xf32>
    %c0_3 = arith.constant 0 : index
    %c0_4 = arith.constant 0 : index
    %3 = vector.load %arg3[%c0_3, %c0_4] : memref<1x384xf32, #tpu.memory_space<vmem>>, vector<1x384xf32>
    %4 = vector.broadcast %3 : vector<1x384xf32> to vector<64x384xf32>
    %5 = arith.addf %2, %4 : vector<64x384xf32>
    %c0_5 = arith.constant 0 : index
    %c0_6 = arith.constant 0 : index
    %6 = vector.load %arg4[%c0_5, %c0_6] : memref<64x384xf32, #tpu.memory_space<vmem>>, vector<64x384xf32>
    tpu.vector_store %arg4[%c0_5, %c0_6], %5 {strides = array<i32>} : memref<64x384xf32, #tpu.memory_space<vmem>>, vector<64x384xf32>,
    return
  }
  func.func @transform_0(%arg0: i32) -> (i32, i32) {
    %c0_i32 = arith.constant 0 : i32
    %c0_i32_0 = arith.constant 0 : i32
    return %arg0, %c0_i32 : i32, i32
  }
  func.func @transform_1(%arg0: i32) -> (i32, i32) {
    %c0_i32 = arith.constant 0 : i32
    %c0_i32_0 = arith.constant 0 : i32
    %c0_i32_1 = arith.constant 0 : i32
    return %c0_i32, %c0_i32_0 : i32, i32
  }
  func.func @transform_2(%arg0: i32) -> (i32, i32) {
    %c0_i32 = arith.constant 0 : i32
    %c0_i32_0 = arith.constant 0 : i32
    %c0_i32_1 = arith.constant 0 : i32
    return %c0_i32, %c0_i32_0 : i32, i32
  }
  func.func @transform_3(%arg0: i32) -> (i32, i32) {
    %c0_i32 = arith.constant 0 : i32
    %c0_i32_0 = arith.constant 0 : i32
    return %arg0, %c0_i32 : i32, i32
  }
}

module attributes {stable_mosaic.version = 11 : i64} {
  func.func @_gru_chunk_kernel(%arg0: i32, %arg1: memref<4x16x384xf32, #tpu.memory_space<vmem>>, %arg2: memref<128x384xbf16, #tpu.memory_space<vmem>>, %arg3: memref<1x384xf32, #tpu.memory_space<vmem>>, %arg4: memref<16x128xf32, #tpu.memory_space<vmem>>, %arg5: memref<4x16x128xf32, #tpu.memory_space<vmem>>, %arg6: memref<16x128xf32, #tpu.memory_space<vmem>>, %arg7: memref<16x128xf32, #tpu.memory_space<vmem>>) attributes {dimension_semantics = [#tpu.dimension_semantics<arbitrary>], iteration_bounds = array<i64: 2>, scalar_prefetch = 0 : i64, scratch_operands = 1 : i64, tpu.core_type = #tpu.core_type<tc>, window_params = [{transform_indices = @transform_0, window_bounds = array<i64: 4, 16, 384>}, {pipeline_mode = #tpu.pipeline_mode<synchronous>, transform_indices = @transform_1, window_bounds = array<i64: 128, 384>}, {pipeline_mode = #tpu.pipeline_mode<synchronous>, transform_indices = @transform_2, window_bounds = array<i64: 1, 384>}, {pipeline_mode = #tpu.pipeline_mode<synchronous>, transform_indices = @transform_3, window_bounds = array<i64: 16, 128>}, {transform_indices = @transform_4, window_bounds = array<i64: 4, 16, 128>}, {pipeline_mode = #tpu.pipeline_mode<synchronous>, transform_indices = @transform_5, window_bounds = array<i64: 16, 128>}]} {
    %c0_i32 = arith.constant 0 : i32
    %0 = arith.cmpi eq, %arg0, %c0_i32 : i32
    %1 = arith.extui %0 : i1 to i32
    %c0_i32_0 = arith.constant 0 : i32
    %2 = arith.cmpi ne, %1, %c0_i32_0 : i32
    scf.if %2 {
      %c0_38 = arith.constant 0 : index
      %c0_39 = arith.constant 0 : index
      %148 = vector.load %arg4[%c0_38, %c0_39] : memref<16x128xf32, #tpu.memory_space<vmem>>, vector<16x128xf32>
      %c0_40 = arith.constant 0 : index
      %c0_41 = arith.constant 0 : index
      %149 = vector.load %arg7[%c0_40, %c0_41] : memref<16x128xf32, #tpu.memory_space<vmem>>, vector<16x128xf32>
      tpu.vector_store %arg7[%c0_40, %c0_41], %148 {strides = array<i32>} : memref<16x128xf32, #tpu.memory_space<vmem>>, vector<16x128xf32>,
    } else {
    }
    %c0 = arith.constant 0 : index
    %c0_1 = arith.constant 0 : index
    %3 = vector.load %arg2[%c0, %c0_1] : memref<128x384xbf16, #tpu.memory_space<vmem>>, vector<128x384xbf16>
    %c0_2 = arith.constant 0 : index
    %c0_3 = arith.constant 0 : index
    %4 = vector.load %arg3[%c0_2, %c0_3] : memref<1x384xf32, #tpu.memory_space<vmem>>, vector<1x384xf32>
    %5 = vector.shape_cast %4 : vector<1x384xf32> to vector<1x384xf32>
    %6 = vector.broadcast %5 : vector<1x384xf32> to vector<16x384xf32>
    %c0_4 = arith.constant 0 : index
    %c0_5 = arith.constant 0 : index
    %7 = vector.load %arg7[%c0_4, %c0_5] : memref<16x128xf32, #tpu.memory_space<vmem>>, vector<16x128xf32>
    %c0_i32_6 = arith.constant 0 : i32
    %8 = arith.index_cast %c0_i32_6 : i32 to index
    %c0_7 = arith.constant 0 : index
    %c0_8 = arith.constant 0 : index
    %9 = vector.load %arg1[%8, %c0_7, %c0_8] : memref<4x16x384xf32, #tpu.memory_space<vmem>>, vector<1x16x384xf32>
    %10 = vector.shape_cast %9 : vector<1x16x384xf32> to vector<16x384xf32>
    %11 = arith.truncf %7 : vector<16x128xf32> to vector<16x128xbf16>
    %cst = arith.constant dense<0.000000e+00> : vector<16x384xf32>
    %12 = tpu.matmul %11, %3, %cst {dimension_numbers = #tpu.dot_dimension_numbers<[1], [0], [0], [1], [0, 0, 1, 1], [], []>} : vector<16x128xbf16>, vector<128x384xbf16>, vector<16x384xf32> -> vector<16x384xf32>
    %13 = arith.addf %12, %6 : vector<16x384xf32>
    %14 = vector.extract_strided_slice %10 {offsets = [0, 0], sizes = [16, 128], strides = [1, 1]} : vector<16x384xf32> to vector<16x128xf32>
    %15 = vector.extract_strided_slice %13 {offsets = [0, 0], sizes = [16, 128], strides = [1, 1]} : vector<16x384xf32> to vector<16x128xf32>
    %16 = arith.addf %14, %15 : vector<16x128xf32>
    %17 = arith.negf %16 : vector<16x128xf32>
    %18 = math.exp %17 : vector<16x128xf32>
    %cst_9 = arith.constant 1.000000e+00 : f32
    %19 = vector.broadcast %cst_9 : f32 to vector<16x128xf32>
    %20 = arith.addf %19, %18 : vector<16x128xf32>
    %21 = arith.divf %19, %20 : vector<16x128xf32>
    %22 = vector.extract_strided_slice %10 {offsets = [0, 128], sizes = [16, 128], strides = [1, 1]} : vector<16x384xf32> to vector<16x128xf32>
    %23 = vector.extract_strided_slice %13 {offsets = [0, 128], sizes = [16, 128], strides = [1, 1]} : vector<16x384xf32> to vector<16x128xf32>
    %24 = arith.addf %22, %23 : vector<16x128xf32>
    %25 = arith.negf %24 : vector<16x128xf32>
    %26 = math.exp %25 : vector<16x128xf32>
    %cst_10 = arith.constant 1.000000e+00 : f32
    %27 = vector.broadcast %cst_10 : f32 to vector<16x128xf32>
    %28 = arith.addf %27, %26 : vector<16x128xf32>
    %29 = arith.divf %27, %28 : vector<16x128xf32>
    %30 = vector.extract_strided_slice %10 {offsets = [0, 256], sizes = [16, 128], strides = [1, 1]} : vector<16x384xf32> to vector<16x128xf32>
    %31 = vector.extract_strided_slice %13 {offsets = [0, 256], sizes = [16, 128], strides = [1, 1]} : vector<16x384xf32> to vector<16x128xf32>
    %32 = arith.mulf %21, %31 : vector<16x128xf32>
    %33 = arith.addf %30, %32 : vector<16x128xf32>
    %34 = math.tanh %33 : vector<16x128xf32>
    %35 = arith.subf %7, %34 : vector<16x128xf32>
    %36 = arith.mulf %29, %35 : vector<16x128xf32>
    %37 = arith.addf %34, %36 : vector<16x128xf32>
    %38 = arith.index_cast %c0_i32_6 : i32 to index
    %c0_11 = arith.constant 0 : index
    %c0_12 = arith.constant 0 : index
    %39 = vector.load %arg5[%38, %c0_11, %c0_12] : memref<4x16x128xf32, #tpu.memory_space<vmem>>, vector<1x16x128xf32>
    %40 = vector.shape_cast %39 : vector<1x16x128xf32> to vector<16x128xf32>
    %41 = vector.shape_cast %37 : vector<16x128xf32> to vector<1x16x128xf32>
    tpu.vector_store %arg5[%38, %c0_11, %c0_12], %41 {strides = array<i32>} : memref<4x16x128xf32, #tpu.memory_space<vmem>>, vector<1x16x128xf32>,
    %c1_i32 = arith.constant 1 : i32
    %42 = arith.index_cast %c1_i32 : i32 to index
    %c0_13 = arith.constant 0 : index
    %c0_14 = arith.constant 0 : index
    %43 = vector.load %arg1[%42, %c0_13, %c0_14] : memref<4x16x384xf32, #tpu.memory_space<vmem>>, vector<1x16x384xf32>
    %44 = vector.shape_cast %43 : vector<1x16x384xf32> to vector<16x384xf32>
    %45 = arith.truncf %37 : vector<16x128xf32> to vector<16x128xbf16>
    %cst_15 = arith.constant dense<0.000000e+00> : vector<16x384xf32>
    %46 = tpu.matmul %45, %3, %cst_15 {dimension_numbers = #tpu.dot_dimension_numbers<[1], [0], [0], [1], [0, 0, 1, 1], [], []>} : vector<16x128xbf16>, vector<128x384xbf16>, vector<16x384xf32> -> vector<16x384xf32>
    %47 = arith.addf %46, %6 : vector<16x384xf32>
    %48 = vector.extract_strided_slice %44 {offsets = [0, 0], sizes = [16, 128], strides = [1, 1]} : vector<16x384xf32> to vector<16x128xf32>
    %49 = vector.extract_strided_slice %47 {offsets = [0, 0], sizes = [16, 128], strides = [1, 1]} : vector<16x384xf32> to vector<16x128xf32>
    %50 = arith.addf %48, %49 : vector<16x128xf32>
    %51 = arith.negf %50 : vector<16x128xf32>
    %52 = math.exp %51 : vector<16x128xf32>
    %cst_16 = arith.constant 1.000000e+00 : f32
    %53 = vector.broadcast %cst_16 : f32 to vector<16x128xf32>
    %54 = arith.addf %53, %52 : vector<16x128xf32>
    %55 = arith.divf %53, %54 : vector<16x128xf32>
    %56 = vector.extract_strided_slice %44 {offsets = [0, 128], sizes = [16, 128], strides = [1, 1]} : vector<16x384xf32> to vector<16x128xf32>
    %57 = vector.extract_strided_slice %47 {offsets = [0, 128], sizes = [16, 128], strides = [1, 1]} : vector<16x384xf32> to vector<16x128xf32>
    %58 = arith.addf %56, %57 : vector<16x128xf32>
    %59 = arith.negf %58 : vector<16x128xf32>
    %60 = math.exp %59 : vector<16x128xf32>
    %cst_17 = arith.constant 1.000000e+00 : f32
    %61 = vector.broadcast %cst_17 : f32 to vector<16x128xf32>
    %62 = arith.addf %61, %60 : vector<16x128xf32>
    %63 = arith.divf %61, %62 : vector<16x128xf32>
    %64 = vector.extract_strided_slice %44 {offsets = [0, 256], sizes = [16, 128], strides = [1, 1]} : vector<16x384xf32> to vector<16x128xf32>
    %65 = vector.extract_strided_slice %47 {offsets = [0, 256], sizes = [16, 128], strides = [1, 1]} : vector<16x384xf32> to vector<16x128xf32>
    %66 = arith.mulf %55, %65 : vector<16x128xf32>
    %67 = arith.addf %64, %66 : vector<16x128xf32>
    %68 = math.tanh %67 : vector<16x128xf32>
    %69 = arith.subf %37, %68 : vector<16x128xf32>
    %70 = arith.mulf %63, %69 : vector<16x128xf32>
    %71 = arith.addf %68, %70 : vector<16x128xf32>
    %72 = arith.index_cast %c1_i32 : i32 to index
    %c0_18 = arith.constant 0 : index
    %c0_19 = arith.constant 0 : index
    %73 = vector.load %arg5[%72, %c0_18, %c0_19] : memref<4x16x128xf32, #tpu.memory_space<vmem>>, vector<1x16x128xf32>
    %74 = vector.shape_cast %73 : vector<1x16x128xf32> to vector<16x128xf32>
    %75 = vector.shape_cast %71 : vector<16x128xf32> to vector<1x16x128xf32>
    tpu.vector_store %arg5[%72, %c0_18, %c0_19], %75 {strides = array<i32>} : memref<4x16x128xf32, #tpu.memory_space<vmem>>, vector<1x16x128xf32>,
    %c2_i32 = arith.constant 2 : i32
    %76 = arith.index_cast %c2_i32 : i32 to index
    %c0_20 = arith.constant 0 : index
    %c0_21 = arith.constant 0 : index
    %77 = vector.load %arg1[%76, %c0_20, %c0_21] : memref<4x16x384xf32, #tpu.memory_space<vmem>>, vector<1x16x384xf32>
    %78 = vector.shape_cast %77 : vector<1x16x384xf32> to vector<16x384xf32>
    %79 = arith.truncf %71 : vector<16x128xf32> to vector<16x128xbf16>
    %cst_22 = arith.constant dense<0.000000e+00> : vector<16x384xf32>
    %80 = tpu.matmul %79, %3, %cst_22 {dimension_numbers = #tpu.dot_dimension_numbers<[1], [0], [0], [1], [0, 0, 1, 1], [], []>} : vector<16x128xbf16>, vector<128x384xbf16>, vector<16x384xf32> -> vector<16x384xf32>
    %81 = arith.addf %80, %6 : vector<16x384xf32>
    %82 = vector.extract_strided_slice %78 {offsets = [0, 0], sizes = [16, 128], strides = [1, 1]} : vector<16x384xf32> to vector<16x128xf32>
    %83 = vector.extract_strided_slice %81 {offsets = [0, 0], sizes = [16, 128], strides = [1, 1]} : vector<16x384xf32> to vector<16x128xf32>
    %84 = arith.addf %82, %83 : vector<16x128xf32>
    %85 = arith.negf %84 : vector<16x128xf32>
    %86 = math.exp %85 : vector<16x128xf32>
    %cst_23 = arith.constant 1.000000e+00 : f32
    %87 = vector.broadcast %cst_23 : f32 to vector<16x128xf32>
    %88 = arith.addf %87, %86 : vector<16x128xf32>
    %89 = arith.divf %87, %88 : vector<16x128xf32>
    %90 = vector.extract_strided_slice %78 {offsets = [0, 128], sizes = [16, 128], strides = [1, 1]} : vector<16x384xf32> to vector<16x128xf32>
    %91 = vector.extract_strided_slice %81 {offsets = [0, 128], sizes = [16, 128], strides = [1, 1]} : vector<16x384xf32> to vector<16x128xf32>
    %92 = arith.addf %90, %91 : vector<16x128xf32>
    %93 = arith.negf %92 : vector<16x128xf32>
    %94 = math.exp %93 : vector<16x128xf32>
    %cst_24 = arith.constant 1.000000e+00 : f32
    %95 = vector.broadcast %cst_24 : f32 to vector<16x128xf32>
    %96 = arith.addf %95, %94 : vector<16x128xf32>
    %97 = arith.divf %95, %96 : vector<16x128xf32>
    %98 = vector.extract_strided_slice %78 {offsets = [0, 256], sizes = [16, 128], strides = [1, 1]} : vector<16x384xf32> to vector<16x128xf32>
    %99 = vector.extract_strided_slice %81 {offsets = [0, 256], sizes = [16, 128], strides = [1, 1]} : vector<16x384xf32> to vector<16x128xf32>
    %100 = arith.mulf %89, %99 : vector<16x128xf32>
    %101 = arith.addf %98, %100 : vector<16x128xf32>
    %102 = math.tanh %101 : vector<16x128xf32>
    %103 = arith.subf %71, %102 : vector<16x128xf32>
    %104 = arith.mulf %97, %103 : vector<16x128xf32>
    %105 = arith.addf %102, %104 : vector<16x128xf32>
    %106 = arith.index_cast %c2_i32 : i32 to index
    %c0_25 = arith.constant 0 : index
    %c0_26 = arith.constant 0 : index
    %107 = vector.load %arg5[%106, %c0_25, %c0_26] : memref<4x16x128xf32, #tpu.memory_space<vmem>>, vector<1x16x128xf32>
    %108 = vector.shape_cast %107 : vector<1x16x128xf32> to vector<16x128xf32>
    %109 = vector.shape_cast %105 : vector<16x128xf32> to vector<1x16x128xf32>
    tpu.vector_store %arg5[%106, %c0_25, %c0_26], %109 {strides = array<i32>} : memref<4x16x128xf32, #tpu.memory_space<vmem>>, vector<1x16x128xf32>,
    %c3_i32 = arith.constant 3 : i32
    %110 = arith.index_cast %c3_i32 : i32 to index
    %c0_27 = arith.constant 0 : index
    %c0_28 = arith.constant 0 : index
    %111 = vector.load %arg1[%110, %c0_27, %c0_28] : memref<4x16x384xf32, #tpu.memory_space<vmem>>, vector<1x16x384xf32>
    %112 = vector.shape_cast %111 : vector<1x16x384xf32> to vector<16x384xf32>
    %113 = arith.truncf %105 : vector<16x128xf32> to vector<16x128xbf16>
    %cst_29 = arith.constant dense<0.000000e+00> : vector<16x384xf32>
    %114 = tpu.matmul %113, %3, %cst_29 {dimension_numbers = #tpu.dot_dimension_numbers<[1], [0], [0], [1], [0, 0, 1, 1], [], []>} : vector<16x128xbf16>, vector<128x384xbf16>, vector<16x384xf32> -> vector<16x384xf32>
    %115 = arith.addf %114, %6 : vector<16x384xf32>
    %116 = vector.extract_strided_slice %112 {offsets = [0, 0], sizes = [16, 128], strides = [1, 1]} : vector<16x384xf32> to vector<16x128xf32>
    %117 = vector.extract_strided_slice %115 {offsets = [0, 0], sizes = [16, 128], strides = [1, 1]} : vector<16x384xf32> to vector<16x128xf32>
    %118 = arith.addf %116, %117 : vector<16x128xf32>
    %119 = arith.negf %118 : vector<16x128xf32>
    %120 = math.exp %119 : vector<16x128xf32>
    %cst_30 = arith.constant 1.000000e+00 : f32
    %121 = vector.broadcast %cst_30 : f32 to vector<16x128xf32>
    %122 = arith.addf %121, %120 : vector<16x128xf32>
    %123 = arith.divf %121, %122 : vector<16x128xf32>
    %124 = vector.extract_strided_slice %112 {offsets = [0, 128], sizes = [16, 128], strides = [1, 1]} : vector<16x384xf32> to vector<16x128xf32>
    %125 = vector.extract_strided_slice %115 {offsets = [0, 128], sizes = [16, 128], strides = [1, 1]} : vector<16x384xf32> to vector<16x128xf32>
    %126 = arith.addf %124, %125 : vector<16x128xf32>
    %127 = arith.negf %126 : vector<16x128xf32>
    %128 = math.exp %127 : vector<16x128xf32>
    %cst_31 = arith.constant 1.000000e+00 : f32
    %129 = vector.broadcast %cst_31 : f32 to vector<16x128xf32>
    %130 = arith.addf %129, %128 : vector<16x128xf32>
    %131 = arith.divf %129, %130 : vector<16x128xf32>
    %132 = vector.extract_strided_slice %112 {offsets = [0, 256], sizes = [16, 128], strides = [1, 1]} : vector<16x384xf32> to vector<16x128xf32>
    %133 = vector.extract_strided_slice %115 {offsets = [0, 256], sizes = [16, 128], strides = [1, 1]} : vector<16x384xf32> to vector<16x128xf32>
    %134 = arith.mulf %123, %133 : vector<16x128xf32>
    %135 = arith.addf %132, %134 : vector<16x128xf32>
    %136 = math.tanh %135 : vector<16x128xf32>
    %137 = arith.subf %105, %136 : vector<16x128xf32>
    %138 = arith.mulf %131, %137 : vector<16x128xf32>
    %139 = arith.addf %136, %138 : vector<16x128xf32>
    %140 = arith.index_cast %c3_i32 : i32 to index
    %c0_32 = arith.constant 0 : index
    %c0_33 = arith.constant 0 : index
    %141 = vector.load %arg5[%140, %c0_32, %c0_33] : memref<4x16x128xf32, #tpu.memory_space<vmem>>, vector<1x16x128xf32>
    %142 = vector.shape_cast %141 : vector<1x16x128xf32> to vector<16x128xf32>
    %143 = vector.shape_cast %139 : vector<16x128xf32> to vector<1x16x128xf32>
    tpu.vector_store %arg5[%140, %c0_32, %c0_33], %143 {strides = array<i32>} : memref<4x16x128xf32, #tpu.memory_space<vmem>>, vector<1x16x128xf32>,
    %c4_i32 = arith.constant 4 : i32
    %c0_34 = arith.constant 0 : index
    %c0_35 = arith.constant 0 : index
    %144 = vector.load %arg7[%c0_34, %c0_35] : memref<16x128xf32, #tpu.memory_space<vmem>>, vector<16x128xf32>
    tpu.vector_store %arg7[%c0_34, %c0_35], %139 {strides = array<i32>} : memref<16x128xf32, #tpu.memory_space<vmem>>, vector<16x128xf32>,
    %c1_i32_36 = arith.constant 1 : i32
    %145 = arith.cmpi eq, %arg0, %c1_i32_36 : i32
    %146 = arith.extui %145 : i1 to i32
    %c0_i32_37 = arith.constant 0 : i32
    %147 = arith.cmpi ne, %146, %c0_i32_37 : i32
    scf.if %147 {
      %c0_38 = arith.constant 0 : index
      %c0_39 = arith.constant 0 : index
      %148 = vector.load %arg6[%c0_38, %c0_39] : memref<16x128xf32, #tpu.memory_space<vmem>>, vector<16x128xf32>
      tpu.vector_store %arg6[%c0_38, %c0_39], %139 {strides = array<i32>} : memref<16x128xf32, #tpu.memory_space<vmem>>, vector<16x128xf32>,
    } else {
    }
    return
  }
  func.func @transform_0(%arg0: i32) -> (i32, i32, i32) {
    %c0_i32 = arith.constant 0 : i32
    %c0_i32_0 = arith.constant 0 : i32
    %c0_i32_1 = arith.constant 0 : i32
    return %arg0, %c0_i32, %c0_i32_0 : i32, i32, i32
  }
  func.func @transform_1(%arg0: i32) -> (i32, i32) {
    %c0_i32 = arith.constant 0 : i32
    %c0_i32_0 = arith.constant 0 : i32
    %c0_i32_1 = arith.constant 0 : i32
    return %c0_i32, %c0_i32_0 : i32, i32
  }
  func.func @transform_2(%arg0: i32) -> (i32, i32) {
    %c0_i32 = arith.constant 0 : i32
    %c0_i32_0 = arith.constant 0 : i32
    %c0_i32_1 = arith.constant 0 : i32
    return %c0_i32, %c0_i32_0 : i32, i32
  }
  func.func @transform_3(%arg0: i32) -> (i32, i32) {
    %c0_i32 = arith.constant 0 : i32
    %c0_i32_0 = arith.constant 0 : i32
    %c0_i32_1 = arith.constant 0 : i32
    return %c0_i32, %c0_i32_0 : i32, i32
  }
  func.func @transform_4(%arg0: i32) -> (i32, i32, i32) {
    %c0_i32 = arith.constant 0 : i32
    %c0_i32_0 = arith.constant 0 : i32
    %c0_i32_1 = arith.constant 0 : i32
    return %arg0, %c0_i32, %c0_i32_0 : i32, i32, i32
  }
  func.func @transform_5(%arg0: i32) -> (i32, i32) {
    %c0_i32 = arith.constant 0 : i32
    %c0_i32_0 = arith.constant 0 : i32
    %c0_i32_1 = arith.constant 0 : i32
    return %c0_i32, %c0_i32_0 : i32, i32
  }
}

module attributes {stable_mosaic.version = 11 : i64} {
  func.func @_gru_chunk_kernel(%arg0: i32, %arg1: memref<4x16x384xf32, #tpu.memory_space<vmem>>, %arg2: memref<128x384xbf16, #tpu.memory_space<vmem>>, %arg3: memref<1x384xf32, #tpu.memory_space<vmem>>, %arg4: memref<16x128xf32, #tpu.memory_space<vmem>>, %arg5: memref<4x16x128xf32, #tpu.memory_space<vmem>>, %arg6: memref<16x128xf32, #tpu.memory_space<vmem>>, %arg7: memref<16x128xf32, #tpu.memory_space<vmem>>) attributes {dimension_semantics = [#tpu.dimension_semantics<arbitrary>], iteration_bounds = array<i64: 2>, scalar_prefetch = 0 : i64, scratch_operands = 1 : i64, tpu.core_type = #tpu.core_type<tc>, window_params = [{transform_indices = @transform_0, window_bounds = array<i64: 4, 16, 384>}, {pipeline_mode = #tpu.pipeline_mode<synchronous>, transform_indices = @transform_1, window_bounds = array<i64: 128, 384>}, {pipeline_mode = #tpu.pipeline_mode<synchronous>, transform_indices = @transform_2, window_bounds = array<i64: 1, 384>}, {pipeline_mode = #tpu.pipeline_mode<synchronous>, transform_indices = @transform_3, window_bounds = array<i64: 16, 128>}, {transform_indices = @transform_4, window_bounds = array<i64: 4, 16, 128>}, {pipeline_mode = #tpu.pipeline_mode<synchronous>, transform_indices = @transform_5, window_bounds = array<i64: 16, 128>}]} {
    %c0_i32 = arith.constant 0 : i32
    %0 = arith.cmpi eq, %arg0, %c0_i32 : i32
    %1 = arith.extui %0 : i1 to i32
    %c0_i32_0 = arith.constant 0 : i32
    %2 = arith.cmpi ne, %1, %c0_i32_0 : i32
    scf.if %2 {
      %c0_38 = arith.constant 0 : index
      %c0_39 = arith.constant 0 : index
      %148 = vector.load %arg4[%c0_38, %c0_39] : memref<16x128xf32, #tpu.memory_space<vmem>>, vector<16x128xf32>
      %c0_40 = arith.constant 0 : index
      %c0_41 = arith.constant 0 : index
      %149 = vector.load %arg7[%c0_40, %c0_41] : memref<16x128xf32, #tpu.memory_space<vmem>>, vector<16x128xf32>
      tpu.vector_store %arg7[%c0_40, %c0_41], %148 {strides = array<i32>} : memref<16x128xf32, #tpu.memory_space<vmem>>, vector<16x128xf32>,
    } else {
    }
    %c0 = arith.constant 0 : index
    %c0_1 = arith.constant 0 : index
    %3 = vector.load %arg2[%c0, %c0_1] : memref<128x384xbf16, #tpu.memory_space<vmem>>, vector<128x384xbf16>
    %c0_2 = arith.constant 0 : index
    %c0_3 = arith.constant 0 : index
    %4 = vector.load %arg3[%c0_2, %c0_3] : memref<1x384xf32, #tpu.memory_space<vmem>>, vector<1x384xf32>
    %5 = vector.shape_cast %4 : vector<1x384xf32> to vector<1x384xf32>
    %6 = vector.broadcast %5 : vector<1x384xf32> to vector<16x384xf32>
    %c0_4 = arith.constant 0 : index
    %c0_5 = arith.constant 0 : index
    %7 = vector.load %arg7[%c0_4, %c0_5] : memref<16x128xf32, #tpu.memory_space<vmem>>, vector<16x128xf32>
    %c0_i32_6 = arith.constant 0 : i32
    %8 = arith.index_cast %c0_i32_6 : i32 to index
    %c0_7 = arith.constant 0 : index
    %c0_8 = arith.constant 0 : index
    %9 = vector.load %arg1[%8, %c0_7, %c0_8] : memref<4x16x384xf32, #tpu.memory_space<vmem>>, vector<1x16x384xf32>
    %10 = vector.shape_cast %9 : vector<1x16x384xf32> to vector<16x384xf32>
    %11 = arith.truncf %7 : vector<16x128xf32> to vector<16x128xbf16>
    %cst = arith.constant dense<0.000000e+00> : vector<16x384xf32>
    %12 = tpu.matmul %11, %3, %cst {dimension_numbers = #tpu.dot_dimension_numbers<[1], [0], [0], [1], [0, 0, 1, 1], [], []>} : vector<16x128xbf16>, vector<128x384xbf16>, vector<16x384xf32> -> vector<16x384xf32>
    %13 = arith.addf %12, %6 : vector<16x384xf32>
    %14 = vector.extract_strided_slice %10 {offsets = [0, 0], sizes = [16, 128], strides = [1, 1]} : vector<16x384xf32> to vector<16x128xf32>
    %15 = vector.extract_strided_slice %13 {offsets = [0, 0], sizes = [16, 128], strides = [1, 1]} : vector<16x384xf32> to vector<16x128xf32>
    %16 = arith.addf %14, %15 : vector<16x128xf32>
    %17 = arith.negf %16 : vector<16x128xf32>
    %18 = math.exp %17 : vector<16x128xf32>
    %cst_9 = arith.constant 1.000000e+00 : f32
    %19 = vector.broadcast %cst_9 : f32 to vector<16x128xf32>
    %20 = arith.addf %19, %18 : vector<16x128xf32>
    %21 = arith.divf %19, %20 : vector<16x128xf32>
    %22 = vector.extract_strided_slice %10 {offsets = [0, 128], sizes = [16, 128], strides = [1, 1]} : vector<16x384xf32> to vector<16x128xf32>
    %23 = vector.extract_strided_slice %13 {offsets = [0, 128], sizes = [16, 128], strides = [1, 1]} : vector<16x384xf32> to vector<16x128xf32>
    %24 = arith.addf %22, %23 : vector<16x128xf32>
    %25 = arith.negf %24 : vector<16x128xf32>
    %26 = math.exp %25 : vector<16x128xf32>
    %cst_10 = arith.constant 1.000000e+00 : f32
    %27 = vector.broadcast %cst_10 : f32 to vector<16x128xf32>
    %28 = arith.addf %27, %26 : vector<16x128xf32>
    %29 = arith.divf %27, %28 : vector<16x128xf32>
    %30 = vector.extract_strided_slice %10 {offsets = [0, 256], sizes = [16, 128], strides = [1, 1]} : vector<16x384xf32> to vector<16x128xf32>
    %31 = vector.extract_strided_slice %13 {offsets = [0, 256], sizes = [16, 128], strides = [1, 1]} : vector<16x384xf32> to vector<16x128xf32>
    %32 = arith.mulf %21, %31 : vector<16x128xf32>
    %33 = arith.addf %30, %32 : vector<16x128xf32>
    %34 = math.tanh %33 : vector<16x128xf32>
    %35 = arith.subf %7, %34 : vector<16x128xf32>
    %36 = arith.mulf %29, %35 : vector<16x128xf32>
    %37 = arith.addf %34, %36 : vector<16x128xf32>
    %38 = arith.index_cast %c0_i32_6 : i32 to index
    %c0_11 = arith.constant 0 : index
    %c0_12 = arith.constant 0 : index
    %39 = vector.load %arg5[%38, %c0_11, %c0_12] : memref<4x16x128xf32, #tpu.memory_space<vmem>>, vector<1x16x128xf32>
    %40 = vector.shape_cast %39 : vector<1x16x128xf32> to vector<16x128xf32>
    %41 = vector.shape_cast %37 : vector<16x128xf32> to vector<1x16x128xf32>
    tpu.vector_store %arg5[%38, %c0_11, %c0_12], %41 {strides = array<i32>} : memref<4x16x128xf32, #tpu.memory_space<vmem>>, vector<1x16x128xf32>,
    %c1_i32 = arith.constant 1 : i32
    %42 = arith.index_cast %c1_i32 : i32 to index
    %c0_13 = arith.constant 0 : index
    %c0_14 = arith.constant 0 : index
    %43 = vector.load %arg1[%42, %c0_13, %c0_14] : memref<4x16x384xf32, #tpu.memory_space<vmem>>, vector<1x16x384xf32>
    %44 = vector.shape_cast %43 : vector<1x16x384xf32> to vector<16x384xf32>
    %45 = arith.truncf %37 : vector<16x128xf32> to vector<16x128xbf16>
    %cst_15 = arith.constant dense<0.000000e+00> : vector<16x384xf32>
    %46 = tpu.matmul %45, %3, %cst_15 {dimension_numbers = #tpu.dot_dimension_numbers<[1], [0], [0], [1], [0, 0, 1, 1], [], []>} : vector<16x128xbf16>, vector<128x384xbf16>, vector<16x384xf32> -> vector<16x384xf32>
    %47 = arith.addf %46, %6 : vector<16x384xf32>
    %48 = vector.extract_strided_slice %44 {offsets = [0, 0], sizes = [16, 128], strides = [1, 1]} : vector<16x384xf32> to vector<16x128xf32>
    %49 = vector.extract_strided_slice %47 {offsets = [0, 0], sizes = [16, 128], strides = [1, 1]} : vector<16x384xf32> to vector<16x128xf32>
    %50 = arith.addf %48, %49 : vector<16x128xf32>
    %51 = arith.negf %50 : vector<16x128xf32>
    %52 = math.exp %51 : vector<16x128xf32>
    %cst_16 = arith.constant 1.000000e+00 : f32
    %53 = vector.broadcast %cst_16 : f32 to vector<16x128xf32>
    %54 = arith.addf %53, %52 : vector<16x128xf32>
    %55 = arith.divf %53, %54 : vector<16x128xf32>
    %56 = vector.extract_strided_slice %44 {offsets = [0, 128], sizes = [16, 128], strides = [1, 1]} : vector<16x384xf32> to vector<16x128xf32>
    %57 = vector.extract_strided_slice %47 {offsets = [0, 128], sizes = [16, 128], strides = [1, 1]} : vector<16x384xf32> to vector<16x128xf32>
    %58 = arith.addf %56, %57 : vector<16x128xf32>
    %59 = arith.negf %58 : vector<16x128xf32>
    %60 = math.exp %59 : vector<16x128xf32>
    %cst_17 = arith.constant 1.000000e+00 : f32
    %61 = vector.broadcast %cst_17 : f32 to vector<16x128xf32>
    %62 = arith.addf %61, %60 : vector<16x128xf32>
    %63 = arith.divf %61, %62 : vector<16x128xf32>
    %64 = vector.extract_strided_slice %44 {offsets = [0, 256], sizes = [16, 128], strides = [1, 1]} : vector<16x384xf32> to vector<16x128xf32>
    %65 = vector.extract_strided_slice %47 {offsets = [0, 256], sizes = [16, 128], strides = [1, 1]} : vector<16x384xf32> to vector<16x128xf32>
    %66 = arith.mulf %55, %65 : vector<16x128xf32>
    %67 = arith.addf %64, %66 : vector<16x128xf32>
    %68 = math.tanh %67 : vector<16x128xf32>
    %69 = arith.subf %37, %68 : vector<16x128xf32>
    %70 = arith.mulf %63, %69 : vector<16x128xf32>
    %71 = arith.addf %68, %70 : vector<16x128xf32>
    %72 = arith.index_cast %c1_i32 : i32 to index
    %c0_18 = arith.constant 0 : index
    %c0_19 = arith.constant 0 : index
    %73 = vector.load %arg5[%72, %c0_18, %c0_19] : memref<4x16x128xf32, #tpu.memory_space<vmem>>, vector<1x16x128xf32>
    %74 = vector.shape_cast %73 : vector<1x16x128xf32> to vector<16x128xf32>
    %75 = vector.shape_cast %71 : vector<16x128xf32> to vector<1x16x128xf32>
    tpu.vector_store %arg5[%72, %c0_18, %c0_19], %75 {strides = array<i32>} : memref<4x16x128xf32, #tpu.memory_space<vmem>>, vector<1x16x128xf32>,
    %c2_i32 = arith.constant 2 : i32
    %76 = arith.index_cast %c2_i32 : i32 to index
    %c0_20 = arith.constant 0 : index
    %c0_21 = arith.constant 0 : index
    %77 = vector.load %arg1[%76, %c0_20, %c0_21] : memref<4x16x384xf32, #tpu.memory_space<vmem>>, vector<1x16x384xf32>
    %78 = vector.shape_cast %77 : vector<1x16x384xf32> to vector<16x384xf32>
    %79 = arith.truncf %71 : vector<16x128xf32> to vector<16x128xbf16>
    %cst_22 = arith.constant dense<0.000000e+00> : vector<16x384xf32>
    %80 = tpu.matmul %79, %3, %cst_22 {dimension_numbers = #tpu.dot_dimension_numbers<[1], [0], [0], [1], [0, 0, 1, 1], [], []>} : vector<16x128xbf16>, vector<128x384xbf16>, vector<16x384xf32> -> vector<16x384xf32>
    %81 = arith.addf %80, %6 : vector<16x384xf32>
    %82 = vector.extract_strided_slice %78 {offsets = [0, 0], sizes = [16, 128], strides = [1, 1]} : vector<16x384xf32> to vector<16x128xf32>
    %83 = vector.extract_strided_slice %81 {offsets = [0, 0], sizes = [16, 128], strides = [1, 1]} : vector<16x384xf32> to vector<16x128xf32>
    %84 = arith.addf %82, %83 : vector<16x128xf32>
    %85 = arith.negf %84 : vector<16x128xf32>
    %86 = math.exp %85 : vector<16x128xf32>
    %cst_23 = arith.constant 1.000000e+00 : f32
    %87 = vector.broadcast %cst_23 : f32 to vector<16x128xf32>
    %88 = arith.addf %87, %86 : vector<16x128xf32>
    %89 = arith.divf %87, %88 : vector<16x128xf32>
    %90 = vector.extract_strided_slice %78 {offsets = [0, 128], sizes = [16, 128], strides = [1, 1]} : vector<16x384xf32> to vector<16x128xf32>
    %91 = vector.extract_strided_slice %81 {offsets = [0, 128], sizes = [16, 128], strides = [1, 1]} : vector<16x384xf32> to vector<16x128xf32>
    %92 = arith.addf %90, %91 : vector<16x128xf32>
    %93 = arith.negf %92 : vector<16x128xf32>
    %94 = math.exp %93 : vector<16x128xf32>
    %cst_24 = arith.constant 1.000000e+00 : f32
    %95 = vector.broadcast %cst_24 : f32 to vector<16x128xf32>
    %96 = arith.addf %95, %94 : vector<16x128xf32>
    %97 = arith.divf %95, %96 : vector<16x128xf32>
    %98 = vector.extract_strided_slice %78 {offsets = [0, 256], sizes = [16, 128], strides = [1, 1]} : vector<16x384xf32> to vector<16x128xf32>
    %99 = vector.extract_strided_slice %81 {offsets = [0, 256], sizes = [16, 128], strides = [1, 1]} : vector<16x384xf32> to vector<16x128xf32>
    %100 = arith.mulf %89, %99 : vector<16x128xf32>
    %101 = arith.addf %98, %100 : vector<16x128xf32>
    %102 = math.tanh %101 : vector<16x128xf32>
    %103 = arith.subf %71, %102 : vector<16x128xf32>
    %104 = arith.mulf %97, %103 : vector<16x128xf32>
    %105 = arith.addf %102, %104 : vector<16x128xf32>
    %106 = arith.index_cast %c2_i32 : i32 to index
    %c0_25 = arith.constant 0 : index
    %c0_26 = arith.constant 0 : index
    %107 = vector.load %arg5[%106, %c0_25, %c0_26] : memref<4x16x128xf32, #tpu.memory_space<vmem>>, vector<1x16x128xf32>
    %108 = vector.shape_cast %107 : vector<1x16x128xf32> to vector<16x128xf32>
    %109 = vector.shape_cast %105 : vector<16x128xf32> to vector<1x16x128xf32>
    tpu.vector_store %arg5[%106, %c0_25, %c0_26], %109 {strides = array<i32>} : memref<4x16x128xf32, #tpu.memory_space<vmem>>, vector<1x16x128xf32>,
    %c3_i32 = arith.constant 3 : i32
    %110 = arith.index_cast %c3_i32 : i32 to index
    %c0_27 = arith.constant 0 : index
    %c0_28 = arith.constant 0 : index
    %111 = vector.load %arg1[%110, %c0_27, %c0_28] : memref<4x16x384xf32, #tpu.memory_space<vmem>>, vector<1x16x384xf32>
    %112 = vector.shape_cast %111 : vector<1x16x384xf32> to vector<16x384xf32>
    %113 = arith.truncf %105 : vector<16x128xf32> to vector<16x128xbf16>
    %cst_29 = arith.constant dense<0.000000e+00> : vector<16x384xf32>
    %114 = tpu.matmul %113, %3, %cst_29 {dimension_numbers = #tpu.dot_dimension_numbers<[1], [0], [0], [1], [0, 0, 1, 1], [], []>} : vector<16x128xbf16>, vector<128x384xbf16>, vector<16x384xf32> -> vector<16x384xf32>
    %115 = arith.addf %114, %6 : vector<16x384xf32>
    %116 = vector.extract_strided_slice %112 {offsets = [0, 0], sizes = [16, 128], strides = [1, 1]} : vector<16x384xf32> to vector<16x128xf32>
    %117 = vector.extract_strided_slice %115 {offsets = [0, 0], sizes = [16, 128], strides = [1, 1]} : vector<16x384xf32> to vector<16x128xf32>
    %118 = arith.addf %116, %117 : vector<16x128xf32>
    %119 = arith.negf %118 : vector<16x128xf32>
    %120 = math.exp %119 : vector<16x128xf32>
    %cst_30 = arith.constant 1.000000e+00 : f32
    %121 = vector.broadcast %cst_30 : f32 to vector<16x128xf32>
    %122 = arith.addf %121, %120 : vector<16x128xf32>
    %123 = arith.divf %121, %122 : vector<16x128xf32>
    %124 = vector.extract_strided_slice %112 {offsets = [0, 128], sizes = [16, 128], strides = [1, 1]} : vector<16x384xf32> to vector<16x128xf32>
    %125 = vector.extract_strided_slice %115 {offsets = [0, 128], sizes = [16, 128], strides = [1, 1]} : vector<16x384xf32> to vector<16x128xf32>
    %126 = arith.addf %124, %125 : vector<16x128xf32>
    %127 = arith.negf %126 : vector<16x128xf32>
    %128 = math.exp %127 : vector<16x128xf32>
    %cst_31 = arith.constant 1.000000e+00 : f32
    %129 = vector.broadcast %cst_31 : f32 to vector<16x128xf32>
    %130 = arith.addf %129, %128 : vector<16x128xf32>
    %131 = arith.divf %129, %130 : vector<16x128xf32>
    %132 = vector.extract_strided_slice %112 {offsets = [0, 256], sizes = [16, 128], strides = [1, 1]} : vector<16x384xf32> to vector<16x128xf32>
    %133 = vector.extract_strided_slice %115 {offsets = [0, 256], sizes = [16, 128], strides = [1, 1]} : vector<16x384xf32> to vector<16x128xf32>
    %134 = arith.mulf %123, %133 : vector<16x128xf32>
    %135 = arith.addf %132, %134 : vector<16x128xf32>
    %136 = math.tanh %135 : vector<16x128xf32>
    %137 = arith.subf %105, %136 : vector<16x128xf32>
    %138 = arith.mulf %131, %137 : vector<16x128xf32>
    %139 = arith.addf %136, %138 : vector<16x128xf32>
    %140 = arith.index_cast %c3_i32 : i32 to index
    %c0_32 = arith.constant 0 : index
    %c0_33 = arith.constant 0 : index
    %141 = vector.load %arg5[%140, %c0_32, %c0_33] : memref<4x16x128xf32, #tpu.memory_space<vmem>>, vector<1x16x128xf32>
    %142 = vector.shape_cast %141 : vector<1x16x128xf32> to vector<16x128xf32>
    %143 = vector.shape_cast %139 : vector<16x128xf32> to vector<1x16x128xf32>
    tpu.vector_store %arg5[%140, %c0_32, %c0_33], %143 {strides = array<i32>} : memref<4x16x128xf32, #tpu.memory_space<vmem>>, vector<1x16x128xf32>,
    %c4_i32 = arith.constant 4 : i32
    %c0_34 = arith.constant 0 : index
    %c0_35 = arith.constant 0 : index
    %144 = vector.load %arg7[%c0_34, %c0_35] : memref<16x128xf32, #tpu.memory_space<vmem>>, vector<16x128xf32>
    tpu.vector_store %arg7[%c0_34, %c0_35], %139 {strides = array<i32>} : memref<16x128xf32, #tpu.memory_space<vmem>>, vector<16x128xf32>,
    %c1_i32_36 = arith.constant 1 : i32
    %145 = arith.cmpi eq, %arg0, %c1_i32_36 : i32
    %146 = arith.extui %145 : i1 to i32
    %c0_i32_37 = arith.constant 0 : i32
    %147 = arith.cmpi ne, %146, %c0_i32_37 : i32
    scf.if %147 {
      %c0_38 = arith.constant 0 : index
      %c0_39 = arith.constant 0 : index
      %148 = vector.load %arg6[%c0_38, %c0_39] : memref<16x128xf32, #tpu.memory_space<vmem>>, vector<16x128xf32>
      tpu.vector_store %arg6[%c0_38, %c0_39], %139 {strides = array<i32>} : memref<16x128xf32, #tpu.memory_space<vmem>>, vector<16x128xf32>,
    } else {
    }
    return
  }
  func.func @transform_0(%arg0: i32) -> (i32, i32, i32) {
    %c0_i32 = arith.constant 0 : i32
    %c0_i32_0 = arith.constant 0 : i32
    %c0_i32_1 = arith.constant 0 : i32
    return %arg0, %c0_i32, %c0_i32_0 : i32, i32, i32
  }
  func.func @transform_1(%arg0: i32) -> (i32, i32) {
    %c0_i32 = arith.constant 0 : i32
    %c0_i32_0 = arith.constant 0 : i32
    %c0_i32_1 = arith.constant 0 : i32
    return %c0_i32, %c0_i32_0 : i32, i32
  }
  func.func @transform_2(%arg0: i32) -> (i32, i32) {
    %c0_i32 = arith.constant 0 : i32
    %c0_i32_0 = arith.constant 0 : i32
    %c0_i32_1 = arith.constant 0 : i32
    return %c0_i32, %c0_i32_0 : i32, i32
  }
  func.func @transform_3(%arg0: i32) -> (i32, i32) {
    %c0_i32 = arith.constant 0 : i32
    %c0_i32_0 = arith.constant 0 : i32
    %c0_i32_1 = arith.constant 0 : i32
    return %c0_i32, %c0_i32_0 : i32, i32
  }
  func.func @transform_4(%arg0: i32) -> (i32, i32, i32) {
    %c0_i32 = arith.constant 0 : i32
    %c0_i32_0 = arith.constant 0 : i32
    %c0_i32_1 = arith.constant 0 : i32
    return %arg0, %c0_i32, %c0_i32_0 : i32, i32, i32
  }
  func.func @transform_5(%arg0: i32) -> (i32, i32) {
    %c0_i32 = arith.constant 0 : i32
    %c0_i32_0 = arith.constant 0 : i32
    %c0_i32_1 = arith.constant 0 : i32
    return %c0_i32, %c0_i32_0 : i32, i32
  }
}

module attributes {stable_mosaic.version = 11 : i64} {
  func.func @_attn_project_kernel(%arg0: i32, %arg1: memref<8x8x128xbf16, #tpu.memory_space<vmem>>, %arg2: memref<8x8x128xbf16, #tpu.memory_space<vmem>>, %arg3: memref<256x128xbf16, #tpu.memory_space<vmem>>, %arg4: memref<128x128xbf16, #tpu.memory_space<vmem>>, %arg5: memref<1x128xf32, #tpu.memory_space<vmem>>, %arg6: memref<8x8x128xf32, #tpu.memory_space<vmem>>, %arg7: memref<8x8xi32, #tpu.memory_space<vmem>>) attributes {dimension_semantics = [#tpu.dimension_semantics<parallel>], iteration_bounds = array<i64: 2>, scalar_prefetch = 0 : i64, scratch_operands = 0 : i64, tpu.core_type = #tpu.core_type<tc>, window_params = [{transform_indices = @transform_0, window_bounds = array<i64: 8, 8, 128>}, {transform_indices = @transform_1, window_bounds = array<i64: 8, 8, 128>}, {pipeline_mode = #tpu.pipeline_mode<synchronous>, transform_indices = @transform_2, window_bounds = array<i64: 256, 128>}, {pipeline_mode = #tpu.pipeline_mode<synchronous>, transform_indices = @transform_3, window_bounds = array<i64: 128, 128>}, {pipeline_mode = #tpu.pipeline_mode<synchronous>, transform_indices = @transform_4, window_bounds = array<i64: 1, 128>}, {transform_indices = @transform_5, window_bounds = array<i64: 8, 8, 128>}, {transform_indices = @transform_6, window_bounds = array<i64: 8, 8>}]} {
    %c0 = arith.constant 0 : index
    %c0_0 = arith.constant 0 : index
    %c0_1 = arith.constant 0 : index
    %0 = vector.load %arg1[%c0, %c0_0, %c0_1] : memref<8x8x128xbf16, #tpu.memory_space<vmem>>, vector<8x8x128xbf16>
    %c0_2 = arith.constant 0 : index
    %c0_3 = arith.constant 0 : index
    %c0_4 = arith.constant 0 : index
    %1 = vector.load %arg2[%c0_2, %c0_3, %c0_4] : memref<8x8x128xbf16, #tpu.memory_space<vmem>>, vector<8x8x128xbf16>
    "tpu.trace_start"() <{level = 10 : i32, message = "bth,bsh->bts"}> : () -> ()
    %cst = arith.constant dense<0.000000e+00> : vector<8x8x8xf32>
    %2 = tpu.matmul %0, %1, %cst {dimension_numbers = #tpu.dot_dimension_numbers<[2], [2], [1], [1], [0, 0, 0, 1, 1, 1], [0], [0]>} : vector<8x8x128xbf16>, vector<8x8x128xbf16>, vector<8x8x8xf32> -> vector<8x8x8xf32>
    "tpu.trace_stop"() : () -> ()
    %cst_5 = arith.constant dense<0xFF800000> : vector<8x8xf32>
    %3 = vector.multi_reduction <maximumf>, %2, %cst_5 [2] : vector<8x8x8xf32> to vector<8x8xf32>
    %4 = vector.shape_cast %3 : vector<8x8xf32> to vector<8x8x1xf32>
    %5 = vector.broadcast %4 : vector<8x8x1xf32> to vector<8x8x8xf32>
    %6 = arith.subf %2, %5 : vector<8x8x8xf32>
    %7 = math.exp %6 : vector<8x8x8xf32>
    %cst_6 = arith.constant dense<0.000000e+00> : vector<8x8xf32>
    %8 = vector.multi_reduction <add>, %7, %cst_6 [2] : vector<8x8x8xf32> to vector<8x8xf32>
    %9 = vector.shape_cast %8 : vector<8x8xf32> to vector<8x8x1xf32>
    %10 = tpu.reciprocal %9 {approx = true} : vector<8x8x1xf32> -> vector<8x8x1xf32>
    %11 = vector.broadcast %10 : vector<8x8x1xf32> to vector<8x8x8xf32>
    %12 = arith.mulf %7, %11 : vector<8x8x8xf32>
    %13 = arith.truncf %12 : vector<8x8x8xf32> to vector<8x8x8xbf16>
    "tpu.trace_start"() <{level = 10 : i32, message = "bts,bsh->bth"}> : () -> ()
    %cst_7 = arith.constant dense<0.000000e+00> : vector<8x8x128xf32>
    %14 = tpu.matmul %13, %1, %cst_7 {dimension_numbers = #tpu.dot_dimension_numbers<[2], [1], [1], [2], [0, 0, 0, 1, 1, 2], [0], [0]>} : vector<8x8x8xbf16>, vector<8x8x128xbf16>, vector<8x8x128xf32> -> vector<8x8x128xf32>
    "tpu.trace_stop"() : () -> ()
    %15 = arith.truncf %14 : vector<8x8x128xf32> to vector<8x8x128xbf16>
    %16 = tpu.concatenate %15, %0 in 2 : vector<8x8x128xbf16>, vector<8x8x128xbf16> -> vector<8x8x256xbf16>
    %17 = vector.shape_cast %16 : vector<8x8x256xbf16> to vector<64x256xbf16>
    %c0_8 = arith.constant 0 : index
    %c0_9 = arith.constant 0 : index
    %18 = vector.load %arg3[%c0_8, %c0_9] : memref<256x128xbf16, #tpu.memory_space<vmem>>, vector<256x128xbf16>
    %cst_10 = arith.constant dense<0.000000e+00> : vector<64x128xf32>
    %19 = tpu.matmul %17, %18, %cst_10 {dimension_numbers = #tpu.dot_dimension_numbers<[1], [0], [0], [1], [0, 0, 1, 1], [], []>} : vector<64x256xbf16>, vector<256x128xbf16>, vector<64x128xf32> -> vector<64x128xf32>
    %20 = math.tanh %19 : vector<64x128xf32>
    %21 = arith.truncf %20 : vector<64x128xf32> to vector<64x128xbf16>
    %c0_11 = arith.constant 0 : index
    %c0_12 = arith.constant 0 : index
    %22 = vector.load %arg4[%c0_11, %c0_12] : memref<128x128xbf16, #tpu.memory_space<vmem>>, vector<128x128xbf16>
    %cst_13 = arith.constant dense<0.000000e+00> : vector<64x128xf32>
    %23 = tpu.matmul %21, %22, %cst_13 {dimension_numbers = #tpu.dot_dimension_numbers<[1], [0], [0], [1], [0, 0, 1, 1], [], []>} : vector<64x128xbf16>, vector<128x128xbf16>, vector<64x128xf32> -> vector<64x128xf32>
    %c0_14 = arith.constant 0 : index
    %c0_15 = arith.constant 0 : index
    %24 = vector.load %arg5[%c0_14, %c0_15] : memref<1x128xf32, #tpu.memory_space<vmem>>, vector<1x128xf32>
    %25 = vector.broadcast %24 : vector<1x128xf32> to vector<64x128xf32>
    %26 = arith.addf %23, %25 : vector<64x128xf32>
    %cst_16 = arith.constant dense<0xFF800000> : vector<64xf32>
    %27 = vector.multi_reduction <maximumf>, %26, %cst_16 [1] : vector<64x128xf32> to vector<64xf32>
    %28 = vector.shape_cast %27 : vector<64xf32> to vector<64x1xf32>
    %29 = vector.broadcast %28 : vector<64x1xf32> to vector<64x128xf32>
    %30 = arith.subf %26, %29 : vector<64x128xf32>
    %31 = math.exp %30 : vector<64x128xf32>
    %cst_17 = arith.constant dense<0.000000e+00> : vector<64xf32>
    %32 = vector.multi_reduction <add>, %31, %cst_17 [1] : vector<64x128xf32> to vector<64xf32>
    %33 = vector.shape_cast %32 : vector<64xf32> to vector<64x1xf32>
    %34 = math.log %33 : vector<64x1xf32>
    %35 = arith.addf %28, %34 : vector<64x1xf32>
    %36 = vector.broadcast %35 : vector<64x1xf32> to vector<64x128xf32>
    %37 = arith.subf %26, %36 : vector<64x128xf32>
    %38 = vector.shape_cast %37 : vector<64x128xf32> to vector<8x8x128xf32>
    %c0_18 = arith.constant 0 : index
    %c0_19 = arith.constant 0 : index
    %c0_20 = arith.constant 0 : index
    %39 = vector.load %arg6[%c0_18, %c0_19, %c0_20] : memref<8x8x128xf32, #tpu.memory_space<vmem>>, vector<8x8x128xf32>
    tpu.vector_store %arg6[%c0_18, %c0_19, %c0_20], %38 {strides = array<i32>} : memref<8x8x128xf32, #tpu.memory_space<vmem>>, vector<8x8x128xf32>,
    %40 = tpu.iota {dimensions = array<i32: 2>} : vector<8x8x128xi32>
    %cst_21 = arith.constant dense<0xFF800000> : vector<8x8xf32>
    %41 = vector.multi_reduction <maximumf>, %38, %cst_21 [2] : vector<8x8x128xf32> to vector<8x8xf32>
    %42 = vector.shape_cast %41 : vector<8x8xf32> to vector<8x8x1xf32>
    %43 = vector.broadcast %42 : vector<8x8x1xf32> to vector<8x8x128xf32>
    %44 = arith.cmpf oeq, %38, %43 : vector<8x8x128xf32>
    %c128_i32 = arith.constant 128 : i32
    %45 = vector.broadcast %c128_i32 : i32 to vector<8x8x128xi32>
    %46 = arith.select %44, %40, %45 : vector<8x8x128xi1>, vector<8x8x128xi32>
    %cst_22 = arith.constant dense<2147483647> : vector<8x8xi32>
    %47 = vector.multi_reduction <minsi>, %46, %cst_22 [2] : vector<8x8x128xi32> to vector<8x8xi32>
    %c0_23 = arith.constant 0 : index
    %c0_24 = arith.constant 0 : index
    %48 = vector.load %arg7[%c0_23, %c0_24] : memref<8x8xi32, #tpu.memory_space<vmem>>, vector<8x8xi32>
    tpu.vector_store %arg7[%c0_23, %c0_24], %47 {strides = array<i32>} : memref<8x8xi32, #tpu.memory_space<vmem>>, vector<8x8xi32>,
    return
  }
  func.func @transform_0(%arg0: i32) -> (i32, i32, i32) {
    %c0_i32 = arith.constant 0 : i32
    %c0_i32_0 = arith.constant 0 : i32
    %c0_i32_1 = arith.constant 0 : i32
    return %arg0, %c0_i32, %c0_i32_0 : i32, i32, i32
  }
  func.func @transform_1(%arg0: i32) -> (i32, i32, i32) {
    %c0_i32 = arith.constant 0 : i32
    %c0_i32_0 = arith.constant 0 : i32
    %c0_i32_1 = arith.constant 0 : i32
    return %arg0, %c0_i32, %c0_i32_0 : i32, i32, i32
  }
  func.func @transform_2(%arg0: i32) -> (i32, i32) {
    %c0_i32 = arith.constant 0 : i32
    %c0_i32_0 = arith.constant 0 : i32
    %c0_i32_1 = arith.constant 0 : i32
    return %c0_i32, %c0_i32_0 : i32, i32
  }
  func.func @transform_3(%arg0: i32) -> (i32, i32) {
    %c0_i32 = arith.constant 0 : i32
    %c0_i32_0 = arith.constant 0 : i32
    %c0_i32_1 = arith.constant 0 : i32
    return %c0_i32, %c0_i32_0 : i32, i32
  }
  func.func @transform_4(%arg0: i32) -> (i32, i32) {
    %c0_i32 = arith.constant 0 : i32
    %c0_i32_0 = arith.constant 0 : i32
    %c0_i32_1 = arith.constant 0 : i32
    return %c0_i32, %c0_i32_0 : i32, i32
  }
  func.func @transform_5(%arg0: i32) -> (i32, i32, i32) {
    %c0_i32 = arith.constant 0 : i32
    %c0_i32_0 = arith.constant 0 : i32
    %c0_i32_1 = arith.constant 0 : i32
    return %arg0, %c0_i32, %c0_i32_0 : i32, i32, i32
  }
  func.func @transform_6(%arg0: i32) -> (i32, i32) {
    %c0_i32 = arith.constant 0 : i32
    %c0_i32_0 = arith.constant 0 : i32
    return %arg0, %c0_i32 : i32, i32
  }
}

</mosaic_0001>

<llo_original>
// kernel: seq2seq_forward.5
$region0: #{seq2seq_forward.5}
  #allocation0 [shape = 'u32[]', space=smem, size = 0x4, offset = 0x4, fixed_abs, tag = 'smem constant byte address 0x4 - core index']
  #allocation1 [shape = 'u32[72,128]{1,0:T(1,128)}', space=vmem, size = 0x9000, scoped, tag = 'internal scratch']
  %s0 = inlined_call_operand.vmem [shape: bf16[128,128], index: 0, kind: input, shape index: {}]
  %s1 = inlined_call_operand.vmem [shape: bf16[128,384], index: 1, kind: input, shape index: {}]
  %s2 = inlined_call_operand.vmem [shape: f32[1,384], index: 2, kind: input, shape index: {}]
  %s3 = inlined_call_operand.vmem [shape: f32[128,384], index: 3, kind: output, shape index: {}]
  %s4 = sld [smem:[#allocation0]]
  $region45: #{seq2seq_forward.5} parent=0
    _
  %s6 = ssub.s32 1, %s4
  %s7 = scalar_select 0, %s6, %s4
  loop: start=0, step=1, limit=4
  $region2: #{seq2seq_forward.5} parent=0 // loop_pre_header
    _
  $region3: #{seq2seq_forward.5} parent=0 // loop_header
    %s9 = sphi 0, %s13
    %p10 = scmp.ge.s32.totalorder %s9, 4
    %s19 = sphi 0, %s21
    %s22 = sphi 0, %s19
    %s23 = sphi 0, %s22
    %s39 = sphi 0, %s23
    %s43 = sphi 0, %s43
    %s45 = sphi 0, %s43
    %s46 = sphi 0, %s45
    %s60 = sphi 0, %s46
    %s64 = sphi 0, %s64
    %s66 = sphi 0, %s64
    %s67 = sphi 0, %s66
    %s81 = sphi 0, %s67
    %s87 = sphi 0, %s89
    %s90 = sphi 0, %s87
    %s91 = sphi 0, %s90
    %s107 = sphi 0, %s91
  $region4: #{seq2seq_forward.5} parent=0 // loop_header_branch
    %12 = sbr.rel (%p10) target = $region8
  $region5: #{seq2seq_forward.5} parent=0 // loop_body
    %s14 = ssub.s32 %s9, 1
    %s15 = ssub.s32 %s9, 2
    %s16 = sadd.s32 %s9, 1
    %s17 = ssub.s32 %s9, %s16
    %p18 = scmp.eq.s32.totalorder %s17, 0
    %s20 = sadd.s32 %s19, 1
    %s21 = scalar_select %p18, %s19, %s20
    %p24 = pneg %p18
    %p25 = scmp.eq.s32.totalorder %s9, 1
    %p26 = por %p24, %p25
    %p27 = scmp.ne.s32.totalorder %s19, %s22
    %p28 = scmp.eq.s32.totalorder %s9, 0
    %p29 = por %p27, %p28
    %p30 = scmp.ne.s32.totalorder %s19, %s22
    %p31 = scmp.eq.s32.totalorder %s14, 1
    %p32 = por %p30, %p31
    %p33 = scmp.ne.s32.totalorder %s22, %s23
    %p34 = scmp.eq.s32.totalorder %s14, 0
    %p35 = por %p33, %p34
    %p36 = scmp.ne.s32.totalorder %s22, %s23
    %p37 = scmp.eq.s32.totalorder %s15, 1
    %p38 = por %p36, %p37
    %p40 = scmp.ne.s32.totalorder %s23, %s39
    %p41 = scmp.eq.s32.totalorder %s15, 0
    %p42 = por %p40, %p41
    %s44 = sadd.s32 %s43, 1
    %p47 = scmp.eq.s32.totalorder %s9, 1
    %p48 = scmp.ne.s32.totalorder %s43, %s45
    %p49 = scmp.eq.s32.totalorder %s9, 0
    %p50 = por %p48, %p49
    %p51 = scmp.ne.s32.totalorder %s43, %s45
    %p52 = scmp.eq.s32.totalorder %s14, 1
    %p53 = por %p51, %p52
    %p54 = scmp.ne.s32.totalorder %s45, %s46
    %p55 = scmp.eq.s32.totalorder %s14, 0
    %p56 = por %p54, %p55
    %p57 = scmp.ne.s32.totalorder %s45, %s46
    %p58 = scmp.eq.s32.totalorder %s15, 1
    %p59 = por %p57, %p58
    %p61 = scmp.ne.s32.totalorder %s46, %s60
    %p62 = scmp.eq.s32.totalorder %s15, 0
    %p63 = por %p61, %p62
    %s65 = sadd.s32 %s64, 1
    %p68 = scmp.eq.s32.totalorder %s9, 1
    %p69 = scmp.ne.s32.totalorder %s64, %s66
    %p70 = scmp.eq.s32.totalorder %s9, 0
    %p71 = por %p69, %p70
    %p72 = scmp.ne.s32.totalorder %s64, %s66
    %p73 = scmp.eq.s32.totalorder %s14, 1
    %p74 = por %p72, %p73
    %p75 = scmp.ne.s32.totalorder %s66, %s67
    %p76 = scmp.eq.s32.totalorder %s14, 0
    %p77 = por %p75, %p76
    %p78 = scmp.ne.s32.totalorder %s66, %s67
    %p79 = scmp.eq.s32.totalorder %s15, 1
    %p80 = por %p78, %p79
    %p82 = scmp.ne.s32.totalorder %s67, %s81
    %p83 = scmp.eq.s32.totalorder %s15, 0
    %p84 = por %p82, %p83
    %s85 = ssub.s32 %s9, %s16
    %p86 = scmp.eq.s32.totalorder %s85, 0
    %s88 = sadd.s32 %s87, 1
    %s89 = scalar_select %p86, %s87, %s88
    %p92 = pneg %p86
    %p93 = scmp.eq.s32.totalorder %s9, 1
    %p94 = por %p92, %p93
    %p95 = scmp.ne.s32.totalorder %s87, %s90
    %p96 = scmp.eq.s32.totalorder %s9, 0
    %p97 = por %p95, %p96
    %p98 = scmp.ne.s32.totalorder %s87, %s90
    %p99 = scmp.eq.s32.totalorder %s14, 1
    %p100 = por %p98, %p99
    %p101 = scmp.ne.s32.totalorder %s90, %s91
    %p102 = scmp.eq.s32.totalorder %s14, 0
    %p103 = por %p101, %p102
    %p104 = scmp.ne.s32.totalorder %s90, %s91
    %p105 = scmp.eq.s32.totalorder %s15, 1
    %p106 = por %p104, %p105
    %p108 = scmp.ne.s32.totalorder %s91, %s107
    %p109 = scmp.eq.s32.totalorder %s15, 0
    %p110 = por %p108, %p109
    %p111 = scmp.le.s32.totalorder 1, %s9
    %p112 = scmp.lt.s32.totalorder %s9, 3
    %p113 = pnand %p111, %p112
    %p114 = pneg %p113
    // Predicated region
    $region9: #{seq2seq_forward.5} parent=5 // pred_check
      _
    $region10: #{seq2seq_forward.5} parent=5 // pred_check_branch
      %116 = sbr.rel (%p113) target = $region12
    $region11: #{seq2seq_forward.5} parent=5 // pred_region
      %s117 = ssub.s32 %s9, 1
      // Predicated region
      $region13: #{seq2seq_forward.5} parent=11 // pred_check
        %p118 = pneg %p56
      $region14: #{seq2seq_forward.5} parent=11 // pred_check_branch
        %120 = sbr.rel (%p118) target = $region16
      $region15: #{seq2seq_forward.5} parent=11 // pred_region
        _
      $region16: #{seq2seq_forward.5} parent=11 // pred_fallthru
        _
      // Predicated region
      $region17: #{seq2seq_forward.5} parent=11 // pred_check
        %p121 = pneg %p77
      $region18: #{seq2seq_forward.5} parent=11 // pred_check_branch
        %123 = sbr.rel (%p121) target = $region20
      $region19: #{seq2seq_forward.5} parent=11 // pred_region
        _
      $region20: #{seq2seq_forward.5} parent=11 // pred_fallthru
        _
    $region12: #{seq2seq_forward.5} parent=5 // pred_fallthru
      _
    %p124 = scmp.lt.s32.totalorder %s9, 2
    // Predicated region
    $region21: #{seq2seq_forward.5} parent=5 // pred_check
      %p125 = pneg %p124
    $region22: #{seq2seq_forward.5} parent=5 // pred_check_branch
      %127 = sbr.rel (%p125) target = $region24
    $region23: #{seq2seq_forward.5} parent=5 // pred_region
      // Predicated region
      $region25: #{seq2seq_forward.5} parent=23 // pred_check
        %p128 = pneg %p29
      $region26: #{seq2seq_forward.5} parent=23 // pred_check_branch
        %130 = sbr.rel (%p128) target = $region28
      $region27: #{seq2seq_forward.5} parent=23 // pred_region
        %s131 = smul.u32 8, %s9
        %p132 = scmp.lt.s32.totalorder %s131, 15
        %s133 = scalar_select %p132, %s131, 15
        %s134 = smul.addr %s133, 4
        %s135 = scalar_lea.vmem %s0, %s134
        %s136 = smul.u32 8, %s9
      $region28: #{seq2seq_forward.5} parent=23 // pred_fallthru
        _
    $region24: #{seq2seq_forward.5} parent=5 // pred_fallthru
      _
    %p137 = scmp.le.s32.totalorder 1, %s9
    %p138 = scmp.lt.s32.totalorder %s9, 3
    %p139 = pnand %p137, %p138
    %p140 = pneg %p139
    // Predicated region
    $region29: #{seq2seq_forward.5} parent=5 // pred_check
      _
    $region30: #{seq2seq_forward.5} parent=5 // pred_check_branch
      %142 = sbr.rel (%p139) target = $region32
    $region31: #{seq2seq_forward.5} parent=5 // pred_region
      %s143 = ssub.s32 %s9, 1
      %s144 = smul.u32 8, %s14
      %p145 = scmp.lt.s32.totalorder %s144, 15
      %s146 = scalar_select %p145, %s144, 15
      %s147 = smul.addr %s146, 4
      %s148 = scalar_lea.vmem %s0, %s147
      %p149 = pneg %p35
      %p150 = pneg %p32
      %p151 = pneg %p56
      %p152 = pneg %p53
      %p153 = pneg %p77
      %p154 = pneg %p74
      %p155 = pneg %p103
      %p156 = pneg %p100
      %s157 = smul.u32 8, %s14
      %p158 = scmp.lt.s32.totalorder %s157, 15
      %s159 = scalar_select %p158, %s157, 15
      %s160 = smul.addr %s159, 3
      %s161 = smul.addr %s160, 8
      %s162 = scalar_lea.vmem %s3, %s161
      %s163 = smul.u32 8, %s14
      %p164 = scmp.lt.s32.totalorder %s163, 15
      %s165 = scalar_select %p164, %s163, 15
      %s166 = smul.addr %s165, 4
      %s167 = scalar_lea.vmem %s0, %s166
      %s168 = smul.u32 8, %s14
      %s169 = smul.u32 8, %s14
      %p170 = scmp.lt.s32.totalorder %s169, 15
      %s171 = scalar_select %p170, %s169, 15
      %s172 = smul.addr %s171, 3
      %s173 = smul.addr %s172, 8
      %s174 = scalar_lea.vmem %s3, %s173
      %s175 = smul.u32 8, %s14
      %v176 = vld [vmem:[%s167] sm:$0xf]
      %v177 = vld [vmem:[%s167 + $0x4] sm:$0xf]
      %v178 = vld [vmem:[%s167 + $0x8] sm:$0xf]
      %v179 = vld [vmem:[%s167 + $0xc] sm:$0xf]
      %v180 = vld [vmem:[%s167 + $0x10] sm:$0xf]
      %v181 = vld [vmem:[%s167 + $0x14] sm:$0xf]
      %v182 = vld [vmem:[%s167 + $0x18] sm:$0xf]
      %v183 = vld [vmem:[%s167 + $0x1c] sm:$0xf]
      %v184 = vld [vmem:[%s1] sm:$0xff]
      %v185 = vld [vmem:[%s1 + $0x8] sm:$0xf]
      %v186 = vld [vmem:[%s1 + $0xc] sm:$0xff]
      %v187 = vld [vmem:[%s1 + $0x14] sm:$0xf]
      %v188 = vld [vmem:[%s1 + $0x18] sm:$0xff]
      %v189 = vld [vmem:[%s1 + $0x20] sm:$0xf]
      %v190 = vld [vmem:[%s1 + $0x24] sm:$0xff]
      %v191 = vld [vmem:[%s1 + $0x2c] sm:$0xf]
      %v192 = vld [vmem:[%s1 + $0x30] sm:$0xff]
      %v193 = vld [vmem:[%s1 + $0x38] sm:$0xf]
      %v194 = vld [vmem:[%s1 + $0x3c] sm:$0xff]
      %v195 = vld [vmem:[%s1 + $0x44] sm:$0xf]
      %v196 = vld [vmem:[%s1 + $0x48] sm:$0xff]
      %v197 = vld [vmem:[%s1 + $0x50] sm:$0xf]
      %v198 = vld [vmem:[%s1 + $0x54] sm:$0xff]
      %v199 = vld [vmem:[%s1 + $0x5c] sm:$0xf]
      %v200 = vld [vmem:[%s1 + $0x60] sm:$0xff]
      %v201 = vld [vmem:[%s1 + $0x68] sm:$0xf]
      %v202 = vld [vmem:[%s1 + $0x6c] sm:$0xff]
      %v203 = vld [vmem:[%s1 + $0x74] sm:$0xf]
      %v204 = vld [vmem:[%s1 + $0x78] sm:$0xff]
      %v205 = vld [vmem:[%s1 + $0x80] sm:$0xf]
      %v206 = vld [vmem:[%s1 + $0x84] sm:$0xff]
      %v207 = vld [vmem:[%s1 + $0x8c] sm:$0xf]
      %v208 = vld [vmem:[%s1 + $0x90] sm:$0xff]
      %v209 = vld [vmem:[%s1 + $0x98] sm:$0xf]
      %v210 = vld [vmem:[%s1 + $0x9c] sm:$0xff]
      %v211 = vld [vmem:[%s1 + $0xa4] sm:$0xf]
      %v212 = vld [vmem:[%s1 + $0xa8] sm:$0xff]
      %v213 = vld [vmem:[%s1 + $0xb0] sm:$0xf]
      %v214 = vld [vmem:[%s1 + $0xb4] sm:$0xff]
      %v215 = vld [vmem:[%s1 + $0xbc] sm:$0xf]
      %v216 = vld [vmem:[%s2] sm:$0x7]
      %v218 = vperm.slane %v216, 0
      %v219 = vperm.slane %v216, 1
      %v220 = vperm.slane %v216, 2
      %v232 = vunpack.c.l.b16 %v176
      %v233 = vunpack.c.l.b16 %v177
      %v234 = vunpack.c.l.b16 %v178
      %v235 = vunpack.c.l.b16 %v179
      %v236 = vunpack.c.l.b16 %v180
      %v237 = vunpack.c.l.b16 %v181
      %v238 = vunpack.c.l.b16 %v182
      %v239 = vunpack.c.l.b16 %v183
      %v240 = vpack.c.b16 %v233, %v232
      %v241 = vpack.c.b16 %v235, %v234
      %v242 = vpack.c.b16 %v237, %v236
      %v243 = vpack.c.b16 %v239, %v238
      %v280 = vunpack.c.l.b16 %v184
      %v281 = vunpack.c.h.b16 %v184
      %v282 = vunpack.c.l.b16 %v185
      %v283 = vunpack.c.l.b16 %v186
      %v284 = vunpack.c.h.b16 %v186
      %v285 = vunpack.c.l.b16 %v187
      %v286 = vunpack.c.l.b16 %v188
      %v287 = vunpack.c.h.b16 %v188
      %v288 = vunpack.c.l.b16 %v189
      %v289 = vunpack.c.l.b16 %v190
      %v290 = vunpack.c.h.b16 %v190
      %v291 = vunpack.c.l.b16 %v191
      %v292 = vunpack.c.l.b16 %v192
      %v293 = vunpack.c.h.b16 %v192
      %v294 = vunpack.c.l.b16 %v193
      %v295 = vunpack.c.l.b16 %v194
      %v296 = vunpack.c.h.b16 %v194
      %v297 = vunpack.c.l.b16 %v195
      %v298 = vunpack.c.l.b16 %v196
      %v299 = vunpack.c.h.b16 %v196
      %v300 = vunpack.c.l.b16 %v197
      %v301 = vunpack.c.l.b16 %v198
      %v302 = vunpack.c.h.b16 %v198
      %v303 = vunpack.c.l.b16 %v199
      %v304 = vunpack.c.l.b16 %v200
      %v305 = vunpack.c.h.b16 %v200
      %v306 = vunpack.c.l.b16 %v201
      %v307 = vunpack.c.l.b16 %v202
      %v308 = vunpack.c.h.b16 %v202
      %v309 = vunpack.c.l.b16 %v203
      %v310 = vunpack.c.l.b16 %v204
      %v311 = vunpack.c.h.b16 %v204
      %v312 = vunpack.c.l.b16 %v205
      %v313 = vunpack.c.l.b16 %v206
      %v314 = vunpack.c.h.b16 %v206
      %v315 = vunpack.c.l.b16 %v207
      %v316 = vunpack.c.l.b16 %v208
      %v317 = vunpack.c.h.b16 %v208
      %v318 = vunpack.c.l.b16 %v209
      %v319 = vunpack.c.l.b16 %v210
      %v320 = vunpack.c.h.b16 %v210
      %v321 = vunpack.c.l.b16 %v211
      %v322 = vunpack.c.l.b16 %v212
      %v323 = vunpack.c.h.b16 %v212
      %v324 = vunpack.c.l.b16 %v213
      %v325 = vunpack.c.l.b16 %v214
      %v326 = vunpack.c.h.b16 %v214
      %v327 = vunpack.c.l.b16 %v215
      %v328 = vpack.c.b16 %v283, %v280
      %v329 = vpack.c.b16 %v284, %v281
      %v330 = vpack.c.b16 %v285, %v282
      %v331 = vpack.c.b16 %v289, %v286
      %v332 = vpack.c.b16 %v290, %v287
      %v333 = vpack.c.b16 %v291, %v288
      %v334 = vpack.c.b16 %v295, %v292
      %v335 = vpack.c.b16 %v296, %v293
      %v336 = vpack.c.b16 %v297, %v294
      %v337 = vpack.c.b16 %v301, %v298
      %v338 = vpack.c.b16 %v302, %v299
      %v339 = vpack.c.b16 %v303, %v300
      %v340 = vpack.c.b16 %v307, %v304
      %v341 = vpack.c.b16 %v308, %v305
      %v342 = vpack.c.b16 %v309, %v306
      %v343 = vpack.c.b16 %v313, %v310
      %v344 = vpack.c.b16 %v314, %v311
      %v345 = vpack.c.b16 %v315, %v312
      %v346 = vpack.c.b16 %v319, %v316
      %v347 = vpack.c.b16 %v320, %v317
      %v348 = vpack.c.b16 %v321, %v318
      %v349 = vpack.c.b16 %v325, %v322
      %v350 = vpack.c.b16 %v326, %v323
      %v351 = vpack.c.b16 %v327, %v324
      %376 = vmatpush.bf16.msra.mxu0 %v349
      %377 = vmatpush.bf16.msra.mxu0 %v346
      %378 = vmatpush.bf16.msra.mxu0 %v343
      %379 = vmatpush.bf16.msra.mxu0 %v340
      %380 = vmatpush.bf16.msra.mxu0 %v337
      %381 = vmatpush.bf16.msra.mxu0 %v334
      %382 = vmatpush.bf16.msra.mxu0 %v331
      %383 = vmatpush.bf16.msra.mxu0 %v328
      %384 = vmatmul.bf16.gmra.mxu0 %v240
      %v385 = vpop.f32.mrf.mxu0
      %v386 = vadd.f32 %v218, %v385
      %v387 = vpop.f32.mrf.mxu0
      %v388 = vadd.f32 %v218, %v387
      %389 = vmatmul.bf16.gmra.mxu0 %v241
      %v390 = vpop.f32.mrf.mxu0
      %v391 = vadd.f32 %v218, %v390
      %v392 = vpop.f32.mrf.mxu0
      %v393 = vadd.f32 %v218, %v392
      %394 = vmatmul.bf16.gmra.mxu0 %v242
      %v395 = vpop.f32.mrf.mxu0
      %v396 = vadd.f32 %v218, %v395
      %v397 = vpop.f32.mrf.mxu0
      %v398 = vadd.f32 %v218, %v397
      %399 = vmatmul.bf16.gmra.mxu0 %v243
      %v400 = vpop.f32.mrf.mxu0
      %v401 = vadd.f32 %v218, %v400
      %v402 = vpop.f32.mrf.mxu0
      %v403 = vadd.f32 %v218, %v402
      %404 = vdwg.mxu0
      %405 = vmatpush.bf16.msra.mxu0 %v350
      %406 = vmatpush.bf16.msra.mxu0 %v347
      %407 = vmatpush.bf16.msra.mxu0 %v344
      %408 = vmatpush.bf16.msra.mxu0 %v341
      %409 = vmatpush.bf16.msra.mxu0 %v338
      %410 = vmatpush.bf16.msra.mxu0 %v335
      %411 = vmatpush.bf16.msra.mxu0 %v332
      %412 = vmatpush.bf16.msra.mxu0 %v329
      %413 = vmatmul.bf16.gmra.mxu0 %v240
      %v414 = vpop.f32.mrf.mxu0
      %v415 = vadd.f32 %v219, %v414
      %v416 = vpop.f32.mrf.mxu0
      %v417 = vadd.f32 %v219, %v416
      %418 = vmatmul.bf16.gmra.mxu0 %v241
      %v419 = vpop.f32.mrf.mxu0
      %v420 = vadd.f32 %v219, %v419
      %v421 = vpop.f32.mrf.mxu0
      %v422 = vadd.f32 %v219, %v421
      %423 = vmatmul.bf16.gmra.mxu0 %v242
      %v424 = vpop.f32.mrf.mxu0
      %v425 = vadd.f32 %v219, %v424
      %v426 = vpop.f32.mrf.mxu0
      %v427 = vadd.f32 %v219, %v426
      %428 = vmatmul.bf16.gmra.mxu0 %v243
      %v429 = vpop.f32.mrf.mxu0
      %v430 = vadd.f32 %v219, %v429
      %v431 = vpop.f32.mrf.mxu0
      %v432 = vadd.f32 %v219, %v431
      %433 = vdwg.mxu0
      %434 = vmatpush.bf16.msra.mxu0 %v351
      %435 = vmatpush.bf16.msra.mxu0 %v348
      %436 = vmatpush.bf16.msra.mxu0 %v345
      %437 = vmatpush.bf16.msra.mxu0 %v342
      %438 = vmatpush.bf16.msra.mxu0 %v339
      %439 = vmatpush.bf16.msra.mxu0 %v336
      %440 = vmatpush.bf16.msra.mxu0 %v333
      %441 = vmatpush.bf16.msra.mxu0 %v330
      %442 = vmatmul.bf16.gmra.mxu0 %v240
      %v443 = vpop.f32.mrf.mxu0
      %v444 = vadd.f32 %v220, %v443
      %v445 = vpop.f32.mrf.mxu0
      %v446 = vadd.f32 %v220, %v445
      %447 = vmatmul.bf16.gmra.mxu0 %v241
      %v448 = vpop.f32.mrf.mxu0
      %v449 = vadd.f32 %v220, %v448
      %v450 = vpop.f32.mrf.mxu0
      %v451 = vadd.f32 %v220, %v450
      %452 = vmatmul.bf16.gmra.mxu0 %v242
      %v453 = vpop.f32.mrf.mxu0
      %v454 = vadd.f32 %v220, %v453
      %v455 = vpop.f32.mrf.mxu0
      %v456 = vadd.f32 %v220, %v455
      %457 = vmatmul.bf16.gmra.mxu0 %v243
      %v458 = vpop.f32.mrf.mxu0
      %v459 = vadd.f32 %v220, %v458
      %v460 = vpop.f32.mrf.mxu0
      %v461 = vadd.f32 %v220, %v460
      %462 = vdwg.mxu0
      %463 = vst [vmem:[%s174] sm:$0xff] %v386
      %464 = vst [vmem:[%s174 + $0x8] sm:$0xff] %v415
      %465 = vst [vmem:[%s174 + $0x10] sm:$0xff] %v444
      %466 = vst [vmem:[%s174 + $0x18] sm:$0xff] %v388
      %467 = vst [vmem:[%s174 + $0x20] sm:$0xff] %v417
      %468 = vst [vmem:[%s174 + $0x28] sm:$0xff] %v446
      %469 = vst [vmem:[%s174 + $0x30] sm:$0xff] %v391
      %470 = vst [vmem:[%s174 + $0x38] sm:$0xff] %v420
      %471 = vst [vmem:[%s174 + $0x40] sm:$0xff] %v449
      %472 = vst [vmem:[%s174 + $0x48] sm:$0xff] %v393
      %473 = vst [vmem:[%s174 + $0x50] sm:$0xff] %v422
      %474 = vst [vmem:[%s174 + $0x58] sm:$0xff] %v451
      %475 = vst [vmem:[%s174 + $0x60] sm:$0xff] %v396
      %476 = vst [vmem:[%s174 + $0x68] sm:$0xff] %v425
      %477 = vst [vmem:[%s174 + $0x70] sm:$0xff] %v454
      %478 = vst [vmem:[%s174 + $0x78] sm:$0xff] %v398
      %479 = vst [vmem:[%s174 + $0x80] sm:$0xff] %v427
      %480 = vst [vmem:[%s174 + $0x88] sm:$0xff] %v456
      %481 = vst [vmem:[%s174 + $0x90] sm:$0xff] %v401
      %482 = vst [vmem:[%s174 + $0x98] sm:$0xff] %v430
      %483 = vst [vmem:[%s174 + $0xa0] sm:$0xff] %v459
      %484 = vst [vmem:[%s174 + $0xa8] sm:$0xff] %v403
      %485 = vst [vmem:[%s174 + $0xb0] sm:$0xff] %v432
      %486 = vst [vmem:[%s174 + $0xb8] sm:$0xff] %v461
      %s487 = smul.u32 8, %s14
      %p488 = scmp.lt.s32.totalorder %s487, 15
      %s489 = scalar_select %p488, %s487, 15
      %s490 = smul.addr %s489, 3
      %s491 = smul.addr %s490, 8
      %s492 = scalar_lea.vmem %s3, %s491
      // Predicated region
      $region33: #{seq2seq_forward.5} parent=31 // pred_check
        %p493 = pneg %p100
      $region34: #{seq2seq_forward.5} parent=31 // pred_check_branch
        %495 = sbr.rel (%p493) target = $region36
      $region35: #{seq2seq_forward.5} parent=31 // pred_region
        %s496 = smul.u32 8, %s14
      $region36: #{seq2seq_forward.5} parent=31 // pred_fallthru
        _
    $region32: #{seq2seq_forward.5} parent=5 // pred_fallthru
      _
    %p497 = scmp.le.s32.totalorder 2, %s9
    // Predicated region
    $region37: #{seq2seq_forward.5} parent=5 // pred_check
      %p498 = pneg %p497
    $region38: #{seq2seq_forward.5} parent=5 // pred_check_branch
      %500 = sbr.rel (%p498) target = $region40
    $region39: #{seq2seq_forward.5} parent=5 // pred_region
      %s501 = ssub.s32 %s9, 2
      // Predicated region
      $region41: #{seq2seq_forward.5} parent=39 // pred_check
        %p502 = pneg %p106
      $region42: #{seq2seq_forward.5} parent=39 // pred_check_branch
        %504 = sbr.rel (%p502) target = $region44
      $region43: #{seq2seq_forward.5} parent=39 // pred_region
        %s505 = smul.u32 8, %s15
        %p506 = scmp.lt.s32.totalorder %s505, 15
        %s507 = scalar_select %p506, %s505, 15
        %s508 = smul.addr %s507, 3
        %s509 = smul.addr %s508, 8
        %s510 = scalar_lea.vmem %s3, %s509
      $region44: #{seq2seq_forward.5} parent=39 // pred_fallthru
        _
    $region40: #{seq2seq_forward.5} parent=5 // pred_fallthru
      _
  $region6: #{seq2seq_forward.5} parent=0 // loop_footer
    %s13 = sadd.s32 1, %s9
  $region7: #{seq2seq_forward.5} parent=0 // loop_footer_branch
    %8 = sbr.rel target = $region3
  $region8: #{seq2seq_forward.5} parent=0 // loop_exit
    _

// kernel: seq2seq_forward.7
$region0: #{seq2seq_forward.7}
  #allocation0 [shape = 'u32[]', space=smem, size = 0x4, offset = 0x4, fixed_abs, tag = 'smem constant byte address 0x4 - core index']
  #allocation1 [shape = 'u32[72,128]{1,0:T(1,128)}', space=vmem, size = 0x9000, scoped, tag = 'internal scratch']
  #allocation2 [shape = 'f32[16,128]{1,0:T(8,128)}', space=vmem, size = 0x2000, scoped, tag = 'scratch operand']
  %s0 = inlined_call_operand.vmem [shape: f32[8,16,384], index: 0, kind: input, shape index: {}]
  %s1 = inlined_call_operand.vmem [shape: bf16[128,384], index: 1, kind: input, shape index: {}]
  %s2 = inlined_call_operand.vmem [shape: f32[1,384], index: 2, kind: input, shape index: {}]
  %s3 = inlined_call_operand.vmem [shape: f32[16,128], index: 3, kind: input, shape index: {}]
  %s4 = inlined_call_operand.vmem [shape: f32[8,16,128], index: 4, kind: output, shape index: {0}]
  %s5 = inlined_call_operand.vmem [shape: f32[16,128], index: 5, kind: output, shape index: {1}]
  %6 = xla_tuple %s4, %s5
  %s7 = sld [smem:[#allocation0]]
  $region65: #{seq2seq_forward.7} parent=0
    _
  %s9 = ssub.s32 1, %s7
  %s10 = scalar_select 0, %s9, %s7
  loop: start=0, step=1, limit=4
  $region2: #{seq2seq_forward.7} parent=0 // loop_pre_header
    _
  $region3: #{seq2seq_forward.7} parent=0 // loop_header
    %s12 = sphi 0, %s16
    %p13 = scmp.ge.s32.totalorder %s12, 4
    %s22 = sphi 0, %s24
    %s25 = sphi 0, %s22
    %s26 = sphi 0, %s25
    %s42 = sphi 0, %s26
    %s46 = sphi 0, %s46
    %s48 = sphi 0, %s46
    %s49 = sphi 0, %s48
    %s63 = sphi 0, %s49
    %s67 = sphi 0, %s67
    %s69 = sphi 0, %s67
    %s70 = sphi 0, %s69
    %s84 = sphi 0, %s70
    %s88 = sphi 0, %s88
    %s90 = sphi 0, %s88
    %s91 = sphi 0, %s90
    %s105 = sphi 0, %s91
    %s111 = sphi 0, %s113
    %s114 = sphi 0, %s111
    %s115 = sphi 0, %s114
    %s131 = sphi 0, %s115
    %s135 = sphi 0, %s135
    %s137 = sphi 0, %s135
    %s138 = sphi 0, %s137
    %s152 = sphi 0, %s138
  $region4: #{seq2seq_forward.7} parent=0 // loop_header_branch
    %15 = sbr.rel (%p13) target = $region8
  $region5: #{seq2seq_forward.7} parent=0 // loop_body
    %s17 = ssub.s32 %s12, 1
    %s18 = ssub.s32 %s12, 2
    %s19 = sadd.s32 %s12, 1
    %s20 = ssub.s32 %s12, %s19
    %p21 = scmp.eq.s32.totalorder %s20, 0
    %s23 = sadd.s32 %s22, 1
    %s24 = scalar_select %p21, %s22, %s23
    %p27 = pneg %p21
    %p28 = scmp.eq.s32.totalorder %s12, 1
    %p29 = por %p27, %p28
    %p30 = scmp.ne.s32.totalorder %s22, %s25
    %p31 = scmp.eq.s32.totalorder %s12, 0
    %p32 = por %p30, %p31
    %p33 = scmp.ne.s32.totalorder %s22, %s25
    %p34 = scmp.eq.s32.totalorder %s17, 1
    %p35 = por %p33, %p34
    %p36 = scmp.ne.s32.totalorder %s25, %s26
    %p37 = scmp.eq.s32.totalorder %s17, 0
    %p38 = por %p36, %p37
    %p39 = scmp.ne.s32.totalorder %s25, %s26
    %p40 = scmp.eq.s32.totalorder %s18, 1
    %p41 = por %p39, %p40
    %p43 = scmp.ne.s32.totalorder %s26, %s42
    %p44 = scmp.eq.s32.totalorder %s18, 0
    %p45 = por %p43, %p44
    %s47 = sadd.s32 %s46, 1
    %p50 = scmp.eq.s32.totalorder %s12, 1
    %p51 = scmp.ne.s32.totalorder %s46, %s48
    %p52 = scmp.eq.s32.totalorder %s12, 0
    %p53 = por %p51, %p52
    %p54 = scmp.ne.s32.totalorder %s46, %s48
    %p55 = scmp.eq.s32.totalorder %s17, 1
    %p56 = por %p54, %p55
    %p57 = scmp.ne.s32.totalorder %s48, %s49
    %p58 = scmp.eq.s32.totalorder %s17, 0
    %p59 = por %p57, %p58
    %p60 = scmp.ne.s32.totalorder %s48, %s49
    %p61 = scmp.eq.s32.totalorder %s18, 1
    %p62 = por %p60, %p61
    %p64 = scmp.ne.s32.totalorder %s49, %s63
    %p65 = scmp.eq.s32.totalorder %s18, 0
    %p66 = por %p64, %p65
    %s68 = sadd.s32 %s67, 1
    %p71 = scmp.eq.s32.totalorder %s12, 1
    %p72 = scmp.ne.s32.totalorder %s67, %s69
    %p73 = scmp.eq.s32.totalorder %s12, 0
    %p74 = por %p72, %p73
    %p75 = scmp.ne.s32.totalorder %s67, %s69
    %p76 = scmp.eq.s32.totalorder %s17, 1
    %p77 = por %p75, %p76
    %p78 = scmp.ne.s32.totalorder %s69, %s70
    %p79 = scmp.eq.s32.totalorder %s17, 0
    %p80 = por %p78, %p79
    %p81 = scmp.ne.s32.totalorder %s69, %s70
    %p82 = scmp.eq.s32.totalorder %s18, 1
    %p83 = por %p81, %p82
    %p85 = scmp.ne.s32.totalorder %s70, %s84
    %p86 = scmp.eq.s32.totalorder %s18, 0
    %p87 = por %p85, %p86
    %s89 = sadd.s32 %s88, 1
    %p92 = scmp.eq.s32.totalorder %s12, 1
    %p93 = scmp.ne.s32.totalorder %s88, %s90
    %p94 = scmp.eq.s32.totalorder %s12, 0
    %p95 = por %p93, %p94
    %p96 = scmp.ne.s32.totalorder %s88, %s90
    %p97 = scmp.eq.s32.totalorder %s17, 1
    %p98 = por %p96, %p97
    %p99 = scmp.ne.s32.totalorder %s90, %s91
    %p100 = scmp.eq.s32.totalorder %s17, 0
    %p101 = por %p99, %p100
    %p102 = scmp.ne.s32.totalorder %s90, %s91
    %p103 = scmp.eq.s32.totalorder %s18, 1
    %p104 = por %p102, %p103
    %p106 = scmp.ne.s32.totalorder %s91, %s105
    %p107 = scmp.eq.s32.totalorder %s18, 0
    %p108 = por %p106, %p107
    %s109 = ssub.s32 %s12, %s19
    %p110 = scmp.eq.s32.totalorder %s109, 0
    %s112 = sadd.s32 %s111, 1
    %s113 = scalar_select %p110, %s111, %s112
    %p116 = pneg %p110
    %p117 = scmp.eq.s32.totalorder %s12, 1
    %p118 = por %p116, %p117
    %p119 = scmp.ne.s32.totalorder %s111, %s114
    %p120 = scmp.eq.s32.totalorder %s12, 0
    %p121 = por %p119, %p120
    %p122 = scmp.ne.s32.totalorder %s111, %s114
    %p123 = scmp.eq.s32.totalorder %s17, 1
    %p124 = por %p122, %p123
    %p125 = scmp.ne.s32.totalorder %s114, %s115
    %p126 = scmp.eq.s32.totalorder %s17, 0
    %p127 = por %p125, %p126
    %p128 = scmp.ne.s32.totalorder %s114, %s115
    %p129 = scmp.eq.s32.totalorder %s18, 1
    %p130 = por %p128, %p129
    %p132 = scmp.ne.s32.totalorder %s115, %s131
    %p133 = scmp.eq.s32.totalorder %s18, 0
    %p134 = por %p132, %p133
    %s136 = sadd.s32 %s135, 1
    %p139 = scmp.eq.s32.totalorder %s12, 1
    %p140 = scmp.ne.s32.totalorder %s135, %s137
    %p141 = scmp.eq.s32.totalorder %s12, 0
    %p142 = por %p140, %p141
    %p143 = scmp.ne.s32.totalorder %s135, %s137
    %p144 = scmp.eq.s32.totalorder %s17, 1
    %p145 = por %p143, %p144
    %p146 = scmp.ne.s32.totalorder %s137, %s138
    %p147 = scmp.eq.s32.totalorder %s17, 0
    %p148 = por %p146, %p147
    %p149 = scmp.ne.s32.totalorder %s137, %s138
    %p150 = scmp.eq.s32.totalorder %s18, 1
    %p151 = por %p149, %p150
    %p153 = scmp.ne.s32.totalorder %s138, %s152
    %p154 = scmp.eq.s32.totalorder %s18, 0
    %p155 = por %p153, %p154
    %p156 = scmp.le.s32.totalorder 1, %s12
    %p157 = scmp.lt.s32.totalorder %s12, 3
    %p158 = pnand %p156, %p157
    %p159 = pneg %p158
    // Predicated region
    $region9: #{seq2seq_forward.7} parent=5 // pred_check
      _
    $region10: #{seq2seq_forward.7} parent=5 // pred_check_branch
      %161 = sbr.rel (%p158) target = $region12
    $region11: #{seq2seq_forward.7} parent=5 // pred_region
      %s162 = ssub.s32 %s12, 1
      // Predicated region
      $region13: #{seq2seq_forward.7} parent=11 // pred_check
        %p163 = pneg %p59
      $region14: #{seq2seq_forward.7} parent=11 // pred_check_branch
        %165 = sbr.rel (%p163) target = $region16
      $region15: #{seq2seq_forward.7} parent=11 // pred_region
        _
      $region16: #{seq2seq_forward.7} parent=11 // pred_fallthru
        _
      // Predicated region
      $region17: #{seq2seq_forward.7} parent=11 // pred_check
        %p166 = pneg %p80
      $region18: #{seq2seq_forward.7} parent=11 // pred_check_branch
        %168 = sbr.rel (%p166) target = $region20
      $region19: #{seq2seq_forward.7} parent=11 // pred_region
        _
      $region20: #{seq2seq_forward.7} parent=11 // pred_fallthru
        _
      // Predicated region
      $region21: #{seq2seq_forward.7} parent=11 // pred_check
        %p169 = pneg %p101
      $region22: #{seq2seq_forward.7} parent=11 // pred_check_branch
        %171 = sbr.rel (%p169) target = $region24
      $region23: #{seq2seq_forward.7} parent=11 // pred_region
        _
      $region24: #{seq2seq_forward.7} parent=11 // pred_fallthru
        _
    $region12: #{seq2seq_forward.7} parent=5 // pred_fallthru
      _
    %p172 = scmp.lt.s32.totalorder %s12, 2
    // Predicated region
    $region25: #{seq2seq_forward.7} parent=5 // pred_check
      %p173 = pneg %p172
    $region26: #{seq2seq_forward.7} parent=5 // pred_check_branch
      %175 = sbr.rel (%p173) target = $region28
    $region27: #{seq2seq_forward.7} parent=5 // pred_region
      // Predicated region
      $region29: #{seq2seq_forward.7} parent=27 // pred_check
        %p176 = pneg %p32
      $region30: #{seq2seq_forward.7} parent=27 // pred_check_branch
        %178 = sbr.rel (%p176) target = $region32
      $region31: #{seq2seq_forward.7} parent=27 // pred_region
        %s179 = smul.u32 4, %s12
        %p180 = scmp.lt.s32.totalorder %s179, 7
        %s181 = scalar_select %p180, %s179, 7
        %s182 = smul.addr %s181, 6
        %s183 = smul.addr %s182, 8
        %s184 = scalar_lea.vmem %s0, %s183
        %s185 = smul.u32 4, %s12
      $region32: #{seq2seq_forward.7} parent=27 // pred_fallthru
        _
    $region28: #{seq2seq_forward.7} parent=5 // pred_fallthru
      _
    %p186 = scmp.le.s32.totalorder 1, %s12
    %p187 = scmp.lt.s32.totalorder %s12, 3
    %p188 = pnand %p186, %p187
    %p189 = pneg %p188
    // Predicated region
    $region33: #{seq2seq_forward.7} parent=5 // pred_check
      _
    $region34: #{seq2seq_forward.7} parent=5 // pred_check_branch
      %191 = sbr.rel (%p188) target = $region36
    $region35: #{seq2seq_forward.7} parent=5 // pred_region
      %s192 = ssub.s32 %s12, 1
      %s193 = smul.u32 4, %s17
      %p194 = scmp.lt.s32.totalorder %s193, 7
      %s195 = scalar_select %p194, %s193, 7
      %s196 = smul.addr %s195, 6
      %s197 = smul.addr %s196, 8
      %s198 = scalar_lea.vmem %s0, %s197
      %p199 = pneg %p38
      %p200 = pneg %p35
      %p201 = pneg %p59
      %p202 = pneg %p56
      %p203 = pneg %p80
      %p204 = pneg %p77
      %p205 = pneg %p101
      %p206 = pneg %p98
      %p207 = pneg %p127
      %p208 = pneg %p124
      %s209 = smul.u32 4, %s17
      %p210 = scmp.lt.s32.totalorder %s209, 7
      %s211 = scalar_select %p210, %s209, 7
      %s212 = smul.addr %s211, 2
      %s213 = smul.addr %s212, 8
      %s214 = scalar_lea.vmem %s4, %s213
      %p215 = pneg %p148
      %p216 = pneg %p145
      %s217 = smul.u32 4, %s17
      %p218 = scmp.lt.s32.totalorder %s217, 7
      %s219 = scalar_select %p218, %s217, 7
      %s220 = smul.addr %s219, 6
      %s221 = smul.addr %s220, 8
      %s222 = scalar_lea.vmem %s0, %s221
      %s223 = smul.u32 4, %s17
      %s224 = smul.u32 4, %s17
      %p225 = scmp.lt.s32.totalorder %s224, 7
      %s226 = scalar_select %p225, %s224, 7
      %s227 = smul.addr %s226, 2
      %s228 = smul.addr %s227, 8
      %s229 = scalar_lea.vmem %s4, %s228
      %s230 = smul.u32 4, %s17
      %p231 = scmp.eq.s32.totalorder %s17, 0
      // Predicated region
      $region37: #{seq2seq_forward.7} parent=35 // pred_check
        %p232 = pneg %p231
      $region38: #{seq2seq_forward.7} parent=35 // pred_check_branch
        %234 = sbr.rel (%p232) target = $region40
      $region39: #{seq2seq_forward.7} parent=35 // pred_region
        %v235 = vld [vmem:[%s3] sm:$0xff]
        %v236 = vld [vmem:[%s3 + $0x8] sm:$0xff]
        %237 = vst [vmem:[#allocation2] sm:$0xff] %v235
        %238 = vst [vmem:[#allocation2 + $0x8] sm:$0xff] %v236
      $region40: #{seq2seq_forward.7} parent=35 // pred_fallthru
        _
      %v239 = vld [vmem:[%s1] sm:$0xff]
      %v240 = vld [vmem:[%s1 + $0x8] sm:$0xf]
      %v241 = vld [vmem:[%s1 + $0xc] sm:$0xff]
      %v242 = vld [vmem:[%s1 + $0x14] sm:$0xf]
      %v243 = vld [vmem:[%s1 + $0x18] sm:$0xff]
      %v244 = vld [vmem:[%s1 + $0x20] sm:$0xf]
      %v245 = vld [vmem:[%s1 + $0x24] sm:$0xff]
      %v246 = vld [vmem:[%s1 + $0x2c] sm:$0xf]
      %v247 = vld [vmem:[%s1 + $0x30] sm:$0xff]
      %v248 = vld [vmem:[%s1 + $0x38] sm:$0xf]
      %v249 = vld [vmem:[%s1 + $0x3c] sm:$0xff]
      %v250 = vld [vmem:[%s1 + $0x44] sm:$0xf]
      %v251 = vld [vmem:[%s1 + $0x48] sm:$0xff]
      %v252 = vld [vmem:[%s1 + $0x50] sm:$0xf]
      %v253 = vld [vmem:[%s1 + $0x54] sm:$0xff]
      %v254 = vld [vmem:[%s1 + $0x5c] sm:$0xf]
      %v255 = vld [vmem:[%s1 + $0x60] sm:$0xff]
      %v256 = vld [vmem:[%s1 + $0x68] sm:$0xf]
      %v257 = vld [vmem:[%s1 + $0x6c] sm:$0xff]
      %v258 = vld [vmem:[%s1 + $0x74] sm:$0xf]
      %v259 = vld [vmem:[%s1 + $0x78] sm:$0xff]
      %v260 = vld [vmem:[%s1 + $0x80] sm:$0xf]
      %v261 = vld [vmem:[%s1 + $0x84] sm:$0xff]
      %v262 = vld [vmem:[%s1 + $0x8c] sm:$0xf]
      %v263 = vld [vmem:[%s1 + $0x90] sm:$0xff]
      %v264 = vld [vmem:[%s1 + $0x98] sm:$0xf]
      %v265 = vld [vmem:[%s1 + $0x9c] sm:$0xff]
      %v266 = vld [vmem:[%s1 + $0xa4] sm:$0xf]
      %v267 = vld [vmem:[%s1 + $0xa8] sm:$0xff]
      %v268 = vld [vmem:[%s1 + $0xb0] sm:$0xf]
      %v269 = vld [vmem:[%s1 + $0xb4] sm:$0xff]
      %v270 = vld [vmem:[%s1 + $0xbc] sm:$0xf]
      %v271 = vld [vmem:[%s2] sm:$0x7]
      %v273 = vperm.slane %v271, 0
      %v274 = vperm.slane %v271, 1
      %v275 = vperm.slane %v271, 2
      %v279 = vld [vmem:[#allocation2] sm:$0xff]
      %v280 = vld [vmem:[#allocation2 + $0x8] sm:$0xff]
      %v281 = vld [vmem:[%s222] sm:$0xff]
      %v282 = vld [vmem:[%s222 + $0x8] sm:$0xff]
      %v283 = vld [vmem:[%s222 + $0x10] sm:$0xff]
      %v284 = vld [vmem:[%s222 + $0x18] sm:$0xff]
      %v285 = vld [vmem:[%s222 + $0x20] sm:$0xff]
      %v286 = vld [vmem:[%s222 + $0x28] sm:$0xff]
      %v287 = vpack.c.bf16 %v280, %v279
      %v320 = vunpack.c.l.b16 %v239
      %v321 = vunpack.c.h.b16 %v239
      %v322 = vunpack.c.l.b16 %v240
      %v323 = vunpack.c.l.b16 %v241
      %v324 = vunpack.c.h.b16 %v241
      %v325 = vunpack.c.l.b16 %v242
      %v326 = vunpack.c.l.b16 %v243
      %v327 = vunpack.c.h.b16 %v243
      %v328 = vunpack.c.l.b16 %v244
      %v329 = vunpack.c.l.b16 %v245
      %v330 = vunpack.c.h.b16 %v245
      %v331 = vunpack.c.l.b16 %v246
      %v332 = vunpack.c.l.b16 %v247
      %v333 = vunpack.c.h.b16 %v247
      %v334 = vunpack.c.l.b16 %v248
      %v335 = vunpack.c.l.b16 %v249
      %v336 = vunpack.c.h.b16 %v249
      %v337 = vunpack.c.l.b16 %v250
      %v338 = vunpack.c.l.b16 %v251
      %v339 = vunpack.c.h.b16 %v251
      %v340 = vunpack.c.l.b16 %v252
      %v341 = vunpack.c.l.b16 %v253
      %v342 = vunpack.c.h.b16 %v253
      %v343 = vunpack.c.l.b16 %v254
      %v344 = vunpack.c.l.b16 %v255
      %v345 = vunpack.c.h.b16 %v255
      %v346 = vunpack.c.l.b16 %v256
      %v347 = vunpack.c.l.b16 %v257
      %v348 = vunpack.c.h.b16 %v257
      %v349 = vunpack.c.l.b16 %v258
      %v350 = vunpack.c.l.b16 %v259
      %v351 = vunpack.c.h.b16 %v259
      %v352 = vunpack.c.l.b16 %v260
      %v353 = vunpack.c.l.b16 %v261
      %v354 = vunpack.c.h.b16 %v261
      %v355 = vunpack.c.l.b16 %v262
      %v356 = vunpack.c.l.b16 %v263
      %v357 = vunpack.c.h.b16 %v263
      %v358 = vunpack.c.l.b16 %v264
      %v359 = vunpack.c.l.b16 %v265
      %v360 = vunpack.c.h.b16 %v265
      %v361 = vunpack.c.l.b16 %v266
      %v362 = vunpack.c.l.b16 %v267
      %v363 = vunpack.c.h.b16 %v267
      %v364 = vunpack.c.l.b16 %v268
      %v365 = vunpack.c.l.b16 %v269
      %v366 = vunpack.c.h.b16 %v269
      %v367 = vunpack.c.l.b16 %v270
      %v368 = vpack.c.b16 %v323, %v320
      %v369 = vpack.c.b16 %v324, %v321
      %v370 = vpack.c.b16 %v325, %v322
      %v371 = vpack.c.b16 %v329, %v326
      %v372 = vpack.c.b16 %v330, %v327
      %v373 = vpack.c.b16 %v331, %v328
      %v374 = vpack.c.b16 %v335, %v332
      %v375 = vpack.c.b16 %v336, %v333
      %v376 = vpack.c.b16 %v337, %v334
      %v377 = vpack.c.b16 %v341, %v338
      %v378 = vpack.c.b16 %v342, %v339
      %v379 = vpack.c.b16 %v343, %v340
      %v380 = vpack.c.b16 %v347, %v344
      %v381 = vpack.c.b16 %v348, %v345
      %v382 = vpack.c.b16 %v349, %v346
      %v383 = vpack.c.b16 %v353, %v350
      %v384 = vpack.c.b16 %v354, %v351
      %v385 = vpack.c.b16 %v355, %v352
      %v386 = vpack.c.b16 %v359, %v356
      %v387 = vpack.c.b16 %v360, %v357
      %v388 = vpack.c.b16 %v361, %v358
      %v389 = vpack.c.b16 %v365, %v362
      %v390 = vpack.c.b16 %v366, %v363
      %v391 = vpack.c.b16 %v367, %v364
      %416 = vmatpush.bf16.msra.mxu0 %v389
      %417 = vmatpush.bf16.msra.mxu0 %v386
      %418 = vmatpush.bf16.msra.mxu0 %v383
      %419 = vmatpush.bf16.msra.mxu0 %v380
      %420 = vmatpush.bf16.msra.mxu0 %v377
      %421 = vmatpush.bf16.msra.mxu0 %v374
      %422 = vmatpush.bf16.msra.mxu0 %v371
      %423 = vmatpush.bf16.msra.mxu0 %v368
      %424 = vmatmul.bf16.gmra.mxu0 %v287
      %v425 = vpop.f32.mrf.mxu0
      %v426 = vadd.f32 %v273, %v425
      %v427 = vpop.f32.mrf.mxu0
      %v428 = vadd.f32 %v273, %v427
      %429 = vdwg.mxu0
      %430 = vmatpush.bf16.msra.mxu0 %v390
      %431 = vmatpush.bf16.msra.mxu0 %v387
      %432 = vmatpush.bf16.msra.mxu0 %v384
      %433 = vmatpush.bf16.msra.mxu0 %v381
      %434 = vmatpush.bf16.msra.mxu0 %v378
      %435 = vmatpush.bf16.msra.mxu0 %v375
      %436 = vmatpush.bf16.msra.mxu0 %v372
      %437 = vmatpush.bf16.msra.mxu0 %v369
      %438 = vmatmul.bf16.gmra.mxu0 %v287
      %v439 = vpop.f32.mrf.mxu0
      %v440 = vadd.f32 %v274, %v439
      %v441 = vpop.f32.mrf.mxu0
      %v442 = vadd.f32 %v274, %v441
      %443 = vdwg.mxu0
      %444 = vmatpush.bf16.msra.mxu0 %v391
      %445 = vmatpush.bf16.msra.mxu0 %v388
      %446 = vmatpush.bf16.msra.mxu0 %v385
      %447 = vmatpush.bf16.msra.mxu0 %v382
      %448 = vmatpush.bf16.msra.mxu0 %v379
      %449 = vmatpush.bf16.msra.mxu0 %v376
      %450 = vmatpush.bf16.msra.mxu0 %v373
      %451 = vmatpush.bf16.msra.mxu0 %v370
      %452 = vmatmul.bf16.gmra.mxu0 %v287
      %v453 = vpop.f32.mrf.mxu0
      %v454 = vadd.f32 %v275, %v453
      %v455 = vpop.f32.mrf.mxu0
      %v456 = vadd.f32 %v275, %v455
      %457 = vdwg.mxu0
      %v458 = vadd.f32 %v281, %v426
      %v459 = vadd.f32 %v284, %v428
      %v460 = vxor.u32 %v458, 2147483648
      %v461 = vxor.u32 %v459, 2147483648
      %v462 = vmul.f32 %v460, 1.442695
      %v463 = vpow.pop %v462
      %v464 = vmul.f32 %v461, 1.442695
      %v465 = vpow.pop %v464
      %v466 = vadd.f32 %v463, 1.0
      %v467 = vadd.f32 %v465, 1.0
      %v468 = vrcp.pop %v466
      %v469 = vmul.f32 %v466, %v468
      %v470 = vsub.f32 1.0, %v469
      %v471 = vmul.f32 %v468, %v470
      %v472 = vadd.f32 %v468, %v471
      %vm473 = vweird.f32 %v466
      %vm474 = vweird.f32 %v468
      %vm475 = vmor %vm473, %vm474
      %v476 = vsel %vm475, %v468, %v472
      %v477 = vand.u32 2147483647, %v466
      %vm478 = vcmp.eq.f32.partialorder %v477, 8.507059e+37
      %v479 = vand.u32 %v466, 2147483648
      %v480 = vor.u32 1.1754944e-38, %v479
      %v481 = vsel %vm478, %v480, %v476
      %v482 = vmul.f32 1.0, %v481
      %v483 = vrcp.pop %v467
      %v484 = vmul.f32 %v467, %v483
      %v485 = vsub.f32 1.0, %v484
      %v486 = vmul.f32 %v483, %v485
      %v487 = vadd.f32 %v483, %v486
      %vm488 = vweird.f32 %v467
      %vm489 = vweird.f32 %v483
      %vm490 = vmor %vm488, %vm489
      %v491 = vsel %vm490, %v483, %v487
      %v492 = vand.u32 2147483647, %v467
      %vm493 = vcmp.eq.f32.partialorder %v492, 8.507059e+37
      %v494 = vand.u32 %v467, 2147483648
      %v495 = vor.u32 1.1754944e-38, %v494
      %v496 = vsel %vm493, %v495, %v491
      %v497 = vmul.f32 1.0, %v496
      %v498 = vadd.f32 %v282, %v440
      %v499 = vadd.f32 %v285, %v442
      %v500 = vxor.u32 %v498, 2147483648
      %v501 = vxor.u32 %v499, 2147483648
      %v502 = vmul.f32 %v500, 1.442695
      %v503 = vpow.pop %v502
      %v504 = vmul.f32 %v501, 1.442695
      %v505 = vpow.pop %v504
      %v506 = vadd.f32 %v503, 1.0
      %v507 = vadd.f32 %v505, 1.0
      %v508 = vrcp.pop %v506
      %v509 = vmul.f32 %v506, %v508
      %v510 = vsub.f32 1.0, %v509
      %v511 = vmul.f32 %v508, %v510
      %v512 = vadd.f32 %v508, %v511
      %vm513 = vweird.f32 %v506
      %vm514 = vweird.f32 %v508
      %vm515 = vmor %vm513, %vm514
      %v516 = vsel %vm515, %v508, %v512
      %v517 = vand.u32 2147483647, %v506
      %vm518 = vcmp.eq.f32.partialorder %v517, 8.507059e+37
      %v519 = vand.u32 %v506, 2147483648
      %v520 = vor.u32 1.1754944e-38, %v519
      %v521 = vsel %vm518, %v520, %v516
      %v522 = vmul.f32 1.0, %v521
      %v523 = vrcp.pop %v507
      %v524 = vmul.f32 %v507, %v523
      %v525 = vsub.f32 1.0, %v524
      %v526 = vmul.f32 %v523, %v525
      %v527 = vadd.f32 %v523, %v526
      %vm528 = vweird.f32 %v507
      %vm529 = vweird.f32 %v523
      %vm530 = vmor %vm528, %vm529
      %v531 = vsel %vm530, %v523, %v527
      %v532 = vand.u32 2147483647, %v507
      %vm533 = vcmp.eq.f32.partialorder %v532, 8.507059e+37
      %v534 = vand.u32 %v507, 2147483648
      %v535 = vor.u32 1.1754944e-38, %v534
      %v536 = vsel %vm533, %v535, %v531
      %v537 = vmul.f32 1.0, %v536
      %v538 = vmul.f32 %v482, %v454
      %v539 = vmul.f32 %v497, %v456
      %v540 = vadd.f32 %v283, %v538
      %v541 = vadd.f32 %v286, %v539
      %v542 = vtanh.pop %v540
      %v543 = vtanh.pop %v541
      %v544 = vsub.f32 %v279, %v542
      %v545 = vsub.f32 %v280, %v543
      %v546 = vmul.f32 %v522, %v544
      %v547 = vmul.f32 %v537, %v545
      %v548 = vadd.f32 %v542, %v546
      %v549 = vadd.f32 %v543, %v547
      %550 = vst [vmem:[%s229] sm:$0xff] %v548
      %551 = vst [vmem:[%s229 + $0x8] sm:$0xff] %v549
      %s552 = scalar_lea.vmem %s222, 48
      %v553 = vld [vmem:[%s552] sm:$0xff]
      %v554 = vld [vmem:[%s552 + $0x8] sm:$0xff]
      %v555 = vld [vmem:[%s552 + $0x10] sm:$0xff]
      %v556 = vld [vmem:[%s552 + $0x18] sm:$0xff]
      %v557 = vld [vmem:[%s552 + $0x20] sm:$0xff]
      %v558 = vld [vmem:[%s552 + $0x28] sm:$0xff]
      %v559 = vpack.c.bf16 %v549, %v548
      %560 = vmatpush.bf16.msra.mxu0 %v389
      %561 = vmatpush.bf16.msra.mxu0 %v386
      %562 = vmatpush.bf16.msra.mxu0 %v383
      %563 = vmatpush.bf16.msra.mxu0 %v380
      %564 = vmatpush.bf16.msra.mxu0 %v377
      %565 = vmatpush.bf16.msra.mxu0 %v374
      %566 = vmatpush.bf16.msra.mxu0 %v371
      %567 = vmatpush.bf16.msra.mxu0 %v368
      %568 = vmatmul.bf16.gmra.mxu0 %v559
      %v569 = vpop.f32.mrf.mxu0
      %v570 = vadd.f32 %v273, %v569
      %v571 = vpop.f32.mrf.mxu0
      %v572 = vadd.f32 %v273, %v571
      %573 = vdwg.mxu0
      %574 = vmatpush.bf16.msra.mxu0 %v390
      %575 = vmatpush.bf16.msra.mxu0 %v387
      %576 = vmatpush.bf16.msra.mxu0 %v384
      %577 = vmatpush.bf16.msra.mxu0 %v381
      %578 = vmatpush.bf16.msra.mxu0 %v378
      %579 = vmatpush.bf16.msra.mxu0 %v375
      %580 = vmatpush.bf16.msra.mxu0 %v372
      %581 = vmatpush.bf16.msra.mxu0 %v369
      %582 = vmatmul.bf16.gmra.mxu0 %v559
      %v583 = vpop.f32.mrf.mxu0
      %v584 = vadd.f32 %v274, %v583
      %v585 = vpop.f32.mrf.mxu0
      %v586 = vadd.f32 %v274, %v585
      %587 = vdwg.mxu0
      %588 = vmatpush.bf16.msra.mxu0 %v391
      %589 = vmatpush.bf16.msra.mxu0 %v388
      %590 = vmatpush.bf16.msra.mxu0 %v385
      %591 = vmatpush.bf16.msra.mxu0 %v382
      %592 = vmatpush.bf16.msra.mxu0 %v379
      %593 = vmatpush.bf16.msra.mxu0 %v376
      %594 = vmatpush.bf16.msra.mxu0 %v373
      %595 = vmatpush.bf16.msra.mxu0 %v370
      %596 = vmatmul.bf16.gmra.mxu0 %v559
      %v597 = vpop.f32.mrf.mxu0
      %v598 = vadd.f32 %v275, %v597
      %v599 = vpop.f32.mrf.mxu0
      %v600 = vadd.f32 %v275, %v599
      %601 = vdwg.mxu0
      %v602 = vadd.f32 %v553, %v570
      %v603 = vadd.f32 %v556, %v572
      %v604 = vxor.u32 %v602, 2147483648
      %v605 = vxor.u32 %v603, 2147483648
      %v606 = vmul.f32 %v604, 1.442695
      %v607 = vpow.pop %v606
      %v608 = vmul.f32 %v605, 1.442695
      %v609 = vpow.pop %v608
      %v610 = vadd.f32 %v607, 1.0
      %v611 = vadd.f32 %v609, 1.0
      %v612 = vrcp.pop %v610
      %v613 = vmul.f32 %v610, %v612
      %v614 = vsub.f32 1.0, %v613
      %v615 = vmul.f32 %v612, %v614
      %v616 = vadd.f32 %v612, %v615
      %vm617 = vweird.f32 %v610
      %vm618 = vweird.f32 %v612
      %vm619 = vmor %vm617, %vm618
      %v620 = vsel %vm619, %v612, %v616
      %v621 = vand.u32 2147483647, %v610
      %vm622 = vcmp.eq.f32.partialorder %v621, 8.507059e+37
      %v623 = vand.u32 %v610, 2147483648
      %v624 = vor.u32 1.1754944e-38, %v623
      %v625 = vsel %vm622, %v624, %v620
      %v626 = vmul.f32 1.0, %v625
      %v627 = vrcp.pop %v611
      %v628 = vmul.f32 %v611, %v627
      %v629 = vsub.f32 1.0, %v628
      %v630 = vmul.f32 %v627, %v629
      %v631 = vadd.f32 %v627, %v630
      %vm632 = vweird.f32 %v611
      %vm633 = vweird.f32 %v627
      %vm634 = vmor %vm632, %vm633
      %v635 = vsel %vm634, %v627, %v631
      %v636 = vand.u32 2147483647, %v611
      %vm637 = vcmp.eq.f32.partialorder %v636, 8.507059e+37
      %v638 = vand.u32 %v611, 2147483648
      %v639 = vor.u32 1.1754944e-38, %v638
      %v640 = vsel %vm637, %v639, %v635
      %v641 = vmul.f32 1.0, %v640
      %v642 = vadd.f32 %v554, %v584
      %v643 = vadd.f32 %v557, %v586
      %v644 = vxor.u32 %v642, 2147483648
      %v645 = vxor.u32 %v643, 2147483648
      %v646 = vmul.f32 %v644, 1.442695
      %v647 = vpow.pop %v646
      %v648 = vmul.f32 %v645, 1.442695
      %v649 = vpow.pop %v648
      %v650 = vadd.f32 %v647, 1.0
      %v651 = vadd.f32 %v649, 1.0
      %v652 = vrcp.pop %v650
      %v653 = vmul.f32 %v650, %v652
      %v654 = vsub.f32 1.0, %v653
      %v655 = vmul.f32 %v652, %v654
      %v656 = vadd.f32 %v652, %v655
      %vm657 = vweird.f32 %v650
      %vm658 = vweird.f32 %v652
      %vm659 = vmor %vm657, %vm658
      %v660 = vsel %vm659, %v652, %v656
      %v661 = vand.u32 2147483647, %v650
      %vm662 = vcmp.eq.f32.partialorder %v661, 8.507059e+37
      %v663 = vand.u32 %v650, 2147483648
      %v664 = vor.u32 1.1754944e-38, %v663
      %v665 = vsel %vm662, %v664, %v660
      %v666 = vmul.f32 1.0, %v665
      %v667 = vrcp.pop %v651
      %v668 = vmul.f32 %v651, %v667
      %v669 = vsub.f32 1.0, %v668
      %v670 = vmul.f32 %v667, %v669
      %v671 = vadd.f32 %v667, %v670
      %vm672 = vweird.f32 %v651
      %vm673 = vweird.f32 %v667
      %vm674 = vmor %vm672, %vm673
      %v675 = vsel %vm674, %v667, %v671
      %v676 = vand.u32 2147483647, %v651
      %vm677 = vcmp.eq.f32.partialorder %v676, 8.507059e+37
      %v678 = vand.u32 %v651, 2147483648
      %v679 = vor.u32 1.1754944e-38, %v678
      %v680 = vsel %vm677, %v679, %v675
      %v681 = vmul.f32 1.0, %v680
      %v682 = vmul.f32 %v626, %v598
      %v683 = vmul.f32 %v641, %v600
      %v684 = vadd.f32 %v555, %v682
      %v685 = vadd.f32 %v558, %v683
      %v686 = vtanh.pop %v684
      %v687 = vtanh.pop %v685
      %v688 = vsub.f32 %v548, %v686
      %v689 = vsub.f32 %v549, %v687
      %v690 = vmul.f32 %v666, %v688
      %v691 = vmul.f32 %v681, %v689
      %v692 = vadd.f32 %v686, %v690
      %v693 = vadd.f32 %v687, %v691
      %s694 = scalar_lea.vmem %s229, 16
      %695 = vst [vmem:[%s694] sm:$0xff] %v692
      %696 = vst [vmem:[%s694 + $0x8] sm:$0xff] %v693
      %s697 = scalar_lea.vmem %s222, 96
      %v698 = vld [vmem:[%s697] sm:$0xff]
      %v699 = vld [vmem:[%s697 + $0x8] sm:$0xff]
      %v700 = vld [vmem:[%s697 + $0x10] sm:$0xff]
      %v701 = vld [vmem:[%s697 + $0x18] sm:$0xff]
      %v702 = vld [vmem:[%s697 + $0x20] sm:$0xff]
      %v703 = vld [vmem:[%s697 + $0x28] sm:$0xff]
      %v704 = vpack.c.bf16 %v693, %v692
      %705 = vmatpush.bf16.msra.mxu0 %v389
      %706 = vmatpush.bf16.msra.mxu0 %v386
      %707 = vmatpush.bf16.msra.mxu0 %v383
      %708 = vmatpush.bf16.msra.mxu0 %v380
      %709 = vmatpush.bf16.msra.mxu0 %v377
      %710 = vmatpush.bf16.msra.mxu0 %v374
      %711 = vmatpush.bf16.msra.mxu0 %v371
      %712 = vmatpush.bf16.msra.mxu0 %v368
      %713 = vmatmul.bf16.gmra.mxu0 %v704
      %v714 = vpop.f32.mrf.mxu0
      %v715 = vadd.f32 %v273, %v714
      %v716 = vpop.f32.mrf.mxu0
      %v717 = vadd.f32 %v273, %v716
      %718 = vdwg.mxu0
      %719 = vmatpush.bf16.msra.mxu0 %v390
      %720 = vmatpush.bf16.msra.mxu0 %v387
      %721 = vmatpush.bf16.msra.mxu0 %v384
      %722 = vmatpush.bf16.msra.mxu0 %v381
      %723 = vmatpush.bf16.msra.mxu0 %v378
      %724 = vmatpush.bf16.msra.mxu0 %v375
      %725 = vmatpush.bf16.msra.mxu0 %v372
      %726 = vmatpush.bf16.msra.mxu0 %v369
      %727 = vmatmul.bf16.gmra.mxu0 %v704
      %v728 = vpop.f32.mrf.mxu0
      %v729 = vadd.f32 %v274, %v728
      %v730 = vpop.f32.mrf.mxu0
      %v731 = vadd.f32 %v274, %v730
      %732 = vdwg.mxu0
      %733 = vmatpush.bf16.msra.mxu0 %v391
      %734 = vmatpush.bf16.msra.mxu0 %v388
      %735 = vmatpush.bf16.msra.mxu0 %v385
      %736 = vmatpush.bf16.msra.mxu0 %v382
      %737 = vmatpush.bf16.msra.mxu0 %v379
      %738 = vmatpush.bf16.msra.mxu0 %v376
      %739 = vmatpush.bf16.msra.mxu0 %v373
      %740 = vmatpush.bf16.msra.mxu0 %v370
      %741 = vmatmul.bf16.gmra.mxu0 %v704
      %v742 = vpop.f32.mrf.mxu0
      %v743 = vadd.f32 %v275, %v742
      %v744 = vpop.f32.mrf.mxu0
      %v745 = vadd.f32 %v275, %v744
      %746 = vdwg.mxu0
      %v747 = vadd.f32 %v698, %v715
      %v748 = vadd.f32 %v701, %v717
      %v749 = vxor.u32 %v747, 2147483648
      %v750 = vxor.u32 %v748, 2147483648
      %v751 = vmul.f32 %v749, 1.442695
      %v752 = vpow.pop %v751
      %v753 = vmul.f32 %v750, 1.442695
      %v754 = vpow.pop %v753
      %v755 = vadd.f32 %v752, 1.0
      %v756 = vadd.f32 %v754, 1.0
      %v757 = vrcp.pop %v755
      %v758 = vmul.f32 %v755, %v757
      %v759 = vsub.f32 1.0, %v758
      %v760 = vmul.f32 %v757, %v759
      %v761 = vadd.f32 %v757, %v760
      %vm762 = vweird.f32 %v755
      %vm763 = vweird.f32 %v757
      %vm764 = vmor %vm762, %vm763
      %v765 = vsel %vm764, %v757, %v761
      %v766 = vand.u32 2147483647, %v755
      %vm767 = vcmp.eq.f32.partialorder %v766, 8.507059e+37
      %v768 = vand.u32 %v755, 2147483648
      %v769 = vor.u32 1.1754944e-38, %v768
      %v770 = vsel %vm767, %v769, %v765
      %v771 = vmul.f32 1.0, %v770
      %v772 = vrcp.pop %v756
      %v773 = vmul.f32 %v756, %v772
      %v774 = vsub.f32 1.0, %v773
      %v775 = vmul.f32 %v772, %v774
      %v776 = vadd.f32 %v772, %v775
      %vm777 = vweird.f32 %v756
      %vm778 = vweird.f32 %v772
      %vm779 = vmor %vm777, %vm778
      %v780 = vsel %vm779, %v772, %v776
      %v781 = vand.u32 2147483647, %v756
      %vm782 = vcmp.eq.f32.partialorder %v781, 8.507059e+37
      %v783 = vand.u32 %v756, 2147483648
      %v784 = vor.u32 1.1754944e-38, %v783
      %v785 = vsel %vm782, %v784, %v780
      %v786 = vmul.f32 1.0, %v785
      %v787 = vadd.f32 %v699, %v729
      %v788 = vadd.f32 %v702, %v731
      %v789 = vxor.u32 %v787, 2147483648
      %v790 = vxor.u32 %v788, 2147483648
      %v791 = vmul.f32 %v789, 1.442695
      %v792 = vpow.pop %v791
      %v793 = vmul.f32 %v790, 1.442695
      %v794 = vpow.pop %v793
      %v795 = vadd.f32 %v792, 1.0
      %v796 = vadd.f32 %v794, 1.0
      %v797 = vrcp.pop %v795
      %v798 = vmul.f32 %v795, %v797
      %v799 = vsub.f32 1.0, %v798
      %v800 = vmul.f32 %v797, %v799
      %v801 = vadd.f32 %v797, %v800
      %vm802 = vweird.f32 %v795
      %vm803 = vweird.f32 %v797
      %vm804 = vmor %vm802, %vm803
      %v805 = vsel %vm804, %v797, %v801
      %v806 = vand.u32 2147483647, %v795
      %vm807 = vcmp.eq.f32.partialorder %v806, 8.507059e+37
      %v808 = vand.u32 %v795, 2147483648
      %v809 = vor.u32 1.1754944e-38, %v808
      %v810 = vsel %vm807, %v809, %v805
      %v811 = vmul.f32 1.0, %v810
      %v812 = vrcp.pop %v796
      %v813 = vmul.f32 %v796, %v812
      %v814 = vsub.f32 1.0, %v813
      %v815 = vmul.f32 %v812, %v814
      %v816 = vadd.f32 %v812, %v815
      %vm817 = vweird.f32 %v796
      %vm818 = vweird.f32 %v812
      %vm819 = vmor %vm817, %vm818
      %v820 = vsel %vm819, %v812, %v816
      %v821 = vand.u32 2147483647, %v796
      %vm822 = vcmp.eq.f32.partialorder %v821, 8.507059e+37
      %v823 = vand.u32 %v796, 2147483648
      %v824 = vor.u32 1.1754944e-38, %v823
      %v825 = vsel %vm822, %v824, %v820
      %v826 = vmul.f32 1.0, %v825
      %v827 = vmul.f32 %v771, %v743
      %v828 = vmul.f32 %v786, %v745
      %v829 = vadd.f32 %v700, %v827
      %v830 = vadd.f32 %v703, %v828
      %v831 = vtanh.pop %v829
      %v832 = vtanh.pop %v830
      %v833 = vsub.f32 %v692, %v831
      %v834 = vsub.f32 %v693, %v832
      %v835 = vmul.f32 %v811, %v833
      %v836 = vmul.f32 %v826, %v834
      %v837 = vadd.f32 %v831, %v835
      %v838 = vadd.f32 %v832, %v836
      %s839 = scalar_lea.vmem %s229, 32
      %840 = vst [vmem:[%s839] sm:$0xff] %v837
      %841 = vst [vmem:[%s839 + $0x8] sm:$0xff] %v838
      %s842 = scalar_lea.vmem %s222, 144
      %v843 = vld [vmem:[%s842] sm:$0xff]
      %v844 = vld [vmem:[%s842 + $0x8] sm:$0xff]
      %v845 = vld [vmem:[%s842 + $0x10] sm:$0xff]
      %v846 = vld [vmem:[%s842 + $0x18] sm:$0xff]
      %v847 = vld [vmem:[%s842 + $0x20] sm:$0xff]
      %v848 = vld [vmem:[%s842 + $0x28] sm:$0xff]
      %v849 = vpack.c.bf16 %v838, %v837
      %850 = vmatpush.bf16.msra.mxu0 %v389
      %851 = vmatpush.bf16.msra.mxu0 %v386
      %852 = vmatpush.bf16.msra.mxu0 %v383
      %853 = vmatpush.bf16.msra.mxu0 %v380
      %854 = vmatpush.bf16.msra.mxu0 %v377
      %855 = vmatpush.bf16.msra.mxu0 %v374
      %856 = vmatpush.bf16.msra.mxu0 %v371
      %857 = vmatpush.bf16.msra.mxu0 %v368
      %858 = vmatmul.bf16.gmra.mxu0 %v849
      %v859 = vpop.f32.mrf.mxu0
      %v860 = vadd.f32 %v273, %v859
      %v861 = vpop.f32.mrf.mxu0
      %v862 = vadd.f32 %v273, %v861
      %863 = vdwg.mxu0
      %864 = vmatpush.bf16.msra.mxu0 %v390
      %865 = vmatpush.bf16.msra.mxu0 %v387
      %866 = vmatpush.bf16.msra.mxu0 %v384
      %867 = vmatpush.bf16.msra.mxu0 %v381
      %868 = vmatpush.bf16.msra.mxu0 %v378
      %869 = vmatpush.bf16.msra.mxu0 %v375
      %870 = vmatpush.bf16.msra.mxu0 %v372
      %871 = vmatpush.bf16.msra.mxu0 %v369
      %872 = vmatmul.bf16.gmra.mxu0 %v849
      %v873 = vpop.f32.mrf.mxu0
      %v874 = vadd.f32 %v274, %v873
      %v875 = vpop.f32.mrf.mxu0
      %v876 = vadd.f32 %v274, %v875
      %877 = vdwg.mxu0
      %878 = vmatpush.bf16.msra.mxu0 %v391
      %879 = vmatpush.bf16.msra.mxu0 %v388
      %880 = vmatpush.bf16.msra.mxu0 %v385
      %881 = vmatpush.bf16.msra.mxu0 %v382
      %882 = vmatpush.bf16.msra.mxu0 %v379
      %883 = vmatpush.bf16.msra.mxu0 %v376
      %884 = vmatpush.bf16.msra.mxu0 %v373
      %885 = vmatpush.bf16.msra.mxu0 %v370
      %886 = vmatmul.bf16.gmra.mxu0 %v849
      %v887 = vpop.f32.mrf.mxu0
      %v888 = vadd.f32 %v275, %v887
      %v889 = vpop.f32.mrf.mxu0
      %v890 = vadd.f32 %v275, %v889
      %891 = vdwg.mxu0
      %v892 = vadd.f32 %v843, %v860
      %v893 = vadd.f32 %v846, %v862
      %v894 = vxor.u32 %v892, 2147483648
      %v895 = vxor.u32 %v893, 2147483648
      %v896 = vmul.f32 %v894, 1.442695
      %v897 = vpow.pop %v896
      %v898 = vmul.f32 %v895, 1.442695
      %v899 = vpow.pop %v898
      %v900 = vadd.f32 %v897, 1.0
      %v901 = vadd.f32 %v899, 1.0
      %v902 = vrcp.pop %v900
      %v903 = vmul.f32 %v900, %v902
      %v904 = vsub.f32 1.0, %v903
      %v905 = vmul.f32 %v902, %v904
      %v906 = vadd.f32 %v902, %v905
      %vm907 = vweird.f32 %v900
      %vm908 = vweird.f32 %v902
      %vm909 = vmor %vm907, %vm908
      %v910 = vsel %vm909, %v902, %v906
      %v911 = vand.u32 2147483647, %v900
      %vm912 = vcmp.eq.f32.partialorder %v911, 8.507059e+37
      %v913 = vand.u32 %v900, 2147483648
      %v914 = vor.u32 1.1754944e-38, %v913
      %v915 = vsel %vm912, %v914, %v910
      %v916 = vmul.f32 1.0, %v915
      %v917 = vrcp.pop %v901
      %v918 = vmul.f32 %v901, %v917
      %v919 = vsub.f32 1.0, %v918
      %v920 = vmul.f32 %v917, %v919
      %v921 = vadd.f32 %v917, %v920
      %vm922 = vweird.f32 %v901
      %vm923 = vweird.f32 %v917
      %vm924 = vmor %vm922, %vm923
      %v925 = vsel %vm924, %v917, %v921
      %v926 = vand.u32 2147483647, %v901
      %vm927 = vcmp.eq.f32.partialorder %v926, 8.507059e+37
      %v928 = vand.u32 %v901, 2147483648
      %v929 = vor.u32 1.1754944e-38, %v928
      %v930 = vsel %vm927, %v929, %v925
      %v931 = vmul.f32 1.0, %v930
      %v932 = vadd.f32 %v844, %v874
      %v933 = vadd.f32 %v847, %v876
      %v934 = vxor.u32 %v932, 2147483648
      %v935 = vxor.u32 %v933, 2147483648
      %v936 = vmul.f32 %v934, 1.442695
      %v937 = vpow.pop %v936
      %v938 = vmul.f32 %v935, 1.442695
      %v939 = vpow.pop %v938
      %v940 = vadd.f32 %v937, 1.0
      %v941 = vadd.f32 %v939, 1.0
      %v942 = vrcp.pop %v940
      %v943 = vmul.f32 %v940, %v942
      %v944 = vsub.f32 1.0, %v943
      %v945 = vmul.f32 %v942, %v944
      %v946 = vadd.f32 %v942, %v945
      %vm947 = vweird.f32 %v940
      %vm948 = vweird.f32 %v942
      %vm949 = vmor %vm947, %vm948
      %v950 = vsel %vm949, %v942, %v946
      %v951 = vand.u32 2147483647, %v940
      %vm952 = vcmp.eq.f32.partialorder %v951, 8.507059e+37
      %v953 = vand.u32 %v940, 2147483648
      %v954 = vor.u32 1.1754944e-38, %v953
      %v955 = vsel %vm952, %v954, %v950
      %v956 = vmul.f32 1.0, %v955
      %v957 = vrcp.pop %v941
      %v958 = vmul.f32 %v941, %v957
      %v959 = vsub.f32 1.0, %v958
      %v960 = vmul.f32 %v957, %v959
      %v961 = vadd.f32 %v957, %v960
      %vm962 = vweird.f32 %v941
      %vm963 = vweird.f32 %v957
      %vm964 = vmor %vm962, %vm963
      %v965 = vsel %vm964, %v957, %v961
      %v966 = vand.u32 2147483647, %v941
      %vm967 = vcmp.eq.f32.partialorder %v966, 8.507059e+37
      %v968 = vand.u32 %v941, 2147483648
      %v969 = vor.u32 1.1754944e-38, %v968
      %v970 = vsel %vm967, %v969, %v965
      %v971 = vmul.f32 1.0, %v970
      %v972 = vmul.f32 %v916, %v888
      %v973 = vmul.f32 %v931, %v890
      %v974 = vadd.f32 %v845, %v972
      %v975 = vadd.f32 %v848, %v973
      %v976 = vtanh.pop %v974
      %v977 = vtanh.pop %v975
      %v978 = vsub.f32 %v837, %v976
      %v979 = vsub.f32 %v838, %v977
      %v980 = vmul.f32 %v956, %v978
      %v981 = vmul.f32 %v971, %v979
      %v982 = vadd.f32 %v976, %v980
      %v983 = vadd.f32 %v977, %v981
      %s984 = scalar_lea.vmem %s229, 48
      %985 = vst [vmem:[%s984] sm:$0xff] %v982
      %986 = vst [vmem:[%s984 + $0x8] sm:$0xff] %v983
      %987 = vst [vmem:[#allocation2] sm:$0xff] %v982
      %988 = vst [vmem:[#allocation2 + $0x8] sm:$0xff] %v983
      %p989 = scmp.eq.s32.totalorder %s17, 1
      // Predicated region
      $region41: #{seq2seq_forward.7} parent=35 // pred_check
        %p990 = pneg %p989
      $region42: #{seq2seq_forward.7} parent=35 // pred_check_branch
        %992 = sbr.rel (%p990) target = $region44
      $region43: #{seq2seq_forward.7} parent=35 // pred_region
        %993 = vst [vmem:[%s5] sm:$0xff] %v982
        %994 = vst [vmem:[%s5 + $0x8] sm:$0xff] %v983
      $region44: #{seq2seq_forward.7} parent=35 // pred_fallthru
        _
      %s995 = smul.u32 4, %s17
      %p996 = scmp.lt.s32.totalorder %s995, 7
      %s997 = scalar_select %p996, %s995, 7
      %s998 = smul.addr %s997, 2
      %s999 = smul.addr %s998, 8
      %s1000 = scalar_lea.vmem %s4, %s999
      // Predicated region
      $region45: #{seq2seq_forward.7} parent=35 // pred_check
        %p1001 = pneg %p124
      $region46: #{seq2seq_forward.7} parent=35 // pred_check_branch
        %1003 = sbr.rel (%p1001) target = $region48
      $region47: #{seq2seq_forward.7} parent=35 // pred_region
        %s1004 = smul.u32 4, %s17
      $region48: #{seq2seq_forward.7} parent=35 // pred_fallthru
        _
      // Predicated region
      $region49: #{seq2seq_forward.7} parent=35 // pred_check
        %p1005 = pneg %p145
      $region50: #{seq2seq_forward.7} parent=35 // pred_check_branch
        %1007 = sbr.rel (%p1005) target = $region52
      $region51: #{seq2seq_forward.7} parent=35 // pred_region
        _
      $region52: #{seq2seq_forward.7} parent=35 // pred_fallthru
        _
      // Predicated region
      $region53: #{seq2seq_forward.7} parent=35 // pred_check
        %p1008 = pneg %p145
      $region54: #{seq2seq_forward.7} parent=35 // pred_check_branch
        %1010 = sbr.rel (%p1008) target = $region56
      $region55: #{seq2seq_forward.7} parent=35 // pred_region
        _
      $region56: #{seq2seq_forward.7} parent=35 // pred_fallthru
        _
    $region36: #{seq2seq_forward.7} parent=5 // pred_fallthru
      _
    %p1011 = scmp.le.s32.totalorder 2, %s12
    // Predicated region
    $region57: #{seq2seq_forward.7} parent=5 // pred_check
      %p1012 = pneg %p1011
    $region58: #{seq2seq_forward.7} parent=5 // pred_check_branch
      %1014 = sbr.rel (%p1012) target = $region60
    $region59: #{seq2seq_forward.7} parent=5 // pred_region
      %s1015 = ssub.s32 %s12, 2
      // Predicated region
      $region61: #{seq2seq_forward.7} parent=59 // pred_check
        %p1016 = pneg %p130
      $region62: #{seq2seq_forward.7} parent=59 // pred_check_branch
        %1018 = sbr.rel (%p1016) target = $region64
      $region63: #{seq2seq_forward.7} parent=59 // pred_region
        %s1019 = smul.u32 4, %s18
        %p1020 = scmp.lt.s32.totalorder %s1019, 7
        %s1021 = scalar_select %p1020, %s1019, 7
        %s1022 = smul.addr %s1021, 2
        %s1023 = smul.addr %s1022, 8
        %s1024 = scalar_lea.vmem %s4, %s1023
      $region64: #{seq2seq_forward.7} parent=59 // pred_fallthru
        _
    $region60: #{seq2seq_forward.7} parent=5 // pred_fallthru
      _
  $region6: #{seq2seq_forward.7} parent=0 // loop_footer
    %s16 = sadd.s32 1, %s12
  $region7: #{seq2seq_forward.7} parent=0 // loop_footer_branch
    %11 = sbr.rel target = $region3
  $region8: #{seq2seq_forward.7} parent=0 // loop_exit
    _

// kernel: seq2seq_forward.8
$region0: #{seq2seq_forward.8}
  #allocation0 [shape = 'u32[]', space=smem, size = 0x4, offset = 0x4, fixed_abs, tag = 'smem constant byte address 0x4 - core index']
  #allocation1 [shape = 'u32[72,128]{1,0:T(1,128)}', space=vmem, size = 0x9000, scoped, tag = 'internal scratch']
  #allocation2 [shape = 'f32[16,128]{1,0:T(8,128)}', space=vmem, size = 0x2000, scoped, tag = 'scratch operand']
  %s0 = inlined_call_operand.vmem [shape: f32[8,16,384], index: 0, kind: input, shape index: {}]
  %s1 = inlined_call_operand.vmem [shape: bf16[128,384], index: 1, kind: input, shape index: {}]
  %s2 = inlined_call_operand.vmem [shape: f32[1,384], index: 2, kind: input, shape index: {}]
  %s3 = inlined_call_operand.vmem [shape: f32[16,128], index: 3, kind: input, shape index: {}]
  %s4 = inlined_call_operand.vmem [shape: f32[8,16,128], index: 4, kind: output, shape index: {0}]
  %s5 = inlined_call_operand.hbm [shape: f32[16,128], index: 5, kind: output, shape index: {1}]
  %6 = xla_tuple %s4, %s5
  %s7 = sld [smem:[#allocation0]]
  $region65: #{seq2seq_forward.8} parent=0
    _
  %s9 = ssub.s32 1, %s7
  %s10 = scalar_select 0, %s9, %s7
  $region1: #{seq2seq_forward.8} parent=0
    #allocation3 [shape = 'u8[8192]{0}', space=vmem, size = 0x2000, scoped, tag = 'output window, operand 1, single buffered']
    #allocation4 [shape = 's32[2]{0}', space=sflag, size = 0x8, scoped, tag = 'scoped memory for seq2seq_forward.8']
    %11 = vsyncpa [#allocation4], 0
    loop: start=0, step=1, limit=4
    $region2: #{seq2seq_forward.8} parent=1 // loop_pre_header
      _
    $region3: #{seq2seq_forward.8} parent=1 // loop_header
      %s13 = sphi 0, %s17
      %p14 = scmp.ge.s32.totalorder %s13, 4
      %s23 = sphi 0, %s25
      %s26 = sphi 0, %s23
      %s27 = sphi 0, %s26
      %s43 = sphi 0, %s27
      %s47 = sphi 0, %s47
      %s49 = sphi 0, %s47
      %s50 = sphi 0, %s49
      %s64 = sphi 0, %s50
      %s68 = sphi 0, %s68
      %s70 = sphi 0, %s68
      %s71 = sphi 0, %s70
      %s85 = sphi 0, %s71
      %s89 = sphi 0, %s89
      %s91 = sphi 0, %s89
      %s92 = sphi 0, %s91
      %s106 = sphi 0, %s92
      %s112 = sphi 0, %s114
      %s115 = sphi 0, %s112
      %s116 = sphi 0, %s115
      %s132 = sphi 0, %s116
      %s136 = sphi 0, %s136
      %s138 = sphi 0, %s136
      %s139 = sphi 0, %s138
      %s153 = sphi 0, %s139
    $region4: #{seq2seq_forward.8} parent=1 // loop_header_branch
      %16 = sbr.rel (%p14) target = $region8
    $region5: #{seq2seq_forward.8} parent=1 // loop_body
      %s18 = ssub.s32 %s13, 1
      %s19 = ssub.s32 %s13, 2
      %s20 = sadd.s32 %s13, 1
      %s21 = ssub.s32 %s13, %s20
      %p22 = scmp.eq.s32.totalorder %s21, 0
      %s24 = sadd.s32 %s23, 1
      %s25 = scalar_select %p22, %s23, %s24
      %p28 = pneg %p22
      %p29 = scmp.eq.s32.totalorder %s13, 1
      %p30 = por %p28, %p29
      %p31 = scmp.ne.s32.totalorder %s23, %s26
      %p32 = scmp.eq.s32.totalorder %s13, 0
      %p33 = por %p31, %p32
      %p34 = scmp.ne.s32.totalorder %s23, %s26
      %p35 = scmp.eq.s32.totalorder %s18, 1
      %p36 = por %p34, %p35
      %p37 = scmp.ne.s32.totalorder %s26, %s27
      %p38 = scmp.eq.s32.totalorder %s18, 0
      %p39 = por %p37, %p38
      %p40 = scmp.ne.s32.totalorder %s26, %s27
      %p41 = scmp.eq.s32.totalorder %s19, 1
      %p42 = por %p40, %p41
      %p44 = scmp.ne.s32.totalorder %s27, %s43
      %p45 = scmp.eq.s32.totalorder %s19, 0
      %p46 = por %p44, %p45
      %s48 = sadd.s32 %s47, 1
      %p51 = scmp.eq.s32.totalorder %s13, 1
      %p52 = scmp.ne.s32.totalorder %s47, %s49
      %p53 = scmp.eq.s32.totalorder %s13, 0
      %p54 = por %p52, %p53
      %p55 = scmp.ne.s32.totalorder %s47, %s49
      %p56 = scmp.eq.s32.totalorder %s18, 1
      %p57 = por %p55, %p56
      %p58 = scmp.ne.s32.totalorder %s49, %s50
      %p59 = scmp.eq.s32.totalorder %s18, 0
      %p60 = por %p58, %p59
      %p61 = scmp.ne.s32.totalorder %s49, %s50
      %p62 = scmp.eq.s32.totalorder %s19, 1
      %p63 = por %p61, %p62
      %p65 = scmp.ne.s32.totalorder %s50, %s64
      %p66 = scmp.eq.s32.totalorder %s19, 0
      %p67 = por %p65, %p66
      %s69 = sadd.s32 %s68, 1
      %p72 = scmp.eq.s32.totalorder %s13, 1
      %p73 = scmp.ne.s32.totalorder %s68, %s70
      %p74 = scmp.eq.s32.totalorder %s13, 0
      %p75 = por %p73, %p74
      %p76 = scmp.ne.s32.totalorder %s68, %s70
      %p77 = scmp.eq.s32.totalorder %s18, 1
      %p78 = por %p76, %p77
      %p79 = scmp.ne.s32.totalorder %s70, %s71
      %p80 = scmp.eq.s32.totalorder %s18, 0
      %p81 = por %p79, %p80
      %p82 = scmp.ne.s32.totalorder %s70, %s71
      %p83 = scmp.eq.s32.totalorder %s19, 1
      %p84 = por %p82, %p83
      %p86 = scmp.ne.s32.totalorder %s71, %s85
      %p87 = scmp.eq.s32.totalorder %s19, 0
      %p88 = por %p86, %p87
      %s90 = sadd.s32 %s89, 1
      %p93 = scmp.eq.s32.totalorder %s13, 1
      %p94 = scmp.ne.s32.totalorder %s89, %s91
      %p95 = scmp.eq.s32.totalorder %s13, 0
      %p96 = por %p94, %p95
      %p97 = scmp.ne.s32.totalorder %s89, %s91
      %p98 = scmp.eq.s32.totalorder %s18, 1
      %p99 = por %p97, %p98
      %p100 = scmp.ne.s32.totalorder %s91, %s92
      %p101 = scmp.eq.s32.totalorder %s18, 0
      %p102 = por %p100, %p101
      %p103 = scmp.ne.s32.totalorder %s91, %s92
      %p104 = scmp.eq.s32.totalorder %s19, 1
      %p105 = por %p103, %p104
      %p107 = scmp.ne.s32.totalorder %s92, %s106
      %p108 = scmp.eq.s32.totalorder %s19, 0
      %p109 = por %p107, %p108
      %s110 = ssub.s32 %s13, %s20
      %p111 = scmp.eq.s32.totalorder %s110, 0
      %s113 = sadd.s32 %s112, 1
      %s114 = scalar_select %p111, %s112, %s113
      %p117 = pneg %p111
      %p118 = scmp.eq.s32.totalorder %s13, 1
      %p119 = por %p117, %p118
      %p120 = scmp.ne.s32.totalorder %s112, %s115
      %p121 = scmp.eq.s32.totalorder %s13, 0
      %p122 = por %p120, %p121
      %p123 = scmp.ne.s32.totalorder %s112, %s115
      %p124 = scmp.eq.s32.totalorder %s18, 1
      %p125 = por %p123, %p124
      %p126 = scmp.ne.s32.totalorder %s115, %s116
      %p127 = scmp.eq.s32.totalorder %s18, 0
      %p128 = por %p126, %p127
      %p129 = scmp.ne.s32.totalorder %s115, %s116
      %p130 = scmp.eq.s32.totalorder %s19, 1
      %p131 = por %p129, %p130
      %p133 = scmp.ne.s32.totalorder %s116, %s132
      %p134 = scmp.eq.s32.totalorder %s19, 0
      %p135 = por %p133, %p134
      %s137 = sadd.s32 %s136, 1
      %p140 = scmp.eq.s32.totalorder %s13, 1
      %p141 = scmp.ne.s32.totalorder %s136, %s138
      %p142 = scmp.eq.s32.totalorder %s13, 0
      %p143 = por %p141, %p142
      %p144 = scmp.ne.s32.totalorder %s136, %s138
      %p145 = scmp.eq.s32.totalorder %s18, 1
      %p146 = por %p144, %p145
      %p147 = scmp.ne.s32.totalorder %s138, %s139
      %p148 = scmp.eq.s32.totalorder %s18, 0
      %p149 = por %p147, %p148
      %p150 = scmp.ne.s32.totalorder %s138, %s139
      %p151 = scmp.eq.s32.totalorder %s19, 1
      %p152 = por %p150, %p151
      %p154 = scmp.ne.s32.totalorder %s139, %s153
      %p155 = scmp.eq.s32.totalorder %s19, 0
      %p156 = por %p154, %p155
      %p157 = scmp.le.s32.totalorder 1, %s13
      %p158 = scmp.lt.s32.totalorder %s13, 3
      %p159 = pnand %p157, %p158
      %p160 = pneg %p159
      // Predicated region
      $region9: #{seq2seq_forward.8} parent=5 // pred_check
        _
      $region10: #{seq2seq_forward.8} parent=5 // pred_check_branch
        %162 = sbr.rel (%p159) target = $region12
      $region11: #{seq2seq_forward.8} parent=5 // pred_region
        %s163 = ssub.s32 %s13, 1
        // Predicated region
        $region13: #{seq2seq_forward.8} parent=11 // pred_check
          %p164 = pneg %p60
        $region14: #{seq2seq_forward.8} parent=11 // pred_check_branch
          %166 = sbr.rel (%p164) target = $region16
        $region15: #{seq2seq_forward.8} parent=11 // pred_region
          _
        $region16: #{seq2seq_forward.8} parent=11 // pred_fallthru
          _
        // Predicated region
        $region17: #{seq2seq_forward.8} parent=11 // pred_check
          %p167 = pneg %p81
        $region18: #{seq2seq_forward.8} parent=11 // pred_check_branch
          %169 = sbr.rel (%p167) target = $region20
        $region19: #{seq2seq_forward.8} parent=11 // pred_region
          _
        $region20: #{seq2seq_forward.8} parent=11 // pred_fallthru
          _
        // Predicated region
        $region21: #{seq2seq_forward.8} parent=11 // pred_check
          %p170 = pneg %p102
        $region22: #{seq2seq_forward.8} parent=11 // pred_check_branch
          %172 = sbr.rel (%p170) target = $region24
        $region23: #{seq2seq_forward.8} parent=11 // pred_region
          _
        $region24: #{seq2seq_forward.8} parent=11 // pred_fallthru
          _
      $region12: #{seq2seq_forward.8} parent=5 // pred_fallthru
        _
      %p173 = scmp.lt.s32.totalorder %s13, 2
      // Predicated region
      $region25: #{seq2seq_forward.8} parent=5 // pred_check
        %p174 = pneg %p173
      $region26: #{seq2seq_forward.8} parent=5 // pred_check_branch
        %176 = sbr.rel (%p174) target = $region28
      $region27: #{seq2seq_forward.8} parent=5 // pred_region
        // Predicated region
        $region29: #{seq2seq_forward.8} parent=27 // pred_check
          %p177 = pneg %p33
        $region30: #{seq2seq_forward.8} parent=27 // pred_check_branch
          %179 = sbr.rel (%p177) target = $region32
        $region31: #{seq2seq_forward.8} parent=27 // pred_region
          %s180 = smul.u32 4, %s13
          %p181 = scmp.lt.s32.totalorder %s180, 7
          %s182 = scalar_select %p181, %s180, 7
          %s183 = smul.addr %s182, 6
          %s184 = smul.addr %s183, 8
          %s185 = scalar_lea.vmem %s0, %s184
          %s186 = smul.u32 4, %s13
        $region32: #{seq2seq_forward.8} parent=27 // pred_fallthru
          _
      $region28: #{seq2seq_forward.8} parent=5 // pred_fallthru
        _
      %p187 = scmp.le.s32.totalorder 1, %s13
      %p188 = scmp.lt.s32.totalorder %s13, 3
      %p189 = pnand %p187, %p188
      %p190 = pneg %p189
      // Predicated region
      $region33: #{seq2seq_forward.8} parent=5 // pred_check
        _
      $region34: #{seq2seq_forward.8} parent=5 // pred_check_branch
        %192 = sbr.rel (%p189) target = $region36
      $region35: #{seq2seq_forward.8} parent=5 // pred_region
        %s193 = ssub.s32 %s13, 1
        %s194 = smul.u32 4, %s18
        %p195 = scmp.lt.s32.totalorder %s194, 7
        %s196 = scalar_select %p195, %s194, 7
        %s197 = smul.addr %s196, 6
        %s198 = smul.addr %s197, 8
        %s199 = scalar_lea.vmem %s0, %s198
        %p200 = pneg %p39
        %p201 = pneg %p36
        %p202 = pneg %p60
        %p203 = pneg %p57
        %p204 = pneg %p81
        %p205 = pneg %p78
        %p206 = pneg %p102
        %p207 = pneg %p99
        %p208 = pneg %p128
        %p209 = pneg %p125
        %s210 = smul.u32 4, %s18
        %p211 = scmp.lt.s32.totalorder %s210, 7
        %s212 = scalar_select %p211, %s210, 7
        %s213 = smul.addr %s212, 2
        %s214 = smul.addr %s213, 8
        %s215 = scalar_lea.vmem %s4, %s214
        %p216 = pneg %p149
        %p217 = pneg %p146
        %s218 = smul.u32 4, %s18
        %p219 = scmp.lt.s32.totalorder %s218, 7
        %s220 = scalar_select %p219, %s218, 7
        %s221 = smul.addr %s220, 6
        %s222 = smul.addr %s221, 8
        %s223 = scalar_lea.vmem %s0, %s222
        %s224 = smul.u32 4, %s18
        %s225 = smul.u32 4, %s18
        %p226 = scmp.lt.s32.totalorder %s225, 7
        %s227 = scalar_select %p226, %s225, 7
        %s228 = smul.addr %s227, 2
        %s229 = smul.addr %s228, 8
        %s230 = scalar_lea.vmem %s4, %s229
        %s231 = smul.u32 4, %s18
        %p232 = scmp.eq.s32.totalorder %s18, 0
        // Predicated region
        $region37: #{seq2seq_forward.8} parent=35 // pred_check
          %p233 = pneg %p232
        $region38: #{seq2seq_forward.8} parent=35 // pred_check_branch
          %235 = sbr.rel (%p233) target = $region40
        $region39: #{seq2seq_forward.8} parent=35 // pred_region
          %v236 = vld [vmem:[%s3] sm:$0xff]
          %v237 = vld [vmem:[%s3 + $0x8] sm:$0xff]
          %238 = vst [vmem:[#allocation2] sm:$0xff] %v236
          %239 = vst [vmem:[#allocation2 + $0x8] sm:$0xff] %v237
        $region40: #{seq2seq_forward.8} parent=35 // pred_fallthru
          _
        %v240 = vld [vmem:[%s1] sm:$0xff]
        %v241 = vld [vmem:[%s1 + $0x8] sm:$0xf]
        %v242 = vld [vmem:[%s1 + $0xc] sm:$0xff]
        %v243 = vld [vmem:[%s1 + $0x14] sm:$0xf]
        %v244 = vld [vmem:[%s1 + $0x18] sm:$0xff]
        %v245 = vld [vmem:[%s1 + $0x20] sm:$0xf]
        %v246 = vld [vmem:[%s1 + $0x24] sm:$0xff]
        %v247 = vld [vmem:[%s1 + $0x2c] sm:$0xf]
        %v248 = vld [vmem:[%s1 + $0x30] sm:$0xff]
        %v249 = vld [vmem:[%s1 + $0x38] sm:$0xf]
        %v250 = vld [vmem:[%s1 + $0x3c] sm:$0xff]
        %v251 = vld [vmem:[%s1 + $0x44] sm:$0xf]
        %v252 = vld [vmem:[%s1 + $0x48] sm:$0xff]
        %v253 = vld [vmem:[%s1 + $0x50] sm:$0xf]
        %v254 = vld [vmem:[%s1 + $0x54] sm:$0xff]
        %v255 = vld [vmem:[%s1 + $0x5c] sm:$0xf]
        %v256 = vld [vmem:[%s1 + $0x60] sm:$0xff]
        %v257 = vld [vmem:[%s1 + $0x68] sm:$0xf]
        %v258 = vld [vmem:[%s1 + $0x6c] sm:$0xff]
        %v259 = vld [vmem:[%s1 + $0x74] sm:$0xf]
        %v260 = vld [vmem:[%s1 + $0x78] sm:$0xff]
        %v261 = vld [vmem:[%s1 + $0x80] sm:$0xf]
        %v262 = vld [vmem:[%s1 + $0x84] sm:$0xff]
        %v263 = vld [vmem:[%s1 + $0x8c] sm:$0xf]
        %v264 = vld [vmem:[%s1 + $0x90] sm:$0xff]
        %v265 = vld [vmem:[%s1 + $0x98] sm:$0xf]
        %v266 = vld [vmem:[%s1 + $0x9c] sm:$0xff]
        %v267 = vld [vmem:[%s1 + $0xa4] sm:$0xf]
        %v268 = vld [vmem:[%s1 + $0xa8] sm:$0xff]
        %v269 = vld [vmem:[%s1 + $0xb0] sm:$0xf]
        %v270 = vld [vmem:[%s1 + $0xb4] sm:$0xff]
        %v271 = vld [vmem:[%s1 + $0xbc] sm:$0xf]
        %v272 = vld [vmem:[%s2] sm:$0x7]
        %v274 = vperm.slane %v272, 0
        %v275 = vperm.slane %v272, 1
        %v276 = vperm.slane %v272, 2
        %v280 = vld [vmem:[#allocation2] sm:$0xff]
        %v281 = vld [vmem:[#allocation2 + $0x8] sm:$0xff]
        %v282 = vld [vmem:[%s223] sm:$0xff]
        %v283 = vld [vmem:[%s223 + $0x8] sm:$0xff]
        %v284 = vld [vmem:[%s223 + $0x10] sm:$0xff]
        %v285 = vld [vmem:[%s223 + $0x18] sm:$0xff]
        %v286 = vld [vmem:[%s223 + $0x20] sm:$0xff]
        %v287 = vld [vmem:[%s223 + $0x28] sm:$0xff]
        %v288 = vpack.c.bf16 %v281, %v280
        %v321 = vunpack.c.l.b16 %v240
        %v322 = vunpack.c.h.b16 %v240
        %v323 = vunpack.c.l.b16 %v241
        %v324 = vunpack.c.l.b16 %v242
        %v325 = vunpack.c.h.b16 %v242
        %v326 = vunpack.c.l.b16 %v243
        %v327 = vunpack.c.l.b16 %v244
        %v328 = vunpack.c.h.b16 %v244
        %v329 = vunpack.c.l.b16 %v245
        %v330 = vunpack.c.l.b16 %v246
        %v331 = vunpack.c.h.b16 %v246
        %v332 = vunpack.c.l.b16 %v247
        %v333 = vunpack.c.l.b16 %v248
        %v334 = vunpack.c.h.b16 %v248
        %v335 = vunpack.c.l.b16 %v249
        %v336 = vunpack.c.l.b16 %v250
        %v337 = vunpack.c.h.b16 %v250
        %v338 = vunpack.c.l.b16 %v251
        %v339 = vunpack.c.l.b16 %v252
        %v340 = vunpack.c.h.b16 %v252
        %v341 = vunpack.c.l.b16 %v253
        %v342 = vunpack.c.l.b16 %v254
        %v343 = vunpack.c.h.b16 %v254
        %v344 = vunpack.c.l.b16 %v255
        %v345 = vunpack.c.l.b16 %v256
        %v346 = vunpack.c.h.b16 %v256
        %v347 = vunpack.c.l.b16 %v257
        %v348 = vunpack.c.l.b16 %v258
        %v349 = vunpack.c.h.b16 %v258
        %v350 = vunpack.c.l.b16 %v259
        %v351 = vunpack.c.l.b16 %v260
        %v352 = vunpack.c.h.b16 %v260
        %v353 = vunpack.c.l.b16 %v261
        %v354 = vunpack.c.l.b16 %v262
        %v355 = vunpack.c.h.b16 %v262
        %v356 = vunpack.c.l.b16 %v263
        %v357 = vunpack.c.l.b16 %v264
        %v358 = vunpack.c.h.b16 %v264
        %v359 = vunpack.c.l.b16 %v265
        %v360 = vunpack.c.l.b16 %v266
        %v361 = vunpack.c.h.b16 %v266
        %v362 = vunpack.c.l.b16 %v267
        %v363 = vunpack.c.l.b16 %v268
        %v364 = vunpack.c.h.b16 %v268
        %v365 = vunpack.c.l.b16 %v269
        %v366 = vunpack.c.l.b16 %v270
        %v367 = vunpack.c.h.b16 %v270
        %v368 = vunpack.c.l.b16 %v271
        %v369 = vpack.c.b16 %v324, %v321
        %v370 = vpack.c.b16 %v325, %v322
        %v371 = vpack.c.b16 %v326, %v323
        %v372 = vpack.c.b16 %v330, %v327
        %v373 = vpack.c.b16 %v331, %v328
        %v374 = vpack.c.b16 %v332, %v329
        %v375 = vpack.c.b16 %v336, %v333
        %v376 = vpack.c.b16 %v337, %v334
        %v377 = vpack.c.b16 %v338, %v335
        %v378 = vpack.c.b16 %v342, %v339
        %v379 = vpack.c.b16 %v343, %v340
        %v380 = vpack.c.b16 %v344, %v341
        %v381 = vpack.c.b16 %v348, %v345
        %v382 = vpack.c.b16 %v349, %v346
        %v383 = vpack.c.b16 %v350, %v347
        %v384 = vpack.c.b16 %v354, %v351
        %v385 = vpack.c.b16 %v355, %v352
        %v386 = vpack.c.b16 %v356, %v353
        %v387 = vpack.c.b16 %v360, %v357
        %v388 = vpack.c.b16 %v361, %v358
        %v389 = vpack.c.b16 %v362, %v359
        %v390 = vpack.c.b16 %v366, %v363
        %v391 = vpack.c.b16 %v367, %v364
        %v392 = vpack.c.b16 %v368, %v365
        %417 = vmatpush.bf16.msra.mxu0 %v390
        %418 = vmatpush.bf16.msra.mxu0 %v387
        %419 = vmatpush.bf16.msra.mxu0 %v384
        %420 = vmatpush.bf16.msra.mxu0 %v381
        %421 = vmatpush.bf16.msra.mxu0 %v378
        %422 = vmatpush.bf16.msra.mxu0 %v375
        %423 = vmatpush.bf16.msra.mxu0 %v372
        %424 = vmatpush.bf16.msra.mxu0 %v369
        %425 = vmatmul.bf16.gmra.mxu0 %v288
        %v426 = vpop.f32.mrf.mxu0
        %v427 = vadd.f32 %v274, %v426
        %v428 = vpop.f32.mrf.mxu0
        %v429 = vadd.f32 %v274, %v428
        %430 = vdwg.mxu0
        %431 = vmatpush.bf16.msra.mxu0 %v391
        %432 = vmatpush.bf16.msra.mxu0 %v388
        %433 = vmatpush.bf16.msra.mxu0 %v385
        %434 = vmatpush.bf16.msra.mxu0 %v382
        %435 = vmatpush.bf16.msra.mxu0 %v379
        %436 = vmatpush.bf16.msra.mxu0 %v376
        %437 = vmatpush.bf16.msra.mxu0 %v373
        %438 = vmatpush.bf16.msra.mxu0 %v370
        %439 = vmatmul.bf16.gmra.mxu0 %v288
        %v440 = vpop.f32.mrf.mxu0
        %v441 = vadd.f32 %v275, %v440
        %v442 = vpop.f32.mrf.mxu0
        %v443 = vadd.f32 %v275, %v442
        %444 = vdwg.mxu0
        %445 = vmatpush.bf16.msra.mxu0 %v392
        %446 = vmatpush.bf16.msra.mxu0 %v389
        %447 = vmatpush.bf16.msra.mxu0 %v386
        %448 = vmatpush.bf16.msra.mxu0 %v383
        %449 = vmatpush.bf16.msra.mxu0 %v380
        %450 = vmatpush.bf16.msra.mxu0 %v377
        %451 = vmatpush.bf16.msra.mxu0 %v374
        %452 = vmatpush.bf16.msra.mxu0 %v371
        %453 = vmatmul.bf16.gmra.mxu0 %v288
        %v454 = vpop.f32.mrf.mxu0
        %v455 = vadd.f32 %v276, %v454
        %v456 = vpop.f32.mrf.mxu0
        %v457 = vadd.f32 %v276, %v456
        %458 = vdwg.mxu0
        %v459 = vadd.f32 %v282, %v427
        %v460 = vadd.f32 %v285, %v429
        %v461 = vxor.u32 %v459, 2147483648
        %v462 = vxor.u32 %v460, 2147483648
        %v463 = vmul.f32 %v461, 1.442695
        %v464 = vpow.pop %v463
        %v465 = vmul.f32 %v462, 1.442695
        %v466 = vpow.pop %v465
        %v467 = vadd.f32 %v464, 1.0
        %v468 = vadd.f32 %v466, 1.0
        %v469 = vrcp.pop %v467
        %v470 = vmul.f32 %v467, %v469
        %v471 = vsub.f32 1.0, %v470
        %v472 = vmul.f32 %v469, %v471
        %v473 = vadd.f32 %v469, %v472
        %vm474 = vweird.f32 %v467
        %vm475 = vweird.f32 %v469
        %vm476 = vmor %vm474, %vm475
        %v477 = vsel %vm476, %v469, %v473
        %v478 = vand.u32 2147483647, %v467
        %vm479 = vcmp.eq.f32.partialorder %v478, 8.507059e+37
        %v480 = vand.u32 %v467, 2147483648
        %v481 = vor.u32 1.1754944e-38, %v480
        %v482 = vsel %vm479, %v481, %v477
        %v483 = vmul.f32 1.0, %v482
        %v484 = vrcp.pop %v468
        %v485 = vmul.f32 %v468, %v484
        %v486 = vsub.f32 1.0, %v485
        %v487 = vmul.f32 %v484, %v486
        %v488 = vadd.f32 %v484, %v487
        %vm489 = vweird.f32 %v468
        %vm490 = vweird.f32 %v484
        %vm491 = vmor %vm489, %vm490
        %v492 = vsel %vm491, %v484, %v488
        %v493 = vand.u32 2147483647, %v468
        %vm494 = vcmp.eq.f32.partialorder %v493, 8.507059e+37
        %v495 = vand.u32 %v468, 2147483648
        %v496 = vor.u32 1.1754944e-38, %v495
        %v497 = vsel %vm494, %v496, %v492
        %v498 = vmul.f32 1.0, %v497
        %v499 = vadd.f32 %v283, %v441
        %v500 = vadd.f32 %v286, %v443
        %v501 = vxor.u32 %v499, 2147483648
        %v502 = vxor.u32 %v500, 2147483648
        %v503 = vmul.f32 %v501, 1.442695
        %v504 = vpow.pop %v503
        %v505 = vmul.f32 %v502, 1.442695
        %v506 = vpow.pop %v505
        %v507 = vadd.f32 %v504, 1.0
        %v508 = vadd.f32 %v506, 1.0
        %v509 = vrcp.pop %v507
        %v510 = vmul.f32 %v507, %v509
        %v511 = vsub.f32 1.0, %v510
        %v512 = vmul.f32 %v509, %v511
        %v513 = vadd.f32 %v509, %v512
        %vm514 = vweird.f32 %v507
        %vm515 = vweird.f32 %v509
        %vm516 = vmor %vm514, %vm515
        %v517 = vsel %vm516, %v509, %v513
        %v518 = vand.u32 2147483647, %v507
        %vm519 = vcmp.eq.f32.partialorder %v518, 8.507059e+37
        %v520 = vand.u32 %v507, 2147483648
        %v521 = vor.u32 1.1754944e-38, %v520
        %v522 = vsel %vm519, %v521, %v517
        %v523 = vmul.f32 1.0, %v522
        %v524 = vrcp.pop %v508
        %v525 = vmul.f32 %v508, %v524
        %v526 = vsub.f32 1.0, %v525
        %v527 = vmul.f32 %v524, %v526
        %v528 = vadd.f32 %v524, %v527
        %vm529 = vweird.f32 %v508
        %vm530 = vweird.f32 %v524
        %vm531 = vmor %vm529, %vm530
        %v532 = vsel %vm531, %v524, %v528
        %v533 = vand.u32 2147483647, %v508
        %vm534 = vcmp.eq.f32.partialorder %v533, 8.507059e+37
        %v535 = vand.u32 %v508, 2147483648
        %v536 = vor.u32 1.1754944e-38, %v535
        %v537 = vsel %vm534, %v536, %v532
        %v538 = vmul.f32 1.0, %v537
        %v539 = vmul.f32 %v483, %v455
        %v540 = vmul.f32 %v498, %v457
        %v541 = vadd.f32 %v284, %v539
        %v542 = vadd.f32 %v287, %v540
        %v543 = vtanh.pop %v541
        %v544 = vtanh.pop %v542
        %v545 = vsub.f32 %v280, %v543
        %v546 = vsub.f32 %v281, %v544
        %v547 = vmul.f32 %v523, %v545
        %v548 = vmul.f32 %v538, %v546
        %v549 = vadd.f32 %v543, %v547
        %v550 = vadd.f32 %v544, %v548
        %551 = vst [vmem:[%s230] sm:$0xff] %v549
        %552 = vst [vmem:[%s230 + $0x8] sm:$0xff] %v550
        %s553 = scalar_lea.vmem %s223, 48
        %v554 = vld [vmem:[%s553] sm:$0xff]
        %v555 = vld [vmem:[%s553 + $0x8] sm:$0xff]
        %v556 = vld [vmem:[%s553 + $0x10] sm:$0xff]
        %v557 = vld [vmem:[%s553 + $0x18] sm:$0xff]
        %v558 = vld [vmem:[%s553 + $0x20] sm:$0xff]
        %v559 = vld [vmem:[%s553 + $0x28] sm:$0xff]
        %v560 = vpack.c.bf16 %v550, %v549
        %561 = vmatpush.bf16.msra.mxu0 %v390
        %562 = vmatpush.bf16.msra.mxu0 %v387
        %563 = vmatpush.bf16.msra.mxu0 %v384
        %564 = vmatpush.bf16.msra.mxu0 %v381
        %565 = vmatpush.bf16.msra.mxu0 %v378
        %566 = vmatpush.bf16.msra.mxu0 %v375
        %567 = vmatpush.bf16.msra.mxu0 %v372
        %568 = vmatpush.bf16.msra.mxu0 %v369
        %569 = vmatmul.bf16.gmra.mxu0 %v560
        %v570 = vpop.f32.mrf.mxu0
        %v571 = vadd.f32 %v274, %v570
        %v572 = vpop.f32.mrf.mxu0
        %v573 = vadd.f32 %v274, %v572
        %574 = vdwg.mxu0
        %575 = vmatpush.bf16.msra.mxu0 %v391
        %576 = vmatpush.bf16.msra.mxu0 %v388
        %577 = vmatpush.bf16.msra.mxu0 %v385
        %578 = vmatpush.bf16.msra.mxu0 %v382
        %579 = vmatpush.bf16.msra.mxu0 %v379
        %580 = vmatpush.bf16.msra.mxu0 %v376
        %581 = vmatpush.bf16.msra.mxu0 %v373
        %582 = vmatpush.bf16.msra.mxu0 %v370
        %583 = vmatmul.bf16.gmra.mxu0 %v560
        %v584 = vpop.f32.mrf.mxu0
        %v585 = vadd.f32 %v275, %v584
        %v586 = vpop.f32.mrf.mxu0
        %v587 = vadd.f32 %v275, %v586
        %588 = vdwg.mxu0
        %589 = vmatpush.bf16.msra.mxu0 %v392
        %590 = vmatpush.bf16.msra.mxu0 %v389
        %591 = vmatpush.bf16.msra.mxu0 %v386
        %592 = vmatpush.bf16.msra.mxu0 %v383
        %593 = vmatpush.bf16.msra.mxu0 %v380
        %594 = vmatpush.bf16.msra.mxu0 %v377
        %595 = vmatpush.bf16.msra.mxu0 %v374
        %596 = vmatpush.bf16.msra.mxu0 %v371
        %597 = vmatmul.bf16.gmra.mxu0 %v560
        %v598 = vpop.f32.mrf.mxu0
        %v599 = vadd.f32 %v276, %v598
        %v600 = vpop.f32.mrf.mxu0
        %v601 = vadd.f32 %v276, %v600
        %602 = vdwg.mxu0
        %v603 = vadd.f32 %v554, %v571
        %v604 = vadd.f32 %v557, %v573
        %v605 = vxor.u32 %v603, 2147483648
        %v606 = vxor.u32 %v604, 2147483648
        %v607 = vmul.f32 %v605, 1.442695
        %v608 = vpow.pop %v607
        %v609 = vmul.f32 %v606, 1.442695
        %v610 = vpow.pop %v609
        %v611 = vadd.f32 %v608, 1.0
        %v612 = vadd.f32 %v610, 1.0
        %v613 = vrcp.pop %v611
        %v614 = vmul.f32 %v611, %v613
        %v615 = vsub.f32 1.0, %v614
        %v616 = vmul.f32 %v613, %v615
        %v617 = vadd.f32 %v613, %v616
        %vm618 = vweird.f32 %v611
        %vm619 = vweird.f32 %v613
        %vm620 = vmor %vm618, %vm619
        %v621 = vsel %vm620, %v613, %v617
        %v622 = vand.u32 2147483647, %v611
        %vm623 = vcmp.eq.f32.partialorder %v622, 8.507059e+37
        %v624 = vand.u32 %v611, 2147483648
        %v625 = vor.u32 1.1754944e-38, %v624
        %v626 = vsel %vm623, %v625, %v621
        %v627 = vmul.f32 1.0, %v626
        %v628 = vrcp.pop %v612
        %v629 = vmul.f32 %v612, %v628
        %v630 = vsub.f32 1.0, %v629
        %v631 = vmul.f32 %v628, %v630
        %v632 = vadd.f32 %v628, %v631
        %vm633 = vweird.f32 %v612
        %vm634 = vweird.f32 %v628
        %vm635 = vmor %vm633, %vm634
        %v636 = vsel %vm635, %v628, %v632
        %v637 = vand.u32 2147483647, %v612
        %vm638 = vcmp.eq.f32.partialorder %v637, 8.507059e+37
        %v639 = vand.u32 %v612, 2147483648
        %v640 = vor.u32 1.1754944e-38, %v639
        %v641 = vsel %vm638, %v640, %v636
        %v642 = vmul.f32 1.0, %v641
        %v643 = vadd.f32 %v555, %v585
        %v644 = vadd.f32 %v558, %v587
        %v645 = vxor.u32 %v643, 2147483648
        %v646 = vxor.u32 %v644, 2147483648
        %v647 = vmul.f32 %v645, 1.442695
        %v648 = vpow.pop %v647
        %v649 = vmul.f32 %v646, 1.442695
        %v650 = vpow.pop %v649
        %v651 = vadd.f32 %v648, 1.0
        %v652 = vadd.f32 %v650, 1.0
        %v653 = vrcp.pop %v651
        %v654 = vmul.f32 %v651, %v653
        %v655 = vsub.f32 1.0, %v654
        %v656 = vmul.f32 %v653, %v655
        %v657 = vadd.f32 %v653, %v656
        %vm658 = vweird.f32 %v651
        %vm659 = vweird.f32 %v653
        %vm660 = vmor %vm658, %vm659
        %v661 = vsel %vm660, %v653, %v657
        %v662 = vand.u32 2147483647, %v651
        %vm663 = vcmp.eq.f32.partialorder %v662, 8.507059e+37
        %v664 = vand.u32 %v651, 2147483648
        %v665 = vor.u32 1.1754944e-38, %v664
        %v666 = vsel %vm663, %v665, %v661
        %v667 = vmul.f32 1.0, %v666
        %v668 = vrcp.pop %v652
        %v669 = vmul.f32 %v652, %v668
        %v670 = vsub.f32 1.0, %v669
        %v671 = vmul.f32 %v668, %v670
        %v672 = vadd.f32 %v668, %v671
        %vm673 = vweird.f32 %v652
        %vm674 = vweird.f32 %v668
        %vm675 = vmor %vm673, %vm674
        %v676 = vsel %vm675, %v668, %v672
        %v677 = vand.u32 2147483647, %v652
        %vm678 = vcmp.eq.f32.partialorder %v677, 8.507059e+37
        %v679 = vand.u32 %v652, 2147483648
        %v680 = vor.u32 1.1754944e-38, %v679
        %v681 = vsel %vm678, %v680, %v676
        %v682 = vmul.f32 1.0, %v681
        %v683 = vmul.f32 %v627, %v599
        %v684 = vmul.f32 %v642, %v601
        %v685 = vadd.f32 %v556, %v683
        %v686 = vadd.f32 %v559, %v684
        %v687 = vtanh.pop %v685
        %v688 = vtanh.pop %v686
        %v689 = vsub.f32 %v549, %v687
        %v690 = vsub.f32 %v550, %v688
        %v691 = vmul.f32 %v667, %v689
        %v692 = vmul.f32 %v682, %v690
        %v693 = vadd.f32 %v687, %v691
        %v694 = vadd.f32 %v688, %v692
        %s695 = scalar_lea.vmem %s230, 16
        %696 = vst [vmem:[%s695] sm:$0xff] %v693
        %697 = vst [vmem:[%s695 + $0x8] sm:$0xff] %v694
        %s698 = scalar_lea.vmem %s223, 96
        %v699 = vld [vmem:[%s698] sm:$0xff]
        %v700 = vld [vmem:[%s698 + $0x8] sm:$0xff]
        %v701 = vld [vmem:[%s698 + $0x10] sm:$0xff]
        %v702 = vld [vmem:[%s698 + $0x18] sm:$0xff]
        %v703 = vld [vmem:[%s698 + $0x20] sm:$0xff]
        %v704 = vld [vmem:[%s698 + $0x28] sm:$0xff]
        %v705 = vpack.c.bf16 %v694, %v693
        %706 = vmatpush.bf16.msra.mxu0 %v390
        %707 = vmatpush.bf16.msra.mxu0 %v387
        %708 = vmatpush.bf16.msra.mxu0 %v384
        %709 = vmatpush.bf16.msra.mxu0 %v381
        %710 = vmatpush.bf16.msra.mxu0 %v378
        %711 = vmatpush.bf16.msra.mxu0 %v375
        %712 = vmatpush.bf16.msra.mxu0 %v372
        %713 = vmatpush.bf16.msra.mxu0 %v369
        %714 = vmatmul.bf16.gmra.mxu0 %v705
        %v715 = vpop.f32.mrf.mxu0
        %v716 = vadd.f32 %v274, %v715
        %v717 = vpop.f32.mrf.mxu0
        %v718 = vadd.f32 %v274, %v717
        %719 = vdwg.mxu0
        %720 = vmatpush.bf16.msra.mxu0 %v391
        %721 = vmatpush.bf16.msra.mxu0 %v388
        %722 = vmatpush.bf16.msra.mxu0 %v385
        %723 = vmatpush.bf16.msra.mxu0 %v382
        %724 = vmatpush.bf16.msra.mxu0 %v379
        %725 = vmatpush.bf16.msra.mxu0 %v376
        %726 = vmatpush.bf16.msra.mxu0 %v373
        %727 = vmatpush.bf16.msra.mxu0 %v370
        %728 = vmatmul.bf16.gmra.mxu0 %v705
        %v729 = vpop.f32.mrf.mxu0
        %v730 = vadd.f32 %v275, %v729
        %v731 = vpop.f32.mrf.mxu0
        %v732 = vadd.f32 %v275, %v731
        %733 = vdwg.mxu0
        %734 = vmatpush.bf16.msra.mxu0 %v392
        %735 = vmatpush.bf16.msra.mxu0 %v389
        %736 = vmatpush.bf16.msra.mxu0 %v386
        %737 = vmatpush.bf16.msra.mxu0 %v383
        %738 = vmatpush.bf16.msra.mxu0 %v380
        %739 = vmatpush.bf16.msra.mxu0 %v377
        %740 = vmatpush.bf16.msra.mxu0 %v374
        %741 = vmatpush.bf16.msra.mxu0 %v371
        %742 = vmatmul.bf16.gmra.mxu0 %v705
        %v743 = vpop.f32.mrf.mxu0
        %v744 = vadd.f32 %v276, %v743
        %v745 = vpop.f32.mrf.mxu0
        %v746 = vadd.f32 %v276, %v745
        %747 = vdwg.mxu0
        %v748 = vadd.f32 %v699, %v716
        %v749 = vadd.f32 %v702, %v718
        %v750 = vxor.u32 %v748, 2147483648
        %v751 = vxor.u32 %v749, 2147483648
        %v752 = vmul.f32 %v750, 1.442695
        %v753 = vpow.pop %v752
        %v754 = vmul.f32 %v751, 1.442695
        %v755 = vpow.pop %v754
        %v756 = vadd.f32 %v753, 1.0
        %v757 = vadd.f32 %v755, 1.0
        %v758 = vrcp.pop %v756
        %v759 = vmul.f32 %v756, %v758
        %v760 = vsub.f32 1.0, %v759
        %v761 = vmul.f32 %v758, %v760
        %v762 = vadd.f32 %v758, %v761
        %vm763 = vweird.f32 %v756
        %vm764 = vweird.f32 %v758
        %vm765 = vmor %vm763, %vm764
        %v766 = vsel %vm765, %v758, %v762
        %v767 = vand.u32 2147483647, %v756
        %vm768 = vcmp.eq.f32.partialorder %v767, 8.507059e+37
        %v769 = vand.u32 %v756, 2147483648
        %v770 = vor.u32 1.1754944e-38, %v769
        %v771 = vsel %vm768, %v770, %v766
        %v772 = vmul.f32 1.0, %v771
        %v773 = vrcp.pop %v757
        %v774 = vmul.f32 %v757, %v773
        %v775 = vsub.f32 1.0, %v774
        %v776 = vmul.f32 %v773, %v775
        %v777 = vadd.f32 %v773, %v776
        %vm778 = vweird.f32 %v757
        %vm779 = vweird.f32 %v773
        %vm780 = vmor %vm778, %vm779
        %v781 = vsel %vm780, %v773, %v777
        %v782 = vand.u32 2147483647, %v757
        %vm783 = vcmp.eq.f32.partialorder %v782, 8.507059e+37
        %v784 = vand.u32 %v757, 2147483648
        %v785 = vor.u32 1.1754944e-38, %v784
        %v786 = vsel %vm783, %v785, %v781
        %v787 = vmul.f32 1.0, %v786
        %v788 = vadd.f32 %v700, %v730
        %v789 = vadd.f32 %v703, %v732
        %v790 = vxor.u32 %v788, 2147483648
        %v791 = vxor.u32 %v789, 2147483648
        %v792 = vmul.f32 %v790, 1.442695
        %v793 = vpow.pop %v792
        %v794 = vmul.f32 %v791, 1.442695
        %v795 = vpow.pop %v794
        %v796 = vadd.f32 %v793, 1.0
        %v797 = vadd.f32 %v795, 1.0
        %v798 = vrcp.pop %v796
        %v799 = vmul.f32 %v796, %v798
        %v800 = vsub.f32 1.0, %v799
        %v801 = vmul.f32 %v798, %v800
        %v802 = vadd.f32 %v798, %v801
        %vm803 = vweird.f32 %v796
        %vm804 = vweird.f32 %v798
        %vm805 = vmor %vm803, %vm804
        %v806 = vsel %vm805, %v798, %v802
        %v807 = vand.u32 2147483647, %v796
        %vm808 = vcmp.eq.f32.partialorder %v807, 8.507059e+37
        %v809 = vand.u32 %v796, 2147483648
        %v810 = vor.u32 1.1754944e-38, %v809
        %v811 = vsel %vm808, %v810, %v806
        %v812 = vmul.f32 1.0, %v811
        %v813 = vrcp.pop %v797
        %v814 = vmul.f32 %v797, %v813
        %v815 = vsub.f32 1.0, %v814
        %v816 = vmul.f32 %v813, %v815
        %v817 = vadd.f32 %v813, %v816
        %vm818 = vweird.f32 %v797
        %vm819 = vweird.f32 %v813
        %vm820 = vmor %vm818, %vm819
        %v821 = vsel %vm820, %v813, %v817
        %v822 = vand.u32 2147483647, %v797
        %vm823 = vcmp.eq.f32.partialorder %v822, 8.507059e+37
        %v824 = vand.u32 %v797, 2147483648
        %v825 = vor.u32 1.1754944e-38, %v824
        %v826 = vsel %vm823, %v825, %v821
        %v827 = vmul.f32 1.0, %v826
        %v828 = vmul.f32 %v772, %v744
        %v829 = vmul.f32 %v787, %v746
        %v830 = vadd.f32 %v701, %v828
        %v831 = vadd.f32 %v704, %v829
        %v832 = vtanh.pop %v830
        %v833 = vtanh.pop %v831
        %v834 = vsub.f32 %v693, %v832
        %v835 = vsub.f32 %v694, %v833
        %v836 = vmul.f32 %v812, %v834
        %v837 = vmul.f32 %v827, %v835
        %v838 = vadd.f32 %v832, %v836
        %v839 = vadd.f32 %v833, %v837
        %s840 = scalar_lea.vmem %s230, 32
        %841 = vst [vmem:[%s840] sm:$0xff] %v838
        %842 = vst [vmem:[%s840 + $0x8] sm:$0xff] %v839
        %s843 = scalar_lea.vmem %s223, 144
        %v844 = vld [vmem:[%s843] sm:$0xff]
        %v845 = vld [vmem:[%s843 + $0x8] sm:$0xff]
        %v846 = vld [vmem:[%s843 + $0x10] sm:$0xff]
        %v847 = vld [vmem:[%s843 + $0x18] sm:$0xff]
        %v848 = vld [vmem:[%s843 + $0x20] sm:$0xff]
        %v849 = vld [vmem:[%s843 + $0x28] sm:$0xff]
        %v850 = vpack.c.bf16 %v839, %v838
        %851 = vmatpush.bf16.msra.mxu0 %v390
        %852 = vmatpush.bf16.msra.mxu0 %v387
        %853 = vmatpush.bf16.msra.mxu0 %v384
        %854 = vmatpush.bf16.msra.mxu0 %v381
        %855 = vmatpush.bf16.msra.mxu0 %v378
        %856 = vmatpush.bf16.msra.mxu0 %v375
        %857 = vmatpush.bf16.msra.mxu0 %v372
        %858 = vmatpush.bf16.msra.mxu0 %v369
        %859 = vmatmul.bf16.gmra.mxu0 %v850
        %v860 = vpop.f32.mrf.mxu0
        %v861 = vadd.f32 %v274, %v860
        %v862 = vpop.f32.mrf.mxu0
        %v863 = vadd.f32 %v274, %v862
        %864 = vdwg.mxu0
        %865 = vmatpush.bf16.msra.mxu0 %v391
        %866 = vmatpush.bf16.msra.mxu0 %v388
        %867 = vmatpush.bf16.msra.mxu0 %v385
        %868 = vmatpush.bf16.msra.mxu0 %v382
        %869 = vmatpush.bf16.msra.mxu0 %v379
        %870 = vmatpush.bf16.msra.mxu0 %v376
        %871 = vmatpush.bf16.msra.mxu0 %v373
        %872 = vmatpush.bf16.msra.mxu0 %v370
        %873 = vmatmul.bf16.gmra.mxu0 %v850
        %v874 = vpop.f32.mrf.mxu0
        %v875 = vadd.f32 %v275, %v874
        %v876 = vpop.f32.mrf.mxu0
        %v877 = vadd.f32 %v275, %v876
        %878 = vdwg.mxu0
        %879 = vmatpush.bf16.msra.mxu0 %v392
        %880 = vmatpush.bf16.msra.mxu0 %v389
        %881 = vmatpush.bf16.msra.mxu0 %v386
        %882 = vmatpush.bf16.msra.mxu0 %v383
        %883 = vmatpush.bf16.msra.mxu0 %v380
        %884 = vmatpush.bf16.msra.mxu0 %v377
        %885 = vmatpush.bf16.msra.mxu0 %v374
        %886 = vmatpush.bf16.msra.mxu0 %v371
        %887 = vmatmul.bf16.gmra.mxu0 %v850
        %v888 = vpop.f32.mrf.mxu0
        %v889 = vadd.f32 %v276, %v888
        %v890 = vpop.f32.mrf.mxu0
        %v891 = vadd.f32 %v276, %v890
        %892 = vdwg.mxu0
        %v893 = vadd.f32 %v844, %v861
        %v894 = vadd.f32 %v847, %v863
        %v895 = vxor.u32 %v893, 2147483648
        %v896 = vxor.u32 %v894, 2147483648
        %v897 = vmul.f32 %v895, 1.442695
        %v898 = vpow.pop %v897
        %v899 = vmul.f32 %v896, 1.442695
        %v900 = vpow.pop %v899
        %v901 = vadd.f32 %v898, 1.0
        %v902 = vadd.f32 %v900, 1.0
        %v903 = vrcp.pop %v901
        %v904 = vmul.f32 %v901, %v903
        %v905 = vsub.f32 1.0, %v904
        %v906 = vmul.f32 %v903, %v905
        %v907 = vadd.f32 %v903, %v906
        %vm908 = vweird.f32 %v901
        %vm909 = vweird.f32 %v903
        %vm910 = vmor %vm908, %vm909
        %v911 = vsel %vm910, %v903, %v907
        %v912 = vand.u32 2147483647, %v901
        %vm913 = vcmp.eq.f32.partialorder %v912, 8.507059e+37
        %v914 = vand.u32 %v901, 2147483648
        %v915 = vor.u32 1.1754944e-38, %v914
        %v916 = vsel %vm913, %v915, %v911
        %v917 = vmul.f32 1.0, %v916
        %v918 = vrcp.pop %v902
        %v919 = vmul.f32 %v902, %v918
        %v920 = vsub.f32 1.0, %v919
        %v921 = vmul.f32 %v918, %v920
        %v922 = vadd.f32 %v918, %v921
        %vm923 = vweird.f32 %v902
        %vm924 = vweird.f32 %v918
        %vm925 = vmor %vm923, %vm924
        %v926 = vsel %vm925, %v918, %v922
        %v927 = vand.u32 2147483647, %v902
        %vm928 = vcmp.eq.f32.partialorder %v927, 8.507059e+37
        %v929 = vand.u32 %v902, 2147483648
        %v930 = vor.u32 1.1754944e-38, %v929
        %v931 = vsel %vm928, %v930, %v926
        %v932 = vmul.f32 1.0, %v931
        %v933 = vadd.f32 %v845, %v875
        %v934 = vadd.f32 %v848, %v877
        %v935 = vxor.u32 %v933, 2147483648
        %v936 = vxor.u32 %v934, 2147483648
        %v937 = vmul.f32 %v935, 1.442695
        %v938 = vpow.pop %v937
        %v939 = vmul.f32 %v936, 1.442695
        %v940 = vpow.pop %v939
        %v941 = vadd.f32 %v938, 1.0
        %v942 = vadd.f32 %v940, 1.0
        %v943 = vrcp.pop %v941
        %v944 = vmul.f32 %v941, %v943
        %v945 = vsub.f32 1.0, %v944
        %v946 = vmul.f32 %v943, %v945
        %v947 = vadd.f32 %v943, %v946
        %vm948 = vweird.f32 %v941
        %vm949 = vweird.f32 %v943
        %vm950 = vmor %vm948, %vm949
        %v951 = vsel %vm950, %v943, %v947
        %v952 = vand.u32 2147483647, %v941
        %vm953 = vcmp.eq.f32.partialorder %v952, 8.507059e+37
        %v954 = vand.u32 %v941, 2147483648
        %v955 = vor.u32 1.1754944e-38, %v954
        %v956 = vsel %vm953, %v955, %v951
        %v957 = vmul.f32 1.0, %v956
        %v958 = vrcp.pop %v942
        %v959 = vmul.f32 %v942, %v958
        %v960 = vsub.f32 1.0, %v959
        %v961 = vmul.f32 %v958, %v960
        %v962 = vadd.f32 %v958, %v961
        %vm963 = vweird.f32 %v942
        %vm964 = vweird.f32 %v958
        %vm965 = vmor %vm963, %vm964
        %v966 = vsel %vm965, %v958, %v962
        %v967 = vand.u32 2147483647, %v942
        %vm968 = vcmp.eq.f32.partialorder %v967, 8.507059e+37
        %v969 = vand.u32 %v942, 2147483648
        %v970 = vor.u32 1.1754944e-38, %v969
        %v971 = vsel %vm968, %v970, %v966
        %v972 = vmul.f32 1.0, %v971
        %v973 = vmul.f32 %v917, %v889
        %v974 = vmul.f32 %v932, %v891
        %v975 = vadd.f32 %v846, %v973
        %v976 = vadd.f32 %v849, %v974
        %v977 = vtanh.pop %v975
        %v978 = vtanh.pop %v976
        %v979 = vsub.f32 %v838, %v977
        %v980 = vsub.f32 %v839, %v978
        %v981 = vmul.f32 %v957, %v979
        %v982 = vmul.f32 %v972, %v980
        %v983 = vadd.f32 %v977, %v981
        %v984 = vadd.f32 %v978, %v982
        %s985 = scalar_lea.vmem %s230, 48
        %986 = vst [vmem:[%s985] sm:$0xff] %v983
        %987 = vst [vmem:[%s985 + $0x8] sm:$0xff] %v984
        %988 = vst [vmem:[#allocation2] sm:$0xff] %v983
        %989 = vst [vmem:[#allocation2 + $0x8] sm:$0xff] %v984
        %p990 = scmp.eq.s32.totalorder %s18, 1
        // Predicated region
        $region41: #{seq2seq_forward.8} parent=35 // pred_check
          %p991 = pneg %p990
        $region42: #{seq2seq_forward.8} parent=35 // pred_check_branch
          %993 = sbr.rel (%p991) target = $region44
        $region43: #{seq2seq_forward.8} parent=35 // pred_region
          %994 = vst [vmem:[#allocation3] sm:$0xff] %v983
          %995 = vst [vmem:[#allocation3 + $0x8] sm:$0xff] %v984
        $region44: #{seq2seq_forward.8} parent=35 // pred_fallthru
          _
        %s996 = smul.u32 4, %s18
        %p997 = scmp.lt.s32.totalorder %s996, 7
        %s998 = scalar_select %p997, %s996, 7
        %s999 = smul.addr %s998, 2
        %s1000 = smul.addr %s999, 8
        %s1001 = scalar_lea.vmem %s4, %s1000
        // Predicated region
        $region45: #{seq2seq_forward.8} parent=35 // pred_check
          %p1002 = pneg %p125
        $region46: #{seq2seq_forward.8} parent=35 // pred_check_branch
          %1004 = sbr.rel (%p1002) target = $region48
        $region47: #{seq2seq_forward.8} parent=35 // pred_region
          %s1005 = smul.u32 4, %s18
        $region48: #{seq2seq_forward.8} parent=35 // pred_fallthru
          _
        // Predicated region
        $region49: #{seq2seq_forward.8} parent=35 // pred_check
          %p1006 = pneg %p146
        $region50: #{seq2seq_forward.8} parent=35 // pred_check_branch
          %1008 = sbr.rel (%p1006) target = $region52
        $region51: #{seq2seq_forward.8} parent=35 // pred_region
          %1010 = vsyncadd [#allocation4], 0
          %s1011 = sshll.u32 [#allocation3], 4
          %s1012 = int_to_ptr.vmem [resolvable:$true] %s1011
          %s1013 = sshll.u32 %s5, 4
          %s1014 = int_to_ptr.hbm [resolvable:$true] %s1013
          %1019 = dma.vmem_to_hbm [thread:$0]  %s1012, 256, %s1014, [#allocation4], 128, 128, 8
        $region52: #{seq2seq_forward.8} parent=35 // pred_fallthru
          _
        // Predicated region
        $region53: #{seq2seq_forward.8} parent=35 // pred_check
          %p1020 = pneg %p146
        $region54: #{seq2seq_forward.8} parent=35 // pred_check_branch
          %1022 = sbr.rel (%p1020) target = $region56
        $region55: #{seq2seq_forward.8} parent=35 // pred_region
          %1024 = dma.done [#allocation4], 256
        $region56: #{seq2seq_forward.8} parent=35 // pred_fallthru
          _
      $region36: #{seq2seq_forward.8} parent=5 // pred_fallthru
        _
      %p1025 = scmp.le.s32.totalorder 2, %s13
      // Predicated region
      $region57: #{seq2seq_forward.8} parent=5 // pred_check
        %p1026 = pneg %p1025
      $region58: #{seq2seq_forward.8} parent=5 // pred_check_branch
        %1028 = sbr.rel (%p1026) target = $region60
      $region59: #{seq2seq_forward.8} parent=5 // pred_region
        %s1029 = ssub.s32 %s13, 2
        // Predicated region
        $region61: #{seq2seq_forward.8} parent=59 // pred_check
          %p1030 = pneg %p131
        $region62: #{seq2seq_forward.8} parent=59 // pred_check_branch
          %1032 = sbr.rel (%p1030) target = $region64
        $region63: #{seq2seq_forward.8} parent=59 // pred_region
          %s1033 = smul.u32 4, %s19
          %p1034 = scmp.lt.s32.totalorder %s1033, 7
          %s1035 = scalar_select %p1034, %s1033, 7
          %s1036 = smul.addr %s1035, 2
          %s1037 = smul.addr %s1036, 8
          %s1038 = scalar_lea.vmem %s4, %s1037
        $region64: #{seq2seq_forward.8} parent=59 // pred_fallthru
          _
      $region60: #{seq2seq_forward.8} parent=5 // pred_fallthru
        _
    $region6: #{seq2seq_forward.8} parent=1 // loop_footer
      %s17 = sadd.s32 1, %s13
    $region7: #{seq2seq_forward.8} parent=1 // loop_footer_branch
      %12 = sbr.rel target = $region3
    $region8: #{seq2seq_forward.8} parent=1 // loop_exit
      _
    %1039 = vsyncpa [#allocation4], 1
    %s1040 = scalar_lea.sflag [#allocation4], 1
    %1041 = vsyncpa %s1040, 1

// kernel: seq2seq_forward.9
$region0: #{seq2seq_forward.9}
  #allocation0 [shape = 'u32[]', space=smem, size = 0x4, offset = 0x4, fixed_abs, tag = 'smem constant byte address 0x4 - core index']
  #allocation1 [shape = 'u32[72,128]{1,0:T(1,128)}', space=vmem, size = 0x9000, scoped, tag = 'internal scratch']
  %s0 = inlined_call_operand.vmem [shape: bf16[16,8,128], index: 0, kind: input, shape index: {}]
  %s1 = inlined_call_operand.vmem [shape: bf16[16,8,128], index: 1, kind: input, shape index: {}]
  %s2 = inlined_call_operand.vmem [shape: bf16[256,128], index: 2, kind: input, shape index: {}]
  %s3 = inlined_call_operand.vmem [shape: bf16[128,128], index: 3, kind: input, shape index: {}]
  %s4 = inlined_call_operand.vmem [shape: f32[1,128], index: 4, kind: input, shape index: {}]
  %s5 = inlined_call_operand.hbm [shape: f32[16,8,128], index: 5, kind: output, shape index: {0}]
  %s6 = inlined_call_operand.vmem [shape: s32[16,8], index: 6, kind: output, shape index: {1}]
  %7 = xla_tuple %s5, %s6
  %s8 = sld [smem:[#allocation0]]
  $region61: #{seq2seq_forward.9} parent=0
    _
  %s10 = ssub.s32 1, %s8
  %s11 = scalar_select 0, %s10, %s8
  $region1: #{seq2seq_forward.9} parent=0
    #allocation2 [shape = 'u8[65536]{0}', space=vmem, size = 0x10000, scoped, tag = 'output window, operand 0']
    #allocation3 [shape = 's32[2]{0}', space=sflag, size = 0x8, scoped, tag = 'scoped memory for seq2seq_forward.9']
    %12 = vsyncpa [#allocation3], 0
    %s13 = scalar_lea.sflag [#allocation3], 1
    %14 = vsyncpa %s13, 0
    loop: start=0, step=1, limit=4
    $region2: #{seq2seq_forward.9} parent=1 // loop_pre_header
      _
    $region3: #{seq2seq_forward.9} parent=1 // loop_header
      %s16 = sphi 0, %s20
      %p17 = scmp.ge.s32.totalorder %s16, 4
      %s26 = sphi 0, %s28
      %s29 = sphi 0, %s26
      %s30 = sphi 0, %s29
      %s46 = sphi 0, %s30
      %s52 = sphi 0, %s54
      %s55 = sphi 0, %s52
      %s56 = sphi 0, %s55
      %s72 = sphi 0, %s56
      %s76 = sphi 0, %s76
      %s78 = sphi 0, %s76
      %s79 = sphi 0, %s78
      %s93 = sphi 0, %s79
      %s97 = sphi 0, %s97
      %s99 = sphi 0, %s97
      %s100 = sphi 0, %s99
      %s114 = sphi 0, %s100
      %s118 = sphi 0, %s118
      %s120 = sphi 0, %s118
      %s121 = sphi 0, %s120
      %s135 = sphi 0, %s121
      %s141 = sphi 0, %s143
      %s144 = sphi 0, %s141
      %s145 = sphi 0, %s144
      %s161 = sphi 0, %s145
      %s167 = sphi 0, %s169
      %s170 = sphi 0, %s167
      %s171 = sphi 0, %s170
      %s187 = sphi 0, %s171
    $region4: #{seq2seq_forward.9} parent=1 // loop_header_branch
      %19 = sbr.rel (%p17) target = $region8
    $region5: #{seq2seq_forward.9} parent=1 // loop_body
      %s21 = ssub.s32 %s16, 1
      %s22 = ssub.s32 %s16, 2
      %s23 = sadd.s32 %s16, 1
      %s24 = ssub.s32 %s16, %s23
      %p25 = scmp.eq.s32.totalorder %s24, 0
      %s27 = sadd.s32 %s26, 1
      %s28 = scalar_select %p25, %s26, %s27
      %p31 = pneg %p25
      %p32 = scmp.eq.s32.totalorder %s16, 1
      %p33 = por %p31, %p32
      %p34 = scmp.ne.s32.totalorder %s26, %s29
      %p35 = scmp.eq.s32.totalorder %s16, 0
      %p36 = por %p34, %p35
      %p37 = scmp.ne.s32.totalorder %s26, %s29
      %p38 = scmp.eq.s32.totalorder %s21, 1
      %p39 = por %p37, %p38
      %p40 = scmp.ne.s32.totalorder %s29, %s30
      %p41 = scmp.eq.s32.totalorder %s21, 0
      %p42 = por %p40, %p41
      %p43 = scmp.ne.s32.totalorder %s29, %s30
      %p44 = scmp.eq.s32.totalorder %s22, 1
      %p45 = por %p43, %p44
      %p47 = scmp.ne.s32.totalorder %s30, %s46
      %p48 = scmp.eq.s32.totalorder %s22, 0
      %p49 = por %p47, %p48
      %s50 = ssub.s32 %s16, %s23
      %p51 = scmp.eq.s32.totalorder %s50, 0
      %s53 = sadd.s32 %s52, 1
      %s54 = scalar_select %p51, %s52, %s53
      %p57 = pneg %p51
      %p58 = scmp.eq.s32.totalorder %s16, 1
      %p59 = por %p57, %p58
      %p60 = scmp.ne.s32.totalorder %s52, %s55
      %p61 = scmp.eq.s32.totalorder %s16, 0
      %p62 = por %p60, %p61
      %p63 = scmp.ne.s32.totalorder %s52, %s55
      %p64 = scmp.eq.s32.totalorder %s21, 1
      %p65 = por %p63, %p64
      %p66 = scmp.ne.s32.totalorder %s55, %s56
      %p67 = scmp.eq.s32.totalorder %s21, 0
      %p68 = por %p66, %p67
      %p69 = scmp.ne.s32.totalorder %s55, %s56
      %p70 = scmp.eq.s32.totalorder %s22, 1
      %p71 = por %p69, %p70
      %p73 = scmp.ne.s32.totalorder %s56, %s72
      %p74 = scmp.eq.s32.totalorder %s22, 0
      %p75 = por %p73, %p74
      %s77 = sadd.s32 %s76, 1
      %p80 = scmp.eq.s32.totalorder %s16, 1
      %p81 = scmp.ne.s32.totalorder %s76, %s78
      %p82 = scmp.eq.s32.totalorder %s16, 0
      %p83 = por %p81, %p82
      %p84 = scmp.ne.s32.totalorder %s76, %s78
      %p85 = scmp.eq.s32.totalorder %s21, 1
      %p86 = por %p84, %p85
      %p87 = scmp.ne.s32.totalorder %s78, %s79
      %p88 = scmp.eq.s32.totalorder %s21, 0
      %p89 = por %p87, %p88
      %p90 = scmp.ne.s32.totalorder %s78, %s79
      %p91 = scmp.eq.s32.totalorder %s22, 1
      %p92 = por %p90, %p91
      %p94 = scmp.ne.s32.totalorder %s79, %s93
      %p95 = scmp.eq.s32.totalorder %s22, 0
      %p96 = por %p94, %p95
      %s98 = sadd.s32 %s97, 1
      %p101 = scmp.eq.s32.totalorder %s16, 1
      %p102 = scmp.ne.s32.totalorder %s97, %s99
      %p103 = scmp.eq.s32.totalorder %s16, 0
      %p104 = por %p102, %p103
      %p105 = scmp.ne.s32.totalorder %s97, %s99
      %p106 = scmp.eq.s32.totalorder %s21, 1
      %p107 = por %p105, %p106
      %p108 = scmp.ne.s32.totalorder %s99, %s100
      %p109 = scmp.eq.s32.totalorder %s21, 0
      %p110 = por %p108, %p109
      %p111 = scmp.ne.s32.totalorder %s99, %s100
      %p112 = scmp.eq.s32.totalorder %s22, 1
      %p113 = por %p111, %p112
      %p115 = scmp.ne.s32.totalorder %s100, %s114
      %p116 = scmp.eq.s32.totalorder %s22, 0
      %p117 = por %p115, %p116
      %s119 = sadd.s32 %s118, 1
      %p122 = scmp.eq.s32.totalorder %s16, 1
      %p123 = scmp.ne.s32.totalorder %s118, %s120
      %p124 = scmp.eq.s32.totalorder %s16, 0
      %p125 = por %p123, %p124
      %p126 = scmp.ne.s32.totalorder %s118, %s120
      %p127 = scmp.eq.s32.totalorder %s21, 1
      %p128 = por %p126, %p127
      %p129 = scmp.ne.s32.totalorder %s120, %s121
      %p130 = scmp.eq.s32.totalorder %s21, 0
      %p131 = por %p129, %p130
      %p132 = scmp.ne.s32.totalorder %s120, %s121
      %p133 = scmp.eq.s32.totalorder %s22, 1
      %p134 = por %p132, %p133
      %p136 = scmp.ne.s32.totalorder %s121, %s135
      %p137 = scmp.eq.s32.totalorder %s22, 0
      %p138 = por %p136, %p137
      %s139 = ssub.s32 %s16, %s23
      %p140 = scmp.eq.s32.totalorder %s139, 0
      %s142 = sadd.s32 %s141, 1
      %s143 = scalar_select %p140, %s141, %s142
      %p146 = pneg %p140
      %p147 = scmp.eq.s32.totalorder %s16, 1
      %p148 = por %p146, %p147
      %p149 = scmp.ne.s32.totalorder %s141, %s144
      %p150 = scmp.eq.s32.totalorder %s16, 0
      %p151 = por %p149, %p150
      %p152 = scmp.ne.s32.totalorder %s141, %s144
      %p153 = scmp.eq.s32.totalorder %s21, 1
      %p154 = por %p152, %p153
      %p155 = scmp.ne.s32.totalorder %s144, %s145
      %p156 = scmp.eq.s32.totalorder %s21, 0
      %p157 = por %p155, %p156
      %p158 = scmp.ne.s32.totalorder %s144, %s145
      %p159 = scmp.eq.s32.totalorder %s22, 1
      %p160 = por %p158, %p159
      %p162 = scmp.ne.s32.totalorder %s145, %s161
      %p163 = scmp.eq.s32.totalorder %s22, 0
      %p164 = por %p162, %p163
      %s165 = ssub.s32 %s16, %s23
      %p166 = scmp.eq.s32.totalorder %s165, 0
      %s168 = sadd.s32 %s167, 1
      %s169 = scalar_select %p166, %s167, %s168
      %p172 = pneg %p166
      %p173 = scmp.eq.s32.totalorder %s16, 1
      %p174 = por %p172, %p173
      %p175 = scmp.ne.s32.totalorder %s167, %s170
      %p176 = scmp.eq.s32.totalorder %s16, 0
      %p177 = por %p175, %p176
      %p178 = scmp.ne.s32.totalorder %s167, %s170
      %p179 = scmp.eq.s32.totalorder %s21, 1
      %p180 = por %p178, %p179
      %p181 = scmp.ne.s32.totalorder %s170, %s171
      %p182 = scmp.eq.s32.totalorder %s21, 0
      %p183 = por %p181, %p182
      %p184 = scmp.ne.s32.totalorder %s170, %s171
      %p185 = scmp.eq.s32.totalorder %s22, 1
      %p186 = por %p184, %p185
      %p188 = scmp.ne.s32.totalorder %s171, %s187
      %p189 = scmp.eq.s32.totalorder %s22, 0
      %p190 = por %p188, %p189
      %p191 = scmp.le.s32.totalorder 1, %s16
      %p192 = scmp.lt.s32.totalorder %s16, 3
      %p193 = pnand %p191, %p192
      %p194 = pneg %p193
      // Predicated region
      $region9: #{seq2seq_forward.9} parent=5 // pred_check
        _
      $region10: #{seq2seq_forward.9} parent=5 // pred_check_branch
        %196 = sbr.rel (%p193) target = $region12
      $region11: #{seq2seq_forward.9} parent=5 // pred_region
        %s197 = ssub.s32 %s16, 1
        // Predicated region
        $region13: #{seq2seq_forward.9} parent=11 // pred_check
          %p198 = pneg %p89
        $region14: #{seq2seq_forward.9} parent=11 // pred_check_branch
          %200 = sbr.rel (%p198) target = $region16
        $region15: #{seq2seq_forward.9} parent=11 // pred_region
          _
        $region16: #{seq2seq_forward.9} parent=11 // pred_fallthru
          _
        // Predicated region
        $region17: #{seq2seq_forward.9} parent=11 // pred_check
          %p201 = pneg %p110
        $region18: #{seq2seq_forward.9} parent=11 // pred_check_branch
          %203 = sbr.rel (%p201) target = $region20
        $region19: #{seq2seq_forward.9} parent=11 // pred_region
          _
        $region20: #{seq2seq_forward.9} parent=11 // pred_fallthru
          _
        // Predicated region
        $region21: #{seq2seq_forward.9} parent=11 // pred_check
          %p204 = pneg %p131
        $region22: #{seq2seq_forward.9} parent=11 // pred_check_branch
          %206 = sbr.rel (%p204) target = $region24
        $region23: #{seq2seq_forward.9} parent=11 // pred_region
          _
        $region24: #{seq2seq_forward.9} parent=11 // pred_fallthru
          _
      $region12: #{seq2seq_forward.9} parent=5 // pred_fallthru
        _
      %p207 = scmp.lt.s32.totalorder %s16, 2
      // Predicated region
      $region25: #{seq2seq_forward.9} parent=5 // pred_check
        %p208 = pneg %p207
      $region26: #{seq2seq_forward.9} parent=5 // pred_check_branch
        %210 = sbr.rel (%p208) target = $region28
      $region27: #{seq2seq_forward.9} parent=5 // pred_region
        // Predicated region
        $region29: #{seq2seq_forward.9} parent=27 // pred_check
          %p211 = pneg %p36
        $region30: #{seq2seq_forward.9} parent=27 // pred_check_branch
          %213 = sbr.rel (%p211) target = $region32
        $region31: #{seq2seq_forward.9} parent=27 // pred_region
          %s214 = smul.u32 8, %s16
          %p215 = scmp.lt.s32.totalorder %s214, 15
          %s216 = scalar_select %p215, %s214, 15
          %s217 = smul.addr %s216, 4
          %s218 = scalar_lea.vmem %s0, %s217
          %s219 = smul.u32 8, %s16
        $region32: #{seq2seq_forward.9} parent=27 // pred_fallthru
          _
        // Predicated region
        $region33: #{seq2seq_forward.9} parent=27 // pred_check
          %p220 = pneg %p62
        $region34: #{seq2seq_forward.9} parent=27 // pred_check_branch
          %222 = sbr.rel (%p220) target = $region36
        $region35: #{seq2seq_forward.9} parent=27 // pred_region
          %s223 = smul.u32 8, %s16
          %p224 = scmp.lt.s32.totalorder %s223, 15
          %s225 = scalar_select %p224, %s223, 15
          %s226 = smul.addr %s225, 4
          %s227 = scalar_lea.vmem %s1, %s226
          %s228 = smul.u32 8, %s16
        $region36: #{seq2seq_forward.9} parent=27 // pred_fallthru
          _
      $region28: #{seq2seq_forward.9} parent=5 // pred_fallthru
        _
      %p229 = scmp.le.s32.totalorder 1, %s16
      %p230 = scmp.lt.s32.totalorder %s16, 3
      %p231 = pnand %p229, %p230
      %p232 = pneg %p231
      // Predicated region
      $region37: #{seq2seq_forward.9} parent=5 // pred_check
        _
      $region38: #{seq2seq_forward.9} parent=5 // pred_check_branch
        %234 = sbr.rel (%p231) target = $region40
      $region39: #{seq2seq_forward.9} parent=5 // pred_region
        %s235 = ssub.s32 %s16, 1
        %s236 = smul.u32 8, %s21
        %p237 = scmp.lt.s32.totalorder %s236, 15
        %s238 = scalar_select %p237, %s236, 15
        %s239 = smul.addr %s238, 4
        %s240 = scalar_lea.vmem %s0, %s239
        %p241 = pneg %p42
        %p242 = pneg %p39
        %s243 = smul.u32 8, %s21
        %p244 = scmp.lt.s32.totalorder %s243, 15
        %s245 = scalar_select %p244, %s243, 15
        %s246 = smul.addr %s245, 4
        %s247 = scalar_lea.vmem %s1, %s246
        %p248 = pneg %p68
        %p249 = pneg %p65
        %p250 = pneg %p89
        %p251 = pneg %p86
        %p252 = pneg %p110
        %p253 = pneg %p107
        %p254 = pneg %p131
        %p255 = pneg %p128
        %p256 = pneg %p157
        %p257 = pneg %p154
        %s258 = sand.u32 %s144, 1
        %s259 = scalar_lea.sflag [#allocation3], %s258
        %s260 = sand.u32 %s144, 1
        %s261 = smul.addr %s260, 64
        %s262 = scalar_lea.vmem [#allocation2], %s261
        %p263 = pneg %p183
        %p264 = pneg %p180
        %p265 = scmp.lt.s32.totalorder %s21, 1
        %s266 = scalar_select %p265, %s21, 1
        %s267 = smul.addr %s266, 8
        %s268 = scalar_lea.vmem %s6, %s267
        %s269 = smul.u32 8, %s21
        %p270 = scmp.lt.s32.totalorder %s269, 15
        %s271 = scalar_select %p270, %s269, 15
        %s272 = smul.addr %s271, 4
        %s273 = scalar_lea.vmem %s0, %s272
        %s274 = smul.u32 8, %s21
        %s275 = smul.u32 8, %s21
        %p276 = scmp.lt.s32.totalorder %s275, 15
        %s277 = scalar_select %p276, %s275, 15
        %s278 = smul.addr %s277, 4
        %s279 = scalar_lea.vmem %s1, %s278
        %s280 = smul.u32 8, %s21
        %s281 = smul.u32 8, %s21
        %p282 = scmp.lt.s32.totalorder %s21, 1
        %s283 = scalar_select %p282, %s21, 1
        %s284 = smul.addr %s283, 8
        %s285 = scalar_lea.vmem %s6, %s284
        %v287 = vld [vmem:[%s273] sm:$0xf]
        %v288 = vld [vmem:[%s273 + $0x4] sm:$0xf]
        %v289 = vld [vmem:[%s273 + $0x8] sm:$0xf]
        %v290 = vld [vmem:[%s273 + $0xc] sm:$0xf]
        %v291 = vld [vmem:[%s273 + $0x10] sm:$0xf]
        %v292 = vld [vmem:[%s273 + $0x14] sm:$0xf]
        %v293 = vld [vmem:[%s273 + $0x18] sm:$0xf]
        %v294 = vld [vmem:[%s273 + $0x1c] sm:$0xf]
        %v295 = vld [vmem:[%s279] sm:$0xf]
        %v296 = vld [vmem:[%s279 + $0x4] sm:$0xf]
        %v297 = vld [vmem:[%s279 + $0x8] sm:$0xf]
        %v298 = vld [vmem:[%s279 + $0xc] sm:$0xf]
        %v299 = vld [vmem:[%s279 + $0x10] sm:$0xf]
        %v300 = vld [vmem:[%s279 + $0x14] sm:$0xf]
        %v301 = vld [vmem:[%s279 + $0x18] sm:$0xf]
        %v302 = vld [vmem:[%s279 + $0x1c] sm:$0xf]
        %303 = vmatpush.bf16.xpose.msra.mxu0 0
        %304 = vmatpush.bf16.xpose.msra.mxu0 0
        %305 = vmatpush.bf16.xpose.msra.mxu0 0
        %306 = vmatpush.bf16.xpose.msra.mxu0 0
        %307 = vmatpush.bf16.xpose.msra.mxu0 0
        %308 = vmatpush.bf16.xpose.msra.mxu0 0
        %309 = vmatpush.bf16.xpose.msra.mxu0 0
        %310 = vmatpush.bf16.xpose.msra.mxu0 %v295
        %311 = vmatmul.bf16.gmra.mxu0 %v287
        %v312 = vpop.f32.mrf.mxu0
        %v313 = vadd.f32 0.0, %v312
        %v314 = vpop.f32.mrf.mxu0
        %315 = vdwg.mxu0
        %316 = vmatpush.bf16.xpose.msra.mxu0 0
        %317 = vmatpush.bf16.xpose.msra.mxu0 0
        %318 = vmatpush.bf16.xpose.msra.mxu0 0
        %319 = vmatpush.bf16.xpose.msra.mxu0 0
        %320 = vmatpush.bf16.xpose.msra.mxu0 0
        %321 = vmatpush.bf16.xpose.msra.mxu0 0
        %322 = vmatpush.bf16.xpose.msra.mxu0 0
        %323 = vmatpush.bf16.xpose.msra.mxu0 %v296
        %324 = vmatmul.bf16.gmra.mxu0 %v288
        %v325 = vpop.f32.mrf.mxu0
        %v326 = vadd.f32 0.0, %v325
        %v327 = vpop.f32.mrf.mxu0
        %328 = vdwg.mxu0
        %329 = vmatpush.bf16.xpose.msra.mxu0 0
        %330 = vmatpush.bf16.xpose.msra.mxu0 0
        %331 = vmatpush.bf16.xpose.msra.mxu0 0
        %332 = vmatpush.bf16.xpose.msra.mxu0 0
        %333 = vmatpush.bf16.xpose.msra.mxu0 0
        %334 = vmatpush.bf16.xpose.msra.mxu0 0
        %335 = vmatpush.bf16.xpose.msra.mxu0 0
        %336 = vmatpush.bf16.xpose.msra.mxu0 %v297
        %337 = vmatmul.bf16.gmra.mxu0 %v289
        %v338 = vpop.f32.mrf.mxu0
        %v339 = vadd.f32 0.0, %v338
        %v340 = vpop.f32.mrf.mxu0
        %341 = vdwg.mxu0
        %342 = vmatpush.bf16.xpose.msra.mxu0 0
        %343 = vmatpush.bf16.xpose.msra.mxu0 0
        %344 = vmatpush.bf16.xpose.msra.mxu0 0
        %345 = vmatpush.bf16.xpose.msra.mxu0 0
        %346 = vmatpush.bf16.xpose.msra.mxu0 0
        %347 = vmatpush.bf16.xpose.msra.mxu0 0
        %348 = vmatpush.bf16.xpose.msra.mxu0 0
        %349 = vmatpush.bf16.xpose.msra.mxu0 %v298
        %350 = vmatmul.bf16.gmra.mxu0 %v290
        %v351 = vpop.f32.mrf.mxu0
        %v352 = vadd.f32 0.0, %v351
        %v353 = vpop.f32.mrf.mxu0
        %354 = vdwg.mxu0
        %355 = vmatpush.bf16.xpose.msra.mxu0 0
        %356 = vmatpush.bf16.xpose.msra.mxu0 0
        %357 = vmatpush.bf16.xpose.msra.mxu0 0
        %358 = vmatpush.bf16.xpose.msra.mxu0 0
        %359 = vmatpush.bf16.xpose.msra.mxu0 0
        %360 = vmatpush.bf16.xpose.msra.mxu0 0
        %361 = vmatpush.bf16.xpose.msra.mxu0 0
        %362 = vmatpush.bf16.xpose.msra.mxu0 %v299
        %363 = vmatmul.bf16.gmra.mxu0 %v291
        %v364 = vpop.f32.mrf.mxu0
        %v365 = vadd.f32 0.0, %v364
        %v366 = vpop.f32.mrf.mxu0
        %367 = vdwg.mxu0
        %368 = vmatpush.bf16.xpose.msra.mxu0 0
        %369 = vmatpush.bf16.xpose.msra.mxu0 0
        %370 = vmatpush.bf16.xpose.msra.mxu0 0
        %371 = vmatpush.bf16.xpose.msra.mxu0 0
        %372 = vmatpush.bf16.xpose.msra.mxu0 0
        %373 = vmatpush.bf16.xpose.msra.mxu0 0
        %374 = vmatpush.bf16.xpose.msra.mxu0 0
        %375 = vmatpush.bf16.xpose.msra.mxu0 %v300
        %376 = vmatmul.bf16.gmra.mxu0 %v292
        %v377 = vpop.f32.mrf.mxu0
        %v378 = vadd.f32 0.0, %v377
        %v379 = vpop.f32.mrf.mxu0
        %380 = vdwg.mxu0
        %381 = vmatpush.bf16.xpose.msra.mxu0 0
        %382 = vmatpush.bf16.xpose.msra.mxu0 0
        %383 = vmatpush.bf16.xpose.msra.mxu0 0
        %384 = vmatpush.bf16.xpose.msra.mxu0 0
        %385 = vmatpush.bf16.xpose.msra.mxu0 0
        %386 = vmatpush.bf16.xpose.msra.mxu0 0
        %387 = vmatpush.bf16.xpose.msra.mxu0 0
        %388 = vmatpush.bf16.xpose.msra.mxu0 %v301
        %389 = vmatmul.bf16.gmra.mxu0 %v293
        %v390 = vpop.f32.mrf.mxu0
        %v391 = vadd.f32 0.0, %v390
        %v392 = vpop.f32.mrf.mxu0
        %393 = vdwg.mxu0
        %394 = vmatpush.bf16.xpose.msra.mxu0 0
        %395 = vmatpush.bf16.xpose.msra.mxu0 0
        %396 = vmatpush.bf16.xpose.msra.mxu0 0
        %397 = vmatpush.bf16.xpose.msra.mxu0 0
        %398 = vmatpush.bf16.xpose.msra.mxu0 0
        %399 = vmatpush.bf16.xpose.msra.mxu0 0
        %400 = vmatpush.bf16.xpose.msra.mxu0 0
        %401 = vmatpush.bf16.xpose.msra.mxu0 %v302
        %402 = vmatmul.bf16.gmra.mxu0 %v294
        %v403 = vpop.f32.mrf.mxu0
        %v404 = vadd.f32 0.0, %v403
        %v405 = vpop.f32.mrf.mxu0
        %406 = vdwg.mxu0
        %vm407 = vcmask 64512
        %v408 = vsel %vm407, %v313, -inf
        %409 = vmax.xlane.f32.xlu0 %v408
        %v410 = vpop.xlane.xlu0 %409
        %v411 = vsel %vm407, %v326, -inf
        %412 = vmax.xlane.f32.xlu0 %v411
        %v413 = vpop.xlane.xlu0 %412
        %v414 = vsel %vm407, %v339, -inf
        %415 = vmax.xlane.f32.xlu0 %v414
        %v416 = vpop.xlane.xlu0 %415
        %v417 = vsel %vm407, %v352, -inf
        %418 = vmax.xlane.f32.xlu0 %v417
        %v419 = vpop.xlane.xlu0 %418
        %v420 = vsel %vm407, %v365, -inf
        %421 = vmax.xlane.f32.xlu0 %v420
        %v422 = vpop.xlane.xlu0 %421
        %v423 = vsel %vm407, %v378, -inf
        %424 = vmax.xlane.f32.xlu0 %v423
        %v425 = vpop.xlane.xlu0 %424
        %v426 = vsel %vm407, %v391, -inf
        %427 = vmax.xlane.f32.xlu0 %v426
        %v428 = vpop.xlane.xlu0 %427
        %v429 = vsel %vm407, %v404, -inf
        %430 = vmax.xlane.f32.xlu0 %v429
        %v431 = vpop.xlane.xlu0 %430
        %v432 = vsub.f32 %v313, %v410
        %v433 = vsub.f32 %v326, %v413
        %v434 = vsub.f32 %v339, %v416
        %v435 = vsub.f32 %v352, %v419
        %v436 = vsub.f32 %v365, %v422
        %v437 = vsub.f32 %v378, %v425
        %v438 = vsub.f32 %v391, %v428
        %v439 = vsub.f32 %v404, %v431
        %v440 = vmul.f32 %v432, 1.442695
        %v441 = vpow.pop %v440
        %v442 = vmul.f32 %v433, 1.442695
        %v443 = vpow.pop %v442
        %v444 = vmul.f32 %v434, 1.442695
        %v445 = vpow.pop %v444
        %v446 = vmul.f32 %v435, 1.442695
        %v447 = vpow.pop %v446
        %v448 = vmul.f32 %v436, 1.442695
        %v449 = vpow.pop %v448
        %v450 = vmul.f32 %v437, 1.442695
        %v451 = vpow.pop %v450
        %v452 = vmul.f32 %v438, 1.442695
        %v453 = vpow.pop %v452
        %v454 = vmul.f32 %v439, 1.442695
        %v455 = vpow.pop %v454
        %v456 = vsel %vm407, %v441, 0.0
        %457 = vadd.xlane.f32.xlu0 %v456
        %v458 = vpop.xlane.xlu0 %457
        %v459 = vsel %vm407, %v443, 0.0
        %460 = vadd.xlane.f32.xlu0 %v459
        %v461 = vpop.xlane.xlu0 %460
        %v462 = vsel %vm407, %v445, 0.0
        %463 = vadd.xlane.f32.xlu0 %v462
        %v464 = vpop.xlane.xlu0 %463
        %v465 = vsel %vm407, %v447, 0.0
        %466 = vadd.xlane.f32.xlu0 %v465
        %v467 = vpop.xlane.xlu0 %466
        %v468 = vsel %vm407, %v449, 0.0
        %469 = vadd.xlane.f32.xlu0 %v468
        %v470 = vpop.xlane.xlu0 %469
        %v471 = vsel %vm407, %v451, 0.0
        %472 = vadd.xlane.f32.xlu0 %v471
        %v473 = vpop.xlane.xlu0 %472
        %v474 = vsel %vm407, %v453, 0.0
        %475 = vadd.xlane.f32.xlu0 %v474
        %v476 = vpop.xlane.xlu0 %475
        %v477 = vsel %vm407, %v455, 0.0
        %478 = vadd.xlane.f32.xlu0 %v477
        %v479 = vpop.xlane.xlu0 %478
        %v480 = vrcp.pop %v458
        %v481 = vrcp.pop %v461
        %v482 = vrcp.pop %v464
        %v483 = vrcp.pop %v467
        %v484 = vrcp.pop %v470
        %v485 = vrcp.pop %v473
        %v486 = vrcp.pop %v476
        %v487 = vrcp.pop %v479
        %v488 = vmul.f32 %v441, %v480
        %v489 = vmul.f32 %v443, %v481
        %v490 = vmul.f32 %v445, %v482
        %v491 = vmul.f32 %v447, %v483
        %v492 = vmul.f32 %v449, %v484
        %v493 = vmul.f32 %v451, %v485
        %v494 = vmul.f32 %v453, %v486
        %v495 = vmul.f32 %v455, %v487
        %v496 = vpack.c.bf16 %v488, %v488
        %v497 = vpack.c.bf16 %v489, %v489
        %v498 = vpack.c.bf16 %v490, %v490
        %v499 = vpack.c.bf16 %v491, %v491
        %v500 = vpack.c.bf16 %v492, %v492
        %v501 = vpack.c.bf16 %v493, %v493
        %v502 = vpack.c.bf16 %v494, %v494
        %v503 = vpack.c.bf16 %v495, %v495
        %v505 = vsel %vm407, %v496, 0
        %vm507 = vcmask 1043456
        %v509 = vsel %vm507, %v295, 0
        %511 = vmatpush.bf16.msra.mxu0 0
        %512 = vmatpush.bf16.msra.mxu0 0
        %513 = vmatpush.bf16.msra.mxu0 0
        %514 = vmatpush.bf16.msra.mxu0 0
        %515 = vmatpush.bf16.msra.mxu0 0
        %516 = vmatpush.bf16.msra.mxu0 0
        %517 = vmatpush.bf16.msra.mxu0 0
        %518 = vmatpush.bf16.msra.mxu0 %v509
        %519 = vmatmul.bf16.gmra.mxu0 %v505
        %v520 = vpop.f32.mrf.mxu0
        %v521 = vadd.f32 0.0, %v520
        %v522 = vpop.f32.mrf.mxu0
        %523 = vdwg.mxu0
        %v525 = vsel %vm407, %v497, 0
        %v528 = vsel %vm507, %v296, 0
        %530 = vmatpush.bf16.msra.mxu0 0
        %531 = vmatpush.bf16.msra.mxu0 0
        %532 = vmatpush.bf16.msra.mxu0 0
        %533 = vmatpush.bf16.msra.mxu0 0
        %534 = vmatpush.bf16.msra.mxu0 0
        %535 = vmatpush.bf16.msra.mxu0 0
        %536 = vmatpush.bf16.msra.mxu0 0
        %537 = vmatpush.bf16.msra.mxu0 %v528
        %538 = vmatmul.bf16.gmra.mxu0 %v525
        %v539 = vpop.f32.mrf.mxu0
        %v540 = vadd.f32 0.0, %v539
        %v541 = vpop.f32.mrf.mxu0
        %542 = vdwg.mxu0
        %v544 = vsel %vm407, %v498, 0
        %v547 = vsel %vm507, %v297, 0
        %549 = vmatpush.bf16.msra.mxu0 0
        %550 = vmatpush.bf16.msra.mxu0 0
        %551 = vmatpush.bf16.msra.mxu0 0
        %552 = vmatpush.bf16.msra.mxu0 0
        %553 = vmatpush.bf16.msra.mxu0 0
        %554 = vmatpush.bf16.msra.mxu0 0
        %555 = vmatpush.bf16.msra.mxu0 0
        %556 = vmatpush.bf16.msra.mxu0 %v547
        %557 = vmatmul.bf16.gmra.mxu0 %v544
        %v558 = vpop.f32.mrf.mxu0
        %v559 = vadd.f32 0.0, %v558
        %v560 = vpop.f32.mrf.mxu0
        %561 = vdwg.mxu0
        %v563 = vsel %vm407, %v499, 0
        %v566 = vsel %vm507, %v298, 0
        %568 = vmatpush.bf16.msra.mxu0 0
        %569 = vmatpush.bf16.msra.mxu0 0
        %570 = vmatpush.bf16.msra.mxu0 0
        %571 = vmatpush.bf16.msra.mxu0 0
        %572 = vmatpush.bf16.msra.mxu0 0
        %573 = vmatpush.bf16.msra.mxu0 0
        %574 = vmatpush.bf16.msra.mxu0 0
        %575 = vmatpush.bf16.msra.mxu0 %v566
        %576 = vmatmul.bf16.gmra.mxu0 %v563
        %v577 = vpop.f32.mrf.mxu0
        %v578 = vadd.f32 0.0, %v577
        %v579 = vpop.f32.mrf.mxu0
        %580 = vdwg.mxu0
        %v582 = vsel %vm407, %v500, 0
        %v585 = vsel %vm507, %v299, 0
        %587 = vmatpush.bf16.msra.mxu0 0
        %588 = vmatpush.bf16.msra.mxu0 0
        %589 = vmatpush.bf16.msra.mxu0 0
        %590 = vmatpush.bf16.msra.mxu0 0
        %591 = vmatpush.bf16.msra.mxu0 0
        %592 = vmatpush.bf16.msra.mxu0 0
        %593 = vmatpush.bf16.msra.mxu0 0
        %594 = vmatpush.bf16.msra.mxu0 %v585
        %595 = vmatmul.bf16.gmra.mxu0 %v582
        %v596 = vpop.f32.mrf.mxu0
        %v597 = vadd.f32 0.0, %v596
        %v598 = vpop.f32.mrf.mxu0
        %599 = vdwg.mxu0
        %v601 = vsel %vm407, %v501, 0
        %v604 = vsel %vm507, %v300, 0
        %606 = vmatpush.bf16.msra.mxu0 0
        %607 = vmatpush.bf16.msra.mxu0 0
        %608 = vmatpush.bf16.msra.mxu0 0
        %609 = vmatpush.bf16.msra.mxu0 0
        %610 = vmatpush.bf16.msra.mxu0 0
        %611 = vmatpush.bf16.msra.mxu0 0
        %612 = vmatpush.bf16.msra.mxu0 0
        %613 = vmatpush.bf16.msra.mxu0 %v604
        %614 = vmatmul.bf16.gmra.mxu0 %v601
        %v615 = vpop.f32.mrf.mxu0
        %v616 = vadd.f32 0.0, %v615
        %v617 = vpop.f32.mrf.mxu0
        %618 = vdwg.mxu0
        %v620 = vsel %vm407, %v502, 0
        %v623 = vsel %vm507, %v301, 0
        %625 = vmatpush.bf16.msra.mxu0 0
        %626 = vmatpush.bf16.msra.mxu0 0
        %627 = vmatpush.bf16.msra.mxu0 0
        %628 = vmatpush.bf16.msra.mxu0 0
        %629 = vmatpush.bf16.msra.mxu0 0
        %630 = vmatpush.bf16.msra.mxu0 0
        %631 = vmatpush.bf16.msra.mxu0 0
        %632 = vmatpush.bf16.msra.mxu0 %v623
        %633 = vmatmul.bf16.gmra.mxu0 %v620
        %v634 = vpop.f32.mrf.mxu0
        %v635 = vadd.f32 0.0, %v634
        %v636 = vpop.f32.mrf.mxu0
        %637 = vdwg.mxu0
        %v639 = vsel %vm407, %v503, 0
        %v642 = vsel %vm507, %v302, 0
        %644 = vmatpush.bf16.msra.mxu0 0
        %645 = vmatpush.bf16.msra.mxu0 0
        %646 = vmatpush.bf16.msra.mxu0 0
        %647 = vmatpush.bf16.msra.mxu0 0
        %648 = vmatpush.bf16.msra.mxu0 0
        %649 = vmatpush.bf16.msra.mxu0 0
        %650 = vmatpush.bf16.msra.mxu0 0
        %651 = vmatpush.bf16.msra.mxu0 %v642
        %652 = vmatmul.bf16.gmra.mxu0 %v639
        %v653 = vpop.f32.mrf.mxu0
        %v654 = vadd.f32 0.0, %v653
        %v655 = vpop.f32.mrf.mxu0
        %656 = vdwg.mxu0
        %v657 = vpack.c.bf16 %v521, %v521
        %v658 = vpack.c.bf16 %v540, %v540
        %v659 = vpack.c.bf16 %v559, %v559
        %v660 = vpack.c.bf16 %v578, %v578
        %v661 = vpack.c.bf16 %v597, %v597
        %v662 = vpack.c.bf16 %v616, %v616
        %v663 = vpack.c.bf16 %v635, %v635
        %v664 = vpack.c.bf16 %v654, %v654
        %v681 = vunpack.c.l.b16 %v657
        %v682 = vunpack.c.l.b16 %v287
        %v683 = vunpack.c.l.b16 %v658
        %v684 = vunpack.c.l.b16 %v288
        %v685 = vunpack.c.l.b16 %v659
        %v686 = vunpack.c.l.b16 %v289
        %v687 = vunpack.c.l.b16 %v660
        %v688 = vunpack.c.l.b16 %v290
        %v689 = vunpack.c.l.b16 %v661
        %v690 = vunpack.c.l.b16 %v291
        %v691 = vunpack.c.l.b16 %v662
        %v692 = vunpack.c.l.b16 %v292
        %v693 = vunpack.c.l.b16 %v663
        %v694 = vunpack.c.l.b16 %v293
        %v695 = vunpack.c.l.b16 %v664
        %v696 = vunpack.c.l.b16 %v294
        %v697 = vld [vmem:[%s2] sm:$0xf]
        %v698 = vld [vmem:[%s2 + $0x4] sm:$0xf]
        %v699 = vld [vmem:[%s2 + $0x8] sm:$0xf]
        %v700 = vld [vmem:[%s2 + $0xc] sm:$0xf]
        %v701 = vld [vmem:[%s2 + $0x10] sm:$0xf]
        %v702 = vld [vmem:[%s2 + $0x14] sm:$0xf]
        %v703 = vld [vmem:[%s2 + $0x18] sm:$0xf]
        %v704 = vld [vmem:[%s2 + $0x1c] sm:$0xf]
        %v705 = vld [vmem:[%s2 + $0x20] sm:$0xf]
        %v706 = vld [vmem:[%s2 + $0x24] sm:$0xf]
        %v707 = vld [vmem:[%s2 + $0x28] sm:$0xf]
        %v708 = vld [vmem:[%s2 + $0x2c] sm:$0xf]
        %v709 = vld [vmem:[%s2 + $0x30] sm:$0xf]
        %v710 = vld [vmem:[%s2 + $0x34] sm:$0xf]
        %v711 = vld [vmem:[%s2 + $0x38] sm:$0xf]
        %v712 = vld [vmem:[%s2 + $0x3c] sm:$0xf]
        %v713 = vld [vmem:[%s2 + $0x40] sm:$0xf]
        %v714 = vld [vmem:[%s2 + $0x44] sm:$0xf]
        %v715 = vld [vmem:[%s2 + $0x48] sm:$0xf]
        %v716 = vld [vmem:[%s2 + $0x4c] sm:$0xf]
        %v717 = vld [vmem:[%s2 + $0x50] sm:$0xf]
        %v718 = vld [vmem:[%s2 + $0x54] sm:$0xf]
        %v719 = vld [vmem:[%s2 + $0x58] sm:$0xf]
        %v720 = vld [vmem:[%s2 + $0x5c] sm:$0xf]
        %v721 = vld [vmem:[%s2 + $0x60] sm:$0xf]
        %v722 = vld [vmem:[%s2 + $0x64] sm:$0xf]
        %v723 = vld [vmem:[%s2 + $0x68] sm:$0xf]
        %v724 = vld [vmem:[%s2 + $0x6c] sm:$0xf]
        %v725 = vld [vmem:[%s2 + $0x70] sm:$0xf]
        %v726 = vld [vmem:[%s2 + $0x74] sm:$0xf]
        %v727 = vld [vmem:[%s2 + $0x78] sm:$0xf]
        %v728 = vld [vmem:[%s2 + $0x7c] sm:$0xf]
        %v729 = vpack.c.b16 %v683, %v681
        %v730 = vpack.c.b16 %v684, %v682
        %v731 = vpack.c.b16 %v687, %v685
        %v732 = vpack.c.b16 %v688, %v686
        %v733 = vpack.c.b16 %v691, %v689
        %v734 = vpack.c.b16 %v692, %v690
        %v735 = vpack.c.b16 %v695, %v693
        %v736 = vpack.c.b16 %v696, %v694
        %v777 = vunpack.c.l.b16 %v697
        %v778 = vunpack.c.l.b16 %v698
        %v779 = vunpack.c.l.b16 %v699
        %v780 = vunpack.c.l.b16 %v700
        %v781 = vunpack.c.l.b16 %v701
        %v782 = vunpack.c.l.b16 %v702
        %v783 = vunpack.c.l.b16 %v703
        %v784 = vunpack.c.l.b16 %v704
        %v785 = vunpack.c.l.b16 %v705
        %v786 = vunpack.c.l.b16 %v706
        %v787 = vunpack.c.l.b16 %v707
        %v788 = vunpack.c.l.b16 %v708
        %v789 = vunpack.c.l.b16 %v709
        %v790 = vunpack.c.l.b16 %v710
        %v791 = vunpack.c.l.b16 %v711
        %v792 = vunpack.c.l.b16 %v712
        %v793 = vunpack.c.l.b16 %v713
        %v794 = vunpack.c.l.b16 %v714
        %v795 = vunpack.c.l.b16 %v715
        %v796 = vunpack.c.l.b16 %v716
        %v797 = vunpack.c.l.b16 %v717
        %v798 = vunpack.c.l.b16 %v718
        %v799 = vunpack.c.l.b16 %v719
        %v800 = vunpack.c.l.b16 %v720
        %v801 = vunpack.c.l.b16 %v721
        %v802 = vunpack.c.l.b16 %v722
        %v803 = vunpack.c.l.b16 %v723
        %v804 = vunpack.c.l.b16 %v724
        %v805 = vunpack.c.l.b16 %v725
        %v806 = vunpack.c.l.b16 %v726
        %v807 = vunpack.c.l.b16 %v727
        %v808 = vunpack.c.l.b16 %v728
        %v809 = vpack.c.b16 %v778, %v777
        %v810 = vpack.c.b16 %v780, %v779
        %v811 = vpack.c.b16 %v782, %v781
        %v812 = vpack.c.b16 %v784, %v783
        %v813 = vpack.c.b16 %v786, %v785
        %v814 = vpack.c.b16 %v788, %v787
        %v815 = vpack.c.b16 %v790, %v789
        %v816 = vpack.c.b16 %v792, %v791
        %v817 = vpack.c.b16 %v794, %v793
        %v818 = vpack.c.b16 %v796, %v795
        %v819 = vpack.c.b16 %v798, %v797
        %v820 = vpack.c.b16 %v800, %v799
        %v821 = vpack.c.b16 %v802, %v801
        %v822 = vpack.c.b16 %v804, %v803
        %v823 = vpack.c.b16 %v806, %v805
        %v824 = vpack.c.b16 %v808, %v807
        %841 = vmatpush.bf16.msra.mxu0 %v816
        %842 = vmatpush.bf16.msra.mxu0 %v815
        %843 = vmatpush.bf16.msra.mxu0 %v814
        %844 = vmatpush.bf16.msra.mxu0 %v813
        %845 = vmatpush.bf16.msra.mxu0 %v812
        %846 = vmatpush.bf16.msra.mxu0 %v811
        %847 = vmatpush.bf16.msra.mxu0 %v810
        %848 = vmatpush.bf16.msra.mxu0 %v809
        %849 = vmatmul.bf16.gmra.mxu0 %v729
        %v850 = vpop.f32.mrf.mxu0
        %v851 = vadd.f32 0.0, %v850
        %v852 = vpop.f32.mrf.mxu0
        %v853 = vadd.f32 0.0, %v852
        %854 = vmatmul.bf16.gmra.mxu0 %v731
        %v855 = vpop.f32.mrf.mxu0
        %v856 = vadd.f32 0.0, %v855
        %v857 = vpop.f32.mrf.mxu0
        %v858 = vadd.f32 0.0, %v857
        %859 = vmatmul.bf16.gmra.mxu0 %v733
        %v860 = vpop.f32.mrf.mxu0
        %v861 = vadd.f32 0.0, %v860
        %v862 = vpop.f32.mrf.mxu0
        %v863 = vadd.f32 0.0, %v862
        %864 = vmatmul.bf16.gmra.mxu0 %v735
        %v865 = vpop.f32.mrf.mxu0
        %v866 = vadd.f32 0.0, %v865
        %v867 = vpop.f32.mrf.mxu0
        %v868 = vadd.f32 0.0, %v867
        %869 = vdwg.mxu0
        %870 = vmatpush.bf16.msra.mxu0 %v824
        %871 = vmatpush.bf16.msra.mxu0 %v823
        %872 = vmatpush.bf16.msra.mxu0 %v822
        %873 = vmatpush.bf16.msra.mxu0 %v821
        %874 = vmatpush.bf16.msra.mxu0 %v820
        %875 = vmatpush.bf16.msra.mxu0 %v819
        %876 = vmatpush.bf16.msra.mxu0 %v818
        %877 = vmatpush.bf16.msra.mxu0 %v817
        %878 = vmatmul.bf16.gmra.mxu0 %v730
        %v879 = vpop.f32.mrf.mxu0
        %v880 = vadd.f32 %v851, %v879
        %v881 = vpop.f32.mrf.mxu0
        %v882 = vadd.f32 %v853, %v881
        %883 = vmatmul.bf16.gmra.mxu0 %v732
        %v884 = vpop.f32.mrf.mxu0
        %v885 = vadd.f32 %v856, %v884
        %v886 = vpop.f32.mrf.mxu0
        %v887 = vadd.f32 %v858, %v886
        %888 = vmatmul.bf16.gmra.mxu0 %v734
        %v889 = vpop.f32.mrf.mxu0
        %v890 = vadd.f32 %v861, %v889
        %v891 = vpop.f32.mrf.mxu0
        %v892 = vadd.f32 %v863, %v891
        %893 = vmatmul.bf16.gmra.mxu0 %v736
        %v894 = vpop.f32.mrf.mxu0
        %v895 = vadd.f32 %v866, %v894
        %v896 = vpop.f32.mrf.mxu0
        %v897 = vadd.f32 %v868, %v896
        %898 = vdwg.mxu0
        %v899 = vtanh.pop %v880
        %v900 = vtanh.pop %v882
        %v901 = vtanh.pop %v885
        %v902 = vtanh.pop %v887
        %v903 = vtanh.pop %v890
        %v904 = vtanh.pop %v892
        %v905 = vtanh.pop %v895
        %v906 = vtanh.pop %v897
        %v907 = vpack.c.bf16 %v900, %v899
        %v908 = vpack.c.bf16 %v902, %v901
        %v909 = vpack.c.bf16 %v904, %v903
        %v910 = vpack.c.bf16 %v906, %v905
        %v911 = vld [vmem:[%s3] sm:$0xf]
        %v912 = vld [vmem:[%s3 + $0x4] sm:$0xf]
        %v913 = vld [vmem:[%s3 + $0x8] sm:$0xf]
        %v914 = vld [vmem:[%s3 + $0xc] sm:$0xf]
        %v915 = vld [vmem:[%s3 + $0x10] sm:$0xf]
        %v916 = vld [vmem:[%s3 + $0x14] sm:$0xf]
        %v917 = vld [vmem:[%s3 + $0x18] sm:$0xf]
        %v918 = vld [vmem:[%s3 + $0x1c] sm:$0xf]
        %v919 = vld [vmem:[%s3 + $0x20] sm:$0xf]
        %v920 = vld [vmem:[%s3 + $0x24] sm:$0xf]
        %v921 = vld [vmem:[%s3 + $0x28] sm:$0xf]
        %v922 = vld [vmem:[%s3 + $0x2c] sm:$0xf]
        %v923 = vld [vmem:[%s3 + $0x30] sm:$0xf]
        %v924 = vld [vmem:[%s3 + $0x34] sm:$0xf]
        %v925 = vld [vmem:[%s3 + $0x38] sm:$0xf]
        %v926 = vld [vmem:[%s3 + $0x3c] sm:$0xf]
        %v927 = vld [vmem:[%s4] sm:$0x1]
        %v929 = vperm.slane %v927, 0
        %v947 = vunpack.c.l.b16 %v911
        %v948 = vunpack.c.l.b16 %v912
        %v949 = vunpack.c.l.b16 %v913
        %v950 = vunpack.c.l.b16 %v914
        %v951 = vunpack.c.l.b16 %v915
        %v952 = vunpack.c.l.b16 %v916
        %v953 = vunpack.c.l.b16 %v917
        %v954 = vunpack.c.l.b16 %v918
        %v955 = vunpack.c.l.b16 %v919
        %v956 = vunpack.c.l.b16 %v920
        %v957 = vunpack.c.l.b16 %v921
        %v958 = vunpack.c.l.b16 %v922
        %v959 = vunpack.c.l.b16 %v923
        %v960 = vunpack.c.l.b16 %v924
        %v961 = vunpack.c.l.b16 %v925
        %v962 = vunpack.c.l.b16 %v926
        %v963 = vpack.c.b16 %v948, %v947
        %v964 = vpack.c.b16 %v950, %v949
        %v965 = vpack.c.b16 %v952, %v951
        %v966 = vpack.c.b16 %v954, %v953
        %v967 = vpack.c.b16 %v956, %v955
        %v968 = vpack.c.b16 %v958, %v957
        %v969 = vpack.c.b16 %v960, %v959
        %v970 = vpack.c.b16 %v962, %v961
        %979 = vmatpush.bf16.msra.mxu0 %v970
        %980 = vmatpush.bf16.msra.mxu0 %v969
        %981 = vmatpush.bf16.msra.mxu0 %v968
        %982 = vmatpush.bf16.msra.mxu0 %v967
        %983 = vmatpush.bf16.msra.mxu0 %v966
        %984 = vmatpush.bf16.msra.mxu0 %v965
        %985 = vmatpush.bf16.msra.mxu0 %v964
        %986 = vmatpush.bf16.msra.mxu0 %v963
        %987 = vmatmul.bf16.gmra.mxu0 %v907
        %v988 = vpop.f32.mrf.mxu0
        %v989 = vadd.f32 %v929, %v988
        %v990 = vpop.f32.mrf.mxu0
        %v991 = vadd.f32 %v929, %v990
        %992 = vmatmul.bf16.gmra.mxu0 %v908
        %v993 = vpop.f32.mrf.mxu0
        %v994 = vadd.f32 %v929, %v993
        %v995 = vpop.f32.mrf.mxu0
        %v996 = vadd.f32 %v929, %v995
        %997 = vmatmul.bf16.gmra.mxu0 %v909
        %v998 = vpop.f32.mrf.mxu0
        %v999 = vadd.f32 %v929, %v998
        %v1000 = vpop.f32.mrf.mxu0
        %v1001 = vadd.f32 %v929, %v1000
        %1002 = vmatmul.bf16.gmra.mxu0 %v910
        %v1003 = vpop.f32.mrf.mxu0
        %v1004 = vadd.f32 %v929, %v1003
        %v1005 = vpop.f32.mrf.mxu0
        %v1006 = vadd.f32 %v929, %v1005
        %1007 = vdwg.mxu0
        %1008 = vmax.xlane.f32.xlu0 %v989
        %v1009 = vpop.xlane.xlu0 %1008
        %1010 = vmax.xlane.f32.xlu0 %v991
        %v1011 = vpop.xlane.xlu0 %1010
        %1012 = vmax.xlane.f32.xlu0 %v994
        %v1013 = vpop.xlane.xlu0 %1012
        %1014 = vmax.xlane.f32.xlu0 %v996
        %v1015 = vpop.xlane.xlu0 %1014
        %1016 = vmax.xlane.f32.xlu0 %v999
        %v1017 = vpop.xlane.xlu0 %1016
        %1018 = vmax.xlane.f32.xlu0 %v1001
        %v1019 = vpop.xlane.xlu0 %1018
        %1020 = vmax.xlane.f32.xlu0 %v1004
        %v1021 = vpop.xlane.xlu0 %1020
        %1022 = vmax.xlane.f32.xlu0 %v1006
        %v1023 = vpop.xlane.xlu0 %1022
        %v1024 = vsub.f32 %v989, %v1009
        %v1025 = vsub.f32 %v991, %v1011
        %v1026 = vsub.f32 %v994, %v1013
        %v1027 = vsub.f32 %v996, %v1015
        %v1028 = vsub.f32 %v999, %v1017
        %v1029 = vsub.f32 %v1001, %v1019
        %v1030 = vsub.f32 %v1004, %v1021
        %v1031 = vsub.f32 %v1006, %v1023
        %v1032 = vmul.f32 %v1024, 1.442695
        %v1033 = vpow.pop %v1032
        %v1034 = vmul.f32 %v1025, 1.442695
        %v1035 = vpow.pop %v1034
        %v1036 = vmul.f32 %v1026, 1.442695
        %v1037 = vpow.pop %v1036
        %v1038 = vmul.f32 %v1027, 1.442695
        %v1039 = vpow.pop %v1038
        %v1040 = vmul.f32 %v1028, 1.442695
        %v1041 = vpow.pop %v1040
        %v1042 = vmul.f32 %v1029, 1.442695
        %v1043 = vpow.pop %v1042
        %v1044 = vmul.f32 %v1030, 1.442695
        %v1045 = vpow.pop %v1044
        %v1046 = vmul.f32 %v1031, 1.442695
        %v1047 = vpow.pop %v1046
        %1048 = vadd.xlane.f32.xlu0 %v1033
        %v1049 = vpop.xlane.xlu0 %1048
        %1050 = vadd.xlane.f32.xlu0 %v1035
        %v1051 = vpop.xlane.xlu0 %1050
        %1052 = vadd.xlane.f32.xlu0 %v1037
        %v1053 = vpop.xlane.xlu0 %1052
        %1054 = vadd.xlane.f32.xlu0 %v1039
        %v1055 = vpop.xlane.xlu0 %1054
        %1056 = vadd.xlane.f32.xlu0 %v1041
        %v1057 = vpop.xlane.xlu0 %1056
        %1058 = vadd.xlane.f32.xlu0 %v1043
        %v1059 = vpop.xlane.xlu0 %1058
        %1060 = vadd.xlane.f32.xlu0 %v1045
        %v1061 = vpop.xlane.xlu0 %1060
        %1062 = vadd.xlane.f32.xlu0 %v1047
        %v1063 = vpop.xlane.xlu0 %1062
        %v1064 = vlog2.pop %v1049
        %v1065 = vmul.f32 %v1064, 0.6931472
        %v1066 = vlog2.pop %v1051
        %v1067 = vmul.f32 %v1066, 0.6931472
        %v1068 = vlog2.pop %v1053
        %v1069 = vmul.f32 %v1068, 0.6931472
        %v1070 = vlog2.pop %v1055
        %v1071 = vmul.f32 %v1070, 0.6931472
        %v1072 = vlog2.pop %v1057
        %v1073 = vmul.f32 %v1072, 0.6931472
        %v1074 = vlog2.pop %v1059
        %v1075 = vmul.f32 %v1074, 0.6931472
        %v1076 = vlog2.pop %v1061
        %v1077 = vmul.f32 %v1076, 0.6931472
        %v1078 = vlog2.pop %v1063
        %v1079 = vmul.f32 %v1078, 0.6931472
        %v1080 = vadd.f32 %v1009, %v1065
        %v1081 = vadd.f32 %v1011, %v1067
        %v1082 = vadd.f32 %v1013, %v1069
        %v1083 = vadd.f32 %v1015, %v1071
        %v1084 = vadd.f32 %v1017, %v1073
        %v1085 = vadd.f32 %v1019, %v1075
        %v1086 = vadd.f32 %v1021, %v1077
        %v1087 = vadd.f32 %v1023, %v1079
        %v1088 = vsub.f32 %v989, %v1080
        %v1089 = vsub.f32 %v991, %v1081
        %v1090 = vsub.f32 %v994, %v1082
        %v1091 = vsub.f32 %v996, %v1083
        %v1092 = vsub.f32 %v999, %v1084
        %v1093 = vsub.f32 %v1001, %v1085
        %v1094 = vsub.f32 %v1004, %v1086
        %v1095 = vsub.f32 %v1006, %v1087
        %1096 = vst [vmem:[%s262] sm:$0xff] %v1088
        %1097 = vst [vmem:[%s262 + $0x8] sm:$0xff] %v1089
        %1098 = vst [vmem:[%s262 + $0x10] sm:$0xff] %v1090
        %1099 = vst [vmem:[%s262 + $0x18] sm:$0xff] %v1091
        %1100 = vst [vmem:[%s262 + $0x20] sm:$0xff] %v1092
        %1101 = vst [vmem:[%s262 + $0x28] sm:$0xff] %v1093
        %1102 = vst [vmem:[%s262 + $0x30] sm:$0xff] %v1094
        %1103 = vst [vmem:[%s262 + $0x38] sm:$0xff] %v1095
        %v1104 = vlaneseq
        %v1105 = vand.u32 %v1104, 127
        %1106 = vmax.xlane.f32.xlu0 %v1088
        %v1107 = vpop.xlane.xlu0 %1106
        %1108 = vmax.xlane.f32.xlu0 %v1089
        %v1109 = vpop.xlane.xlu0 %1108
        %1110 = vmax.xlane.f32.xlu0 %v1090
        %v1111 = vpop.xlane.xlu0 %1110
        %1112 = vmax.xlane.f32.xlu0 %v1091
        %v1113 = vpop.xlane.xlu0 %1112
        %1114 = vmax.xlane.f32.xlu0 %v1092
        %v1115 = vpop.xlane.xlu0 %1114
        %1116 = vmax.xlane.f32.xlu0 %v1093
        %v1117 = vpop.xlane.xlu0 %1116
        %1118 = vmax.xlane.f32.xlu0 %v1094
        %v1119 = vpop.xlane.xlu0 %1118
        %1120 = vmax.xlane.f32.xlu0 %v1095
        %v1121 = vpop.xlane.xlu0 %1120
        %vm1122 = vcmp.eq.f32.partialorder %v1088, %v1107
        %vm1123 = vcmp.eq.f32.partialorder %v1089, %v1109
        %vm1124 = vcmp.eq.f32.partialorder %v1090, %v1111
        %vm1125 = vcmp.eq.f32.partialorder %v1091, %v1113
        %vm1126 = vcmp.eq.f32.partialorder %v1092, %v1115
        %vm1127 = vcmp.eq.f32.partialorder %v1093, %v1117
        %vm1128 = vcmp.eq.f32.partialorder %v1094, %v1119
        %vm1129 = vcmp.eq.f32.partialorder %v1095, %v1121
        %v1130 = vsel %vm1122, %v1105, 128
        %v1131 = vsel %vm1123, %v1105, 128
        %v1132 = vsel %vm1124, %v1105, 128
        %v1133 = vsel %vm1125, %v1105, 128
        %v1134 = vsel %vm1126, %v1105, 128
        %v1135 = vsel %vm1127, %v1105, 128
        %v1136 = vsel %vm1128, %v1105, 128
        %v1137 = vsel %vm1129, %v1105, 128
        %v1138 = vand.u32 %v1130, 65535
        %v1139 = vshra.s32 %v1130, 16
        %v1140 = vcvt.s32.f32 %v1138
        %v1141 = vcvt.s32.f32 %v1139
        %1142 = vmin.xlane.f32.xlu0 %v1141
        %v1143 = vpop.xlane.xlu0 %1142
        %vm1144 = vcmp.eq.f32.partialorder %v1141, %v1143
        %v1145 = vsel %vm1144, %v1140, inf
        %1146 = vmin.xlane.f32.xlu0 %v1145
        %v1147 = vpop.xlane.xlu0 %1146
        %v1148 = vcvt.f32.s32 %v1147
        %v1149 = vcvt.f32.s32 %v1143
        %v1150 = vshll.u32 %v1149, 16
        %v1151 = vadd.s32 %v1150, %v1148
        %v1152 = vand.u32 %v1131, 65535
        %v1153 = vshra.s32 %v1131, 16
        %v1154 = vcvt.s32.f32 %v1152
        %v1155 = vcvt.s32.f32 %v1153
        %1156 = vmin.xlane.f32.xlu0 %v1155
        %v1157 = vpop.xlane.xlu0 %1156
        %vm1158 = vcmp.eq.f32.partialorder %v1155, %v1157
        %v1159 = vsel %vm1158, %v1154, inf
        %1160 = vmin.xlane.f32.xlu0 %v1159
        %v1161 = vpop.xlane.xlu0 %1160
        %v1162 = vcvt.f32.s32 %v1161
        %v1163 = vcvt.f32.s32 %v1157
        %v1164 = vshll.u32 %v1163, 16
        %v1165 = vadd.s32 %v1164, %v1162
        %v1166 = vand.u32 %v1132, 65535
        %v1167 = vshra.s32 %v1132, 16
        %v1168 = vcvt.s32.f32 %v1166
        %v1169 = vcvt.s32.f32 %v1167
        %1170 = vmin.xlane.f32.xlu0 %v1169
        %v1171 = vpop.xlane.xlu0 %1170
        %vm1172 = vcmp.eq.f32.partialorder %v1169, %v1171
        %v1173 = vsel %vm1172, %v1168, inf
        %1174 = vmin.xlane.f32.xlu0 %v1173
        %v1175 = vpop.xlane.xlu0 %1174
        %v1176 = vcvt.f32.s32 %v1175
        %v1177 = vcvt.f32.s32 %v1171
        %v1178 = vshll.u32 %v1177, 16
        %v1179 = vadd.s32 %v1178, %v1176
        %v1180 = vand.u32 %v1133, 65535
        %v1181 = vshra.s32 %v1133, 16
        %v1182 = vcvt.s32.f32 %v1180
        %v1183 = vcvt.s32.f32 %v1181
        %1184 = vmin.xlane.f32.xlu0 %v1183
        %v1185 = vpop.xlane.xlu0 %1184
        %vm1186 = vcmp.eq.f32.partialorder %v1183, %v1185
        %v1187 = vsel %vm1186, %v1182, inf
        %1188 = vmin.xlane.f32.xlu0 %v1187
        %v1189 = vpop.xlane.xlu0 %1188
        %v1190 = vcvt.f32.s32 %v1189
        %v1191 = vcvt.f32.s32 %v1185
        %v1192 = vshll.u32 %v1191, 16
        %v1193 = vadd.s32 %v1192, %v1190
        %v1194 = vand.u32 %v1134, 65535
        %v1195 = vshra.s32 %v1134, 16
        %v1196 = vcvt.s32.f32 %v1194
        %v1197 = vcvt.s32.f32 %v1195
        %1198 = vmin.xlane.f32.xlu0 %v1197
        %v1199 = vpop.xlane.xlu0 %1198
        %vm1200 = vcmp.eq.f32.partialorder %v1197, %v1199
        %v1201 = vsel %vm1200, %v1196, inf
        %1202 = vmin.xlane.f32.xlu0 %v1201
        %v1203 = vpop.xlane.xlu0 %1202
        %v1204 = vcvt.f32.s32 %v1203
        %v1205 = vcvt.f32.s32 %v1199
        %v1206 = vshll.u32 %v1205, 16
        %v1207 = vadd.s32 %v1206, %v1204
        %v1208 = vand.u32 %v1135, 65535
        %v1209 = vshra.s32 %v1135, 16
        %v1210 = vcvt.s32.f32 %v1208
        %v1211 = vcvt.s32.f32 %v1209
        %1212 = vmin.xlane.f32.xlu0 %v1211
        %v1213 = vpop.xlane.xlu0 %1212
        %vm1214 = vcmp.eq.f32.partialorder %v1211, %v1213
        %v1215 = vsel %vm1214, %v1210, inf
        %1216 = vmin.xlane.f32.xlu0 %v1215
        %v1217 = vpop.xlane.xlu0 %1216
        %v1218 = vcvt.f32.s32 %v1217
        %v1219 = vcvt.f32.s32 %v1213
        %v1220 = vshll.u32 %v1219, 16
        %v1221 = vadd.s32 %v1220, %v1218
        %v1222 = vand.u32 %v1136, 65535
        %v1223 = vshra.s32 %v1136, 16
        %v1224 = vcvt.s32.f32 %v1222
        %v1225 = vcvt.s32.f32 %v1223
        %1226 = vmin.xlane.f32.xlu0 %v1225
        %v1227 = vpop.xlane.xlu0 %1226
        %vm1228 = vcmp.eq.f32.partialorder %v1225, %v1227
        %v1229 = vsel %vm1228, %v1224, inf
        %1230 = vmin.xlane.f32.xlu0 %v1229
        %v1231 = vpop.xlane.xlu0 %1230
        %v1232 = vcvt.f32.s32 %v1231
        %v1233 = vcvt.f32.s32 %v1227
        %v1234 = vshll.u32 %v1233, 16
        %v1235 = vadd.s32 %v1234, %v1232
        %v1236 = vand.u32 %v1137, 65535
        %v1237 = vshra.s32 %v1137, 16
        %v1238 = vcvt.s32.f32 %v1236
        %v1239 = vcvt.s32.f32 %v1237
        %1240 = vmin.xlane.f32.xlu0 %v1239
        %v1241 = vpop.xlane.xlu0 %1240
        %vm1242 = vcmp.eq.f32.partialorder %v1239, %v1241
        %v1243 = vsel %vm1242, %v1238, inf
        %1244 = vmin.xlane.f32.xlu0 %v1243
        %v1245 = vpop.xlane.xlu0 %1244
        %v1246 = vcvt.f32.s32 %v1245
        %v1247 = vcvt.f32.s32 %v1241
        %v1248 = vshll.u32 %v1247, 16
        %v1249 = vadd.s32 %v1248, %v1246
        %v1250 = vperm.slane %v1151, %v1105
        %v1251 = vperm.slane %v1165, %v1105
        %v1252 = vperm.slane %v1179, %v1105
        %v1253 = vperm.slane %v1193, %v1105
        %v1254 = vperm.slane %v1207, %v1105
        %v1255 = vperm.slane %v1221, %v1105
        %v1256 = vperm.slane %v1235, %v1105
        %v1257 = vperm.slane %v1249, %v1105
        %vm1258 = vcmask 1041409
        %v1259 = vsel %vm1258, %v1251, %v1250
        %vm1260 = vcmask 1042434
        %v1261 = vsel %vm1260, %v1252, %v1259
        %vm1262 = vcmask 1043459
        %v1263 = vsel %vm1262, %v1253, %v1261
        %vm1264 = vcmask 1044484
        %v1265 = vsel %vm1264, %v1254, %v1263
        %vm1266 = vcmask 1045509
        %v1267 = vsel %vm1266, %v1255, %v1265
        %vm1268 = vcmask 1046534
        %v1269 = vsel %vm1268, %v1256, %v1267
        %vm1270 = vcmask 1047559
        %v1271 = vsel %vm1270, %v1257, %v1269
        %1272 = vst.msk [vmem:[%s285] sm:$0xff] %vm407, %v1271
        %s1273 = sand.u32 %s144, 1
        %s1274 = scalar_lea.sflag [#allocation3], %s1273
        %s1275 = sand.u32 %s144, 1
        %s1276 = smul.addr %s1275, 64
        %s1277 = scalar_lea.vmem [#allocation2], %s1276
        %p1278 = scmp.lt.s32.totalorder %s21, 1
        %s1279 = scalar_select %p1278, %s21, 1
        %s1280 = smul.addr %s1279, 8
        %s1281 = scalar_lea.vmem %s6, %s1280
        // Predicated region
        $region41: #{seq2seq_forward.9} parent=39 // pred_check
          %p1282 = pneg %p154
        $region42: #{seq2seq_forward.9} parent=39 // pred_check_branch
          %1284 = sbr.rel (%p1282) target = $region44
        $region43: #{seq2seq_forward.9} parent=39 // pred_region
          %s1285 = smul.u32 8, %s21
          %1287 = vsyncadd %s1274, 0
          %s1288 = smul.addr %s1285, 8
          %s1289 = scalar_lea.hbm %s5, %s1288
          %s1290 = sshll.u32 %s1277, 4
          %s1291 = int_to_ptr.vmem [resolvable:$true] %s1290
          %s1292 = sshll.u32 %s1289, 4
          %s1293 = int_to_ptr.hbm [resolvable:$true] %s1292
          %1298 = dma.vmem_to_hbm [thread:$0]  %s1291, 1024, %s1293, %s1274, 128, 128, 8
        $region44: #{seq2seq_forward.9} parent=39 // pred_fallthru
          _
        // Predicated region
        $region45: #{seq2seq_forward.9} parent=39 // pred_check
          %p1299 = pneg %p180
        $region46: #{seq2seq_forward.9} parent=39 // pred_check_branch
          %1301 = sbr.rel (%p1299) target = $region48
        $region47: #{seq2seq_forward.9} parent=39 // pred_region
          _
        $region48: #{seq2seq_forward.9} parent=39 // pred_fallthru
          _
      $region40: #{seq2seq_forward.9} parent=5 // pred_fallthru
        _
      %p1302 = scmp.le.s32.totalorder 2, %s16
      // Predicated region
      $region49: #{seq2seq_forward.9} parent=5 // pred_check
        %p1303 = pneg %p1302
      $region50: #{seq2seq_forward.9} parent=5 // pred_check_branch
        %1305 = sbr.rel (%p1303) target = $region52
      $region51: #{seq2seq_forward.9} parent=5 // pred_region
        %s1306 = ssub.s32 %s16, 2
        // Predicated region
        $region53: #{seq2seq_forward.9} parent=51 // pred_check
          %p1307 = pneg %p160
        $region54: #{seq2seq_forward.9} parent=51 // pred_check_branch
          %1309 = sbr.rel (%p1307) target = $region56
        $region55: #{seq2seq_forward.9} parent=51 // pred_region
          %s1310 = sand.u32 %s145, 1
          %s1311 = scalar_lea.sflag [#allocation3], %s1310
          %s1312 = sand.u32 %s145, 1
          %s1313 = smul.addr %s1312, 64
          %s1314 = scalar_lea.vmem [#allocation2], %s1313
          %1316 = dma.done %s1311, 1024
        $region56: #{seq2seq_forward.9} parent=51 // pred_fallthru
          _
        // Predicated region
        $region57: #{seq2seq_forward.9} parent=51 // pred_check
          %p1317 = pneg %p186
        $region58: #{seq2seq_forward.9} parent=51 // pred_check_branch
          %1319 = sbr.rel (%p1317) target = $region60
        $region59: #{seq2seq_forward.9} parent=51 // pred_region
          %p1320 = scmp.lt.s32.totalorder %s22, 1
          %s1321 = scalar_select %p1320, %s22, 1
          %s1322 = smul.addr %s1321, 8
          %s1323 = scalar_lea.vmem %s6, %s1322
        $region60: #{seq2seq_forward.9} parent=51 // pred_fallthru
          _
      $region52: #{seq2seq_forward.9} parent=5 // pred_fallthru
        _
    $region6: #{seq2seq_forward.9} parent=1 // loop_footer
      %s20 = sadd.s32 1, %s16
    $region7: #{seq2seq_forward.9} parent=1 // loop_footer_branch
      %15 = sbr.rel target = $region3
    $region8: #{seq2seq_forward.9} parent=1 // loop_exit
      _
    %1324 = vsyncpa [#allocation3], 1
    %s1325 = scalar_lea.sflag [#allocation3], 1
    %1326 = vsyncpa %s1325, 1

</llo_original>
